<compile_context>
chip_gen: v6e
topology: v6e:2x2x1
jax: 0.10.0
libtpu: 0.0.40
codegen_flags: <defaults>
</compile_context>

<pallas_src>
import functools

import jax
import jax.numpy as jnp
from jax import lax
from jax.experimental import pallas as pl
from jax.experimental.pallas import tpu as pltpu


def _round_up(x, m):
    return ((x + m - 1) // m) * m


def _vmem_budget_bytes():
    """Generation-aware scoped-VMEM budget: ~78% of physical VMEM.

    ~100 MiB on v5e/v6e (128 MiB physical), ~50 MiB on v7x (64 MiB physical)."""
    cap = 64 * 1024 * 1024
    try:
        info = pltpu.get_tpu_info()
        cap = int(getattr(info, "vmem_capacity_bytes", cap) or cap)
    except Exception:
        pass
    return int(cap * 0.78)


@functools.lru_cache(maxsize=None)
def _single_buffer_supported():
    """Probe whether pipeline_mode=pl.Buffered(1) is honored for resident blocks."""
    try:
        def copy_kernel(x_ref, o_ref):
            o_ref[...] = x_ref[...]

        x = jnp.arange(8 * 128, dtype=jnp.float32).reshape(8, 128)
        out = pl.pallas_call(
            copy_kernel,
            grid=(2,),
            in_specs=[pl.BlockSpec((8, 128), lambda i: (0, 0),
                                   pipeline_mode=pl.Buffered(buffer_count=1))],
            out_specs=pl.BlockSpec((8, 128), lambda i: (i, 0)),
            out_shape=jax.ShapeDtypeStruct((16, 128), jnp.float32),
        )(x)
        return bool(jnp.allclose(out, jnp.concatenate([x, x], axis=0)))
    except Exception:
        return False


def gated_gcn_kernel(
    h_ref, e_ref,
    w_node_ref, b_node_ref,      # fused [A | D | B | E] projection (bf16 W, f32 b)
    wC_ref, bC_ref,              # bf16 W, f32 b
    src_oh_ref, dst_oh_ref,      # bf16 one-hot incidence tiles, [tE, N]
    snorm_n_ref, snorm_e_ref,
    h_out_ref, e_out_ref,
    ah_ref, dbe_ref, acc_ref, msg_ref,
):
    f32 = jnp.float32
    bf16 = jnp.bfloat16
    Dout = h_out_ref.shape[1]
    step = pl.program_id(0)

    @pl.when(step == 0)
    def _init():
        # One lane-dense [N, 4*Dout] bf16 MXU matmul (f32 accumulation) for all four
        # node projections, computed once and cached in VMEM scratch for every tile.
        proj = (
            jnp.dot(h_ref[...].astype(bf16), w_node_ref[...],
                    preferred_element_type=f32)
            + b_node_ref[...]
        )
        ah_ref[...] = proj[:, :Dout]                 # Ah kept f32 for the epilogue
        dbe_ref[...] = proj[:, Dout:].astype(bf16)   # [Dh | Bh | Eh], bf16 for the MXU
        acc_ref[...] = jnp.zeros_like(acc_ref)

    DB = dbe_ref[:, :2 * Dout]        # [N, 2*Dout] bf16 — [Dh | Bh] contiguous
    Eh = dbe_ref[:, 2 * Dout:]        # [N, Dout]  bf16

    # One-hot tiles stay bf16 (exact 0/1): bf16-native MXU passes on all generations.
    S = src_oh_ref[...]               # [tE, N]
    T = dst_oh_ref[...]               # [tE, N]

    Ce = (
        jnp.dot(e_ref[...].astype(bf16), wC_ref[...], preferred_element_type=f32)
        + bC_ref[...]
    )

    # Fused edge gather: S @ [Dh | Bh] -> [Dh_src | Bh_src] in one bf16 MXU pass.
    gathered = jnp.dot(S, DB, preferred_element_type=f32)    # [tE, 2*Dout] f32
    Dh_src = gathered[:, :Dout]
    Bh_src = gathered[:, Dout:]
    Eh_dst = jnp.dot(T, Eh, preferred_element_type=f32)      # [tE, Dout] f32

    # message_func: e_ij = Ce + Dh_j + Eh_i
    e_new = Ce + Dh_src + Eh_dst
    sigma = jax.nn.sigmoid(e_new)

    # [sigma*Bh | sigma] written into a persistent bf16 scratch (no per-step f32
    # concatenate temp burning the vst slot).
    msg_ref[:, :Dout] = (sigma * Bh_src).astype(bf16)
    msg_ref[:, Dout:] = sigma.astype(bf16)

    # reduce_func segment sums: contract over the edge axis of T. bf16 operands,
    # f32 accumulation via preferred_element_type (numerics of the sum stay f32).
    acc_ref[...] += lax.dot_general(
        T, msg_ref[...],
        dimension_numbers=(((0,), (0,)), ((), ())),
        preferred_element_type=f32,
    )

    # Edge epilogue: graph_norm, ReLU, residual (dropout is identity in eval mode).
    e_out_ref[...] = (
        e_ref[...] + jnp.maximum(e_new * snorm_e_ref[...], 0.0)
    ).astype(e_out_ref.dtype)

    @pl.when(step == pl.num_programs(0) - 1)
    def _finalize():
        num = acc_ref[:, :Dout]
        den = acc_ref[:, Dout:]
        # Gated mean; approx reciprocal runs on the EUP (frees VALU slots).
        h_new = ah_ref[...] + num * pl.reciprocal(den + 1e-6, approx=True)
        h_act = jnp.maximum(h_new * snorm_n_ref[...], 0.0)
        h_out_ref[...] = (h_ref[...] + h_act).astype(h_out_ref.dtype)


def _choose_edge_tile(E, N_pad, Din, Dout, budget_bytes, resident_buf_factor):
    """Largest MXU-friendly edge tile whose (double-buffered) working set fits VMEM."""
    f32b, bf16b = 4, 2
    fixed = (
        resident_buf_factor * (
            f32b * (N_pad * Din + 4 * Dout + Dout + N_pad + N_pad * Dout)
            + bf16b * (Din * 4 * Dout + Din * Dout))
        + f32b * (N_pad * Dout + N_pad * 2 * Dout)        # Ah / [num|den] scratch
        + bf16b * (N_pad * 3 * Dout)                       # [Dh|Bh|Eh] scratch
        + f32b * (N_pad * 2 * Dout)                        # dot_general partial
    )

    def fits(tE):
        streamed = (f32b * (tE * Din + tE + tE * Dout)     # e tile, snorm_e, e_out
                    + bf16b * 2 * tE * N_pad)              # src/dst one-hot tiles
        temps = tE * (f32b * 6 * Dout + bf16b * (Din + 2 * Dout))  # in-kernel temps + msg
        return fixed + 2 * streamed + temps <= budget_bytes

    gran = 256 if E >= 256 else 128                        # multiple of 128 on every gen
    t = min(_round_up(E, gran), 4096)
    while t > gran and not fits(t):
        t -= gran
    return max(t, 8)


def gated_gcn_layer(h, e, params, src, dst, snorm_n, snorm_e, *,
                    edge_tile=None, single_buffer_resident=None):
    """GatedGCN forward (graph_norm=True, batch_norm=False, residual=True, eval mode)."""
    N, Din = h.shape
    E = e.shape[0]
    Dout = params["wA"].shape[1]
    if Din != Dout:
        raise ValueError("This kernel implements the residual=True path: Din must equal Dout.")

    if single_buffer_resident is None:
        single_buffer_resident = _single_buffer_supported()

    budget = _vmem_budget_bytes()

    # Pad the node axis to a multiple of 128 (contraction dim of S @ [Dh|Bh] and output
    # rows of the T^T contraction).
    N_pad = max(_round_up(N, 128), 128)

    if edge_tile is None:
        edge_tile = _choose_edge_tile(E, N_pad, Din, Dout, budget,
                                      1 if single_buffer_resident else 2)
    edge_tile = max(8, _round_up(int(edge_tile), 8))
    E_pad = _round_up(E, edge_tile)
    n_tiles = E_pad // edge_tile

    f32 = jnp.float32
    bf16 = jnp.bfloat16

    # Fused node-projection weights, ordered [A | D | B | E] so that [Dh | Bh] is a
    # contiguous lane slice in the kernel. Weights -> bf16 (MXU-native, half the DMA);
    # biases stay f32 and are added to the f32 matmul accumulator output.
    w_node = jnp.concatenate(
        [params["wA"], params["wD"], params["wB"], params["wE"]], axis=1).astype(bf16)
    b_node = jnp.concatenate(
        [params["bA"], params["bD"], params["bB"], params["bE"]], axis=1).astype(f32)
    wC = params["wC"].astype(bf16)
    bC = params["bC"].astype(f32)

    def pad_rows(x, rows, fill=0):
        p = rows - x.shape[0]
        if p == 0:
            return x
        return jnp.concatenate([x, jnp.full((p,) + x.shape[1:], fill, x.dtype)], axis=0)

    h_p = pad_rows(h.astype(f32), N_pad)
    e_p = pad_rows(e.astype(f32), E_pad)
    snorm_n_p = pad_rows(snorm_n.reshape(N, 1).astype(f32), N_pad)
    snorm_e_p = pad_rows(snorm_e.reshape(E, 1).astype(f32), E_pad)
    # Padded edges point at node -1 -> all-zero one-hot rows -> zero contribution to
    # the segment sums; padded nodes are never referenced by real edges.
    src_p = pad_rows(src.astype(jnp.int32).reshape(E), E_pad, fill=-1)
    dst_p = pad_rows(dst.astype(jnp.int32).reshape(E), E_pad, fill=-1)
    src_oh = jax.nn.one_hot(src_p, N_pad, dtype=bf16)     # [E_pad, N_pad], exact 0/1
    dst_oh = jax.nn.one_hot(dst_p, N_pad, dtype=bf16)

    # Resident (constant-index) inputs: single-buffer them when supported to free VMEM
    # for larger edge tiles (matters most on v7x's 64 MiB VMEM).
    if single_buffer_resident:
        def resident(shape):
            return pl.BlockSpec(shape, lambda *_: (0, 0),
                                pipeline_mode=pl.Buffered(buffer_count=1))
    else:
        def resident(shape):
            return pl.BlockSpec(shape, lambda *_: (0, 0))

    grid_spec = pltpu.PrefetchScalarGridSpec(
        num_scalar_prefetch=0,
        grid=(n_tiles,),
        in_specs=[
            resident((N_pad, Din)),                              # h (resident, f32)
            pl.BlockSpec((edge_tile, Din), lambda i: (i, 0)),    # e tile (f32)
            resident((Din, 4 * Dout)),                           # fused node weights (bf16)
            resident((1, 4 * Dout)),                             # fused node bias (f32)
            resident((Din, Dout)),                               # wC (bf16)
            resident((1, Dout)),                                 # bC (f32)
            pl.BlockSpec((edge_tile, N_pad), lambda i: (i, 0)),  # src one-hot tile (bf16)
            pl.BlockSpec((edge_tile, N_pad), lambda i: (i, 0)),  # dst one-hot tile (bf16)
            resident((N_pad, 1)),                                # snorm_n (resident)
            pl.BlockSpec((edge_tile, 1), lambda i: (i, 0)),      # snorm_e tile
        ],
        out_specs=(
            pl.BlockSpec((N_pad, Dout), lambda i: (0, 0)),       # h_out (resident)
            pl.BlockSpec((edge_tile, Dout), lambda i: (i, 0)),   # e_out tile
        ),
        scratch_shapes=[
            pltpu.VMEM((N_pad, Dout), f32),           # Ah
            pltpu.VMEM((N_pad, 3 * Dout), bf16),      # [Dh | Bh | Eh]
            pltpu.VMEM((N_pad, 2 * Dout), f32),       # [num | den] accumulator
            pltpu.VMEM((edge_tile, 2 * Dout), bf16),  # per-tile [sigma*Bh | sigma]
        ],
    )

    h_out_p, e_out_p = pl.pallas_call(
        gated_gcn_kernel,
        grid_spec=grid_spec,
        out_shape=(
            jax.ShapeDtypeStruct((N_pad, Dout), f32),
            jax.ShapeDtypeStruct((E_pad, Dout), f32),
        ),
        # Residual outputs reuse the (padded) h / e HBM buffers (Din == Dout).
        # NOTE: arrays passed here are aliased/donated; under jit (no donate_argnums)
        # or whenever padding makes a copy, the caller's originals stay valid.
        input_output_aliases={0: 0, 1: 1},
        compiler_params=pltpu.CompilerParams(
            dimension_semantics=("arbitrary",),       # edge axis carries num/den reduction
            vmem_limit_bytes=int(budget),
        ),
    )(h_p, e_p, w_node, b_node, wC, bC, src_oh, dst_oh, snorm_n_p, snorm_e_p)

    return h_out_p[:N].astype(h.dtype), e_out_p[:E].astype(e.dtype)


def reference(h, e, params, src, dst, snorm_n, snorm_e):
    """Pure-JAX f32 reference mirroring the PyTorch/DGL forward (eval, no batch_norm)."""
    N = h.shape[0]
    Ah = h @ params["wA"] + params["bA"]
    Bh = h @ params["wB"] + params["bB"]
    Dh = h @ params["wD"] + params["bD"]
    Eh = h @ params["wE"] + params["bE"]
    Ce = e @ params["wC"] + params["bC"]
    e_new = Ce + Dh[src] + Eh[dst]
    sigma = jax.nn.sigmoid(e_new)
    num = jax.ops.segment_sum(sigma * Bh[src], dst, num_segments=N)
    den = jax.ops.segment_sum(sigma, dst, num_segments=N)
    h_new = Ah + num / (den + 1e-6)
    h_out = h + jnp.maximum(h_new * snorm_n, 0.0)
    e_out = e + jnp.maximum(e_new * snorm_e, 0.0)
    return h_out, e_out


if __name__ == "__main__":
    # residual=True requires input_dim == output_dim; N = Din = Dout = 128 keeps every
    # block lane-dense and needs no padding (the wrapper still supports padding).
    N, Din, Dout = 128, 128, 128
    in_degree = 4
    E = N * in_degree          # 512 edges, every node has in-degree 4

    key = jax.random.PRNGKey(0)
    keys = jax.random.split(key, 16)

    def linear(kw, kb):
        w = jax.random.normal(kw, (Din, Dout), jnp.float32) * 0.1
        b = jax.random.normal(kb, (1, Dout), jnp.float32) * 0.1
        return w, b

    wA, bA = linear(keys[0], keys[1])
    wB, bB = linear(keys[2], keys[3])
    wC, bC = linear(keys[4], keys[5])
    wD, bD = linear(keys[6], keys[7])
    wE, bE = linear(keys[8], keys[9])
    params = dict(wA=wA, bA=bA, wB=wB, bB=bB, wC=wC, bC=bC,
                  wD=wD, bD=bD, wE=wE, bE=bE)

    h = jax.random.normal(keys[10], (N, Din), jnp.float32)
    e = jax.random.normal(keys[11], (E, Din), jnp.float32)

    # Every node gets in-degree >= 1 (matches DGL's UDF-reduce semantics exactly).
    dst = jnp.tile(jnp.arange(N, dtype=jnp.int32), in_degree)               # [E]
    src = jax.random.randint(keys[12], (E,), 0, N, dtype=jnp.int32)         # [E]

    snorm_n = jax.random.uniform(keys[13], (N, 1), jnp.float32, 0.5, 1.0)
    snorm_e = jax.random.uniform(keys[14], (E, 1), jnp.float32, 0.5, 1.0)

    # Reference first; fresh copies for the second kernel call (the pallas_call aliases
    # its h/e operands).
    h_ref_out, e_ref_out = reference(h, e, params, src, dst, snorm_n, snorm_e)
    h2 = jnp.array(h)
    e2 = jnp.array(e)

    # 1) explicit 128-row edge tiles: exercises the multi-step accumulator pipeline.
    run_tiled = jax.jit(functools.partial(gated_gcn_layer, edge_tile=128))
    h_out, e_out = run_tiled(h, e, params, src, dst, snorm_n, snorm_e)
    jax.block_until_ready((h_out, e_out))

    # 2) VMEM-derived (generation-aware) automatic tile size.
    run_auto = jax.jit(gated_gcn_layer)
    h_out2, e_out2 = run_auto(h2, e2, params, src, dst, snorm_n, snorm_e)
    jax.block_until_ready((h_out2, e_out2))

    # bf16 MXU operands + EUP approx reciprocal vs the f32 XLA reference; genuine
    # logic errors are O(1), well outside these tolerances.
    for ho, eo in ((h_out, e_out), (h_out2, e_out2)):
        assert jnp.allclose(eo, e_ref_out, rtol=3e-2, atol=3e-2), "e mismatch"
        assert jnp.allclose(ho, h_ref_out, rtol=3e-2, atol=3e-2), "h mismatch"

    print("KERNEL_OK")
</pallas_src>

<mosaic_0001>
module attributes {stable_mosaic.version = 11 : i64} {
  func.func @gated_gcn_kernel(%arg0: i32, %arg1: memref<128x128xf32, #tpu.memory_space<vmem>>, %arg2: memref<128x128xf32, #tpu.memory_space<vmem>>, %arg3: memref<128x512xbf16, #tpu.memory_space<vmem>>, %arg4: memref<1x512xf32, #tpu.memory_space<vmem>>, %arg5: memref<128x128xbf16, #tpu.memory_space<vmem>>, %arg6: memref<1x128xf32, #tpu.memory_space<vmem>>, %arg7: memref<128x128xbf16, #tpu.memory_space<vmem>>, %arg8: memref<128x128xbf16, #tpu.memory_space<vmem>>, %arg9: memref<128x1xf32, #tpu.memory_space<vmem>>, %arg10: memref<128x1xf32, #tpu.memory_space<vmem>>, %arg11: memref<128x128xf32, #tpu.memory_space<vmem>>, %arg12: memref<128x128xf32, #tpu.memory_space<vmem>>, %arg13: memref<128x128xf32, #tpu.memory_space<vmem>>, %arg14: memref<128x384xbf16, #tpu.memory_space<vmem>>, %arg15: memref<128x256xf32, #tpu.memory_space<vmem>>, %arg16: memref<128x256xbf16, #tpu.memory_space<vmem>>) attributes {dimension_semantics = [#tpu.dimension_semantics<arbitrary>], iteration_bounds = array<i64: 4>, scalar_prefetch = 0 : i64, scratch_operands = 4 : i64, tpu.core_type = #tpu.core_type<tc>, window_params = [{pipeline_mode = #tpu.pipeline_mode<synchronous>, transform_indices = @transform_0, window_bounds = array<i64: 128, 128>}, {transform_indices = @transform_1, window_bounds = array<i64: 128, 128>}, {pipeline_mode = #tpu.pipeline_mode<synchronous>, transform_indices = @transform_2, window_bounds = array<i64: 128, 512>}, {pipeline_mode = #tpu.pipeline_mode<synchronous>, transform_indices = @transform_3, window_bounds = array<i64: 1, 512>}, {pipeline_mode = #tpu.pipeline_mode<synchronous>, transform_indices = @transform_4, window_bounds = array<i64: 128, 128>}, {pipeline_mode = #tpu.pipeline_mode<synchronous>, transform_indices = @transform_5, window_bounds = array<i64: 1, 128>}, {transform_indices = @transform_6, window_bounds = array<i64: 128, 128>}, {transform_indices = @transform_7, window_bounds = array<i64: 128, 128>}, {pipeline_mode = #tpu.pipeline_mode<synchronous>, transform_indices = @transform_8, window_bounds = array<i64: 128, 1>}, {transform_indices = @transform_9, window_bounds = array<i64: 128, 1>}, {pipeline_mode = #tpu.pipeline_mode<synchronous>, transform_indices = @transform_10, window_bounds = array<i64: 128, 128>}, {transform_indices = @transform_11, window_bounds = array<i64: 128, 128>}]} {
    %c0_i32 = arith.constant 0 : i32
    %0 = arith.cmpi eq, %arg0, %c0_i32 : i32
    %1 = arith.extui %0 : i1 to i32
    %c0_i32_0 = arith.constant 0 : i32
    %2 = arith.cmpi ne, %1, %c0_i32_0 : i32
    scf.if %2 {
      %c0_34 = arith.constant 0 : index
      %c0_35 = arith.constant 0 : index
      %46 = vector.load %arg1[%c0_34, %c0_35] : memref<128x128xf32, #tpu.memory_space<vmem>>, vector<128x128xf32>
      %47 = arith.truncf %46 : vector<128x128xf32> to vector<128x128xbf16>
      %c0_36 = arith.constant 0 : index
      %c0_37 = arith.constant 0 : index
      %48 = vector.load %arg3[%c0_36, %c0_37] : memref<128x512xbf16, #tpu.memory_space<vmem>>, vector<128x512xbf16>
      %cst_38 = arith.constant dense<0.000000e+00> : vector<128x512xf32>
      %49 = tpu.matmul %47, %48, %cst_38 {dimension_numbers = #tpu.dot_dimension_numbers<[1], [0], [0], [1], [0, 0, 1, 1], [], []>} : vector<128x128xbf16>, vector<128x512xbf16>, vector<128x512xf32> -> vector<128x512xf32>
      %c0_39 = arith.constant 0 : index
      %c0_40 = arith.constant 0 : index
      %50 = vector.load %arg4[%c0_39, %c0_40] : memref<1x512xf32, #tpu.memory_space<vmem>>, vector<1x512xf32>
      %51 = vector.broadcast %50 : vector<1x512xf32> to vector<128x512xf32>
      %52 = arith.addf %49, %51 : vector<128x512xf32>
      %53 = vector.extract_strided_slice %52 {offsets = [0, 0], sizes = [128, 128], strides = [1, 1]} : vector<128x512xf32> to vector<128x128xf32>
      %c0_41 = arith.constant 0 : index
      %c0_42 = arith.constant 0 : index
      %54 = vector.load %arg13[%c0_41, %c0_42] : memref<128x128xf32, #tpu.memory_space<vmem>>, vector<128x128xf32>
      tpu.vector_store %arg13[%c0_41, %c0_42], %53 {strides = array<i32>} : memref<128x128xf32, #tpu.memory_space<vmem>>, vector<128x128xf32>,
      %55 = vector.extract_strided_slice %52 {offsets = [0, 128], sizes = [128, 384], strides = [1, 1]} : vector<128x512xf32> to vector<128x384xf32>
      %56 = arith.truncf %55 : vector<128x384xf32> to vector<128x384xbf16>
      %c0_43 = arith.constant 0 : index
      %c0_44 = arith.constant 0 : index
      %57 = vector.load %arg14[%c0_43, %c0_44] : memref<128x384xbf16, #tpu.memory_space<vmem>>, vector<128x384xbf16>
      tpu.vector_store %arg14[%c0_43, %c0_44], %56 {strides = array<i32>} : memref<128x384xbf16, #tpu.memory_space<vmem>>, vector<128x384xbf16>,
      %cst_45 = arith.constant 0.000000e+00 : f32
      %58 = vector.broadcast %cst_45 : f32 to vector<128x256xf32>
      %c0_46 = arith.constant 0 : index
      %c0_47 = arith.constant 0 : index
      %59 = vector.load %arg15[%c0_46, %c0_47] : memref<128x256xf32, #tpu.memory_space<vmem>>, vector<128x256xf32>
      tpu.vector_store %arg15[%c0_46, %c0_47], %58 {strides = array<i32>} : memref<128x256xf32, #tpu.memory_space<vmem>>, vector<128x256xf32>,
    } else {
    }
    %c0 = arith.constant 0 : index
    %c0_1 = arith.constant 0 : index
    %3 = vector.load %arg14[%c0, %c0_1] : memref<128x384xbf16, #tpu.memory_space<vmem>>, vector<128x256xbf16>
    %c0_2 = arith.constant 0 : index
    %c256 = arith.constant 256 : index
    %4 = vector.load %arg14[%c0_2, %c256] : memref<128x384xbf16, #tpu.memory_space<vmem>>, vector<128x128xbf16>
    %c0_3 = arith.constant 0 : index
    %c0_4 = arith.constant 0 : index
    %5 = vector.load %arg7[%c0_3, %c0_4] : memref<128x128xbf16, #tpu.memory_space<vmem>>, vector<128x128xbf16>
    %c0_5 = arith.constant 0 : index
    %c0_6 = arith.constant 0 : index
    %6 = vector.load %arg8[%c0_5, %c0_6] : memref<128x128xbf16, #tpu.memory_space<vmem>>, vector<128x128xbf16>
    %c0_7 = arith.constant 0 : index
    %c0_8 = arith.constant 0 : index
    %7 = vector.load %arg2[%c0_7, %c0_8] : memref<128x128xf32, #tpu.memory_space<vmem>>, vector<128x128xf32>
    %8 = arith.truncf %7 : vector<128x128xf32> to vector<128x128xbf16>
    %c0_9 = arith.constant 0 : index
    %c0_10 = arith.constant 0 : index
    %9 = vector.load %arg5[%c0_9, %c0_10] : memref<128x128xbf16, #tpu.memory_space<vmem>>, vector<128x128xbf16>
    %cst = arith.constant dense<0.000000e+00> : vector<128x128xf32>
    %10 = tpu.matmul %8, %9, %cst {dimension_numbers = #tpu.dot_dimension_numbers<[1], [0], [0], [1], [0, 0, 1, 1], [], []>} : vector<128x128xbf16>, vector<128x128xbf16>, vector<128x128xf32> -> vector<128x128xf32>
    %c0_11 = arith.constant 0 : index
    %c0_12 = arith.constant 0 : index
    %11 = vector.load %arg6[%c0_11, %c0_12] : memref<1x128xf32, #tpu.memory_space<vmem>>, vector<1x128xf32>
    %12 = vector.broadcast %11 : vector<1x128xf32> to vector<128x128xf32>
    %13 = arith.addf %10, %12 : vector<128x128xf32>
    %cst_13 = arith.constant dense<0.000000e+00> : vector<128x256xf32>
    %14 = tpu.matmul %5, %3, %cst_13 {dimension_numbers = #tpu.dot_dimension_numbers<[1], [0], [0], [1], [0, 0, 1, 1], [], []>} : vector<128x128xbf16>, vector<128x256xbf16>, vector<128x256xf32> -> vector<128x256xf32>
    %15 = vector.extract_strided_slice %14 {offsets = [0, 0], sizes = [128, 128], strides = [1, 1]} : vector<128x256xf32> to vector<128x128xf32>
    %16 = vector.extract_strided_slice %14 {offsets = [0, 128], sizes = [128, 128], strides = [1, 1]} : vector<128x256xf32> to vector<128x128xf32>
    %cst_14 = arith.constant dense<0.000000e+00> : vector<128x128xf32>
    %17 = tpu.matmul %6, %4, %cst_14 {dimension_numbers = #tpu.dot_dimension_numbers<[1], [0], [0], [1], [0, 0, 1, 1], [], []>} : vector<128x128xbf16>, vector<128x128xbf16>, vector<128x128xf32> -> vector<128x128xf32>
    %18 = arith.addf %13, %15 : vector<128x128xf32>
    %19 = arith.addf %18, %17 : vector<128x128xf32>
    %20 = arith.negf %19 : vector<128x128xf32>
    %21 = math.exp %20 : vector<128x128xf32>
    %cst_15 = arith.constant 1.000000e+00 : f32
    %22 = vector.broadcast %cst_15 : f32 to vector<128x128xf32>
    %23 = arith.addf %22, %21 : vector<128x128xf32>
    %24 = arith.divf %22, %23 : vector<128x128xf32>
    %25 = arith.mulf %24, %16 : vector<128x128xf32>
    %26 = arith.truncf %25 : vector<128x128xf32> to vector<128x128xbf16>
    %c0_16 = arith.constant 0 : index
    %c0_17 = arith.constant 0 : index
    %27 = vector.load %arg16[%c0_16, %c0_17] : memref<128x256xbf16, #tpu.memory_space<vmem>>, vector<128x128xbf16>
    tpu.vector_store %arg16[%c0_16, %c0_17], %26 {strides = array<i32>} : memref<128x256xbf16, #tpu.memory_space<vmem>>, vector<128x128xbf16>,
    %28 = arith.truncf %24 : vector<128x128xf32> to vector<128x128xbf16>
    %c0_18 = arith.constant 0 : index
    %c128 = arith.constant 128 : index
    %29 = vector.load %arg16[%c0_18, %c128] : memref<128x256xbf16, #tpu.memory_space<vmem>>, vector<128x128xbf16>
    tpu.vector_store %arg16[%c0_18, %c128], %28 {strides = array<i32>} : memref<128x256xbf16, #tpu.memory_space<vmem>>, vector<128x128xbf16>,
    %c0_19 = arith.constant 0 : index
    %c0_20 = arith.constant 0 : index
    %30 = vector.load %arg15[%c0_19, %c0_20] : memref<128x256xf32, #tpu.memory_space<vmem>>, vector<128x256xf32>
    %c0_21 = arith.constant 0 : index
    %c0_22 = arith.constant 0 : index
    %31 = vector.load %arg16[%c0_21, %c0_22] : memref<128x256xbf16, #tpu.memory_space<vmem>>, vector<128x256xbf16>
    %cst_23 = arith.constant dense<0.000000e+00> : vector<128x256xf32>
    %32 = tpu.matmul %6, %31, %cst_23 {dimension_numbers = #tpu.dot_dimension_numbers<[0], [0], [1], [1], [0, 1, 1, 1], [], []>} : vector<128x128xbf16>, vector<128x256xbf16>, vector<128x256xf32> -> vector<128x256xf32>
    %33 = arith.addf %30, %32 : vector<128x256xf32>
    %c0_24 = arith.constant 0 : index
    %c0_25 = arith.constant 0 : index
    %34 = vector.load %arg15[%c0_24, %c0_25] : memref<128x256xf32, #tpu.memory_space<vmem>>, vector<128x256xf32>
    tpu.vector_store %arg15[%c0_24, %c0_25], %33 {strides = array<i32>} : memref<128x256xf32, #tpu.memory_space<vmem>>, vector<128x256xf32>,
    %c0_26 = arith.constant 0 : index
    %c0_27 = arith.constant 0 : index
    %35 = vector.load %arg2[%c0_26, %c0_27] : memref<128x128xf32, #tpu.memory_space<vmem>>, vector<128x128xf32>
    %c0_28 = arith.constant 0 : index
    %c0_29 = arith.constant 0 : index
    %36 = vector.load %arg10[%c0_28, %c0_29] : memref<128x1xf32, #tpu.memory_space<vmem>>, vector<128x1xf32>
    %37 = vector.broadcast %36 : vector<128x1xf32> to vector<128x128xf32>
    %38 = arith.mulf %19, %37 : vector<128x128xf32>
    %cst_30 = arith.constant 0.000000e+00 : f32
    %39 = vector.broadcast %cst_30 : f32 to vector<128x128xf32>
    %40 = arith.maximumf %38, %39 : vector<128x128xf32>
    %41 = arith.addf %35, %40 : vector<128x128xf32>
    %c0_31 = arith.constant 0 : index
    %c0_32 = arith.constant 0 : index
    %42 = vector.load %arg12[%c0_31, %c0_32] : memref<128x128xf32, #tpu.memory_space<vmem>>, vector<128x128xf32>
    tpu.vector_store %arg12[%c0_31, %c0_32], %41 {strides = array<i32>} : memref<128x128xf32, #tpu.memory_space<vmem>>, vector<128x128xf32>,
    %c3_i32 = arith.constant 3 : i32
    %43 = arith.cmpi eq, %arg0, %c3_i32 : i32
    %44 = arith.extui %43 : i1 to i32
    %c0_i32_33 = arith.constant 0 : i32
    %45 = arith.cmpi ne, %44, %c0_i32_33 : i32
    scf.if %45 {
      %c0_34 = arith.constant 0 : index
      %c0_35 = arith.constant 0 : index
      %46 = vector.load %arg15[%c0_34, %c0_35] : memref<128x256xf32, #tpu.memory_space<vmem>>, vector<128x128xf32>
      %c0_36 = arith.constant 0 : index
      %c128_37 = arith.constant 128 : index
      %47 = vector.load %arg15[%c0_36, %c128_37] : memref<128x256xf32, #tpu.memory_space<vmem>>, vector<128x128xf32>
      %c0_38 = arith.constant 0 : index
      %c0_39 = arith.constant 0 : index
      %48 = vector.load %arg13[%c0_38, %c0_39] : memref<128x128xf32, #tpu.memory_space<vmem>>, vector<128x128xf32>
      %cst_40 = arith.constant 9.99999997E-7 : f32
      %49 = vector.broadcast %cst_40 : f32 to vector<128x128xf32>
      %50 = arith.addf %47, %49 : vector<128x128xf32>
      %51 = tpu.reciprocal %50 {approx = true} : vector<128x128xf32> -> vector<128x128xf32>
      %52 = arith.mulf %46, %51 : vector<128x128xf32>
      %53 = arith.addf %48, %52 : vector<128x128xf32>
      %c0_41 = arith.constant 0 : index
      %c0_42 = arith.constant 0 : index
      %54 = vector.load %arg9[%c0_41, %c0_42] : memref<128x1xf32, #tpu.memory_space<vmem>>, vector<128x1xf32>
      %55 = vector.broadcast %54 : vector<128x1xf32> to vector<128x128xf32>
      %56 = arith.mulf %53, %55 : vector<128x128xf32>
      %cst_43 = arith.constant 0.000000e+00 : f32
      %57 = vector.broadcast %cst_43 : f32 to vector<128x128xf32>
      %58 = arith.maximumf %56, %57 : vector<128x128xf32>
      %c0_44 = arith.constant 0 : index
      %c0_45 = arith.constant 0 : index
      %59 = vector.load %arg1[%c0_44, %c0_45] : memref<128x128xf32, #tpu.memory_space<vmem>>, vector<128x128xf32>
      %60 = arith.addf %59, %58 : vector<128x128xf32>
      %c0_46 = arith.constant 0 : index
      %c0_47 = arith.constant 0 : index
      %61 = vector.load %arg11[%c0_46, %c0_47] : memref<128x128xf32, #tpu.memory_space<vmem>>, vector<128x128xf32>
      tpu.vector_store %arg11[%c0_46, %c0_47], %60 {strides = array<i32>} : memref<128x128xf32, #tpu.memory_space<vmem>>, vector<128x128xf32>,
    } else {
    }
    return
  }
  func.func @transform_0(%arg0: i32) -> (i32, i32) {
    %c0_i32 = arith.constant 0 : i32
    %c0_i32_0 = arith.constant 0 : i32
    %c0_i32_1 = arith.constant 0 : i32
    return %c0_i32, %c0_i32_0 : i32, i32
  }
  func.func @transform_1(%arg0: i32) -> (i32, i32) {
    %c0_i32 = arith.constant 0 : i32
    %c0_i32_0 = arith.constant 0 : i32
    return %arg0, %c0_i32 : i32, i32
  }
  func.func @transform_2(%arg0: i32) -> (i32, i32) {
    %c0_i32 = arith.constant 0 : i32
    %c0_i32_0 = arith.constant 0 : i32
    %c0_i32_1 = arith.constant 0 : i32
    return %c0_i32, %c0_i32_0 : i32, i32
  }
  func.func @transform_3(%arg0: i32) -> (i32, i32) {
    %c0_i32 = arith.constant 0 : i32
    %c0_i32_0 = arith.constant 0 : i32
    %c0_i32_1 = arith.constant 0 : i32
    return %c0_i32, %c0_i32_0 : i32, i32
  }
  func.func @transform_4(%arg0: i32) -> (i32, i32) {
    %c0_i32 = arith.constant 0 : i32
    %c0_i32_0 = arith.constant 0 : i32
    %c0_i32_1 = arith.constant 0 : i32
    return %c0_i32, %c0_i32_0 : i32, i32
  }
  func.func @transform_5(%arg0: i32) -> (i32, i32) {
    %c0_i32 = arith.constant 0 : i32
    %c0_i32_0 = arith.constant 0 : i32
    %c0_i32_1 = arith.constant 0 : i32
    return %c0_i32, %c0_i32_0 : i32, i32
  }
  func.func @transform_6(%arg0: i32) -> (i32, i32) {
    %c0_i32 = arith.constant 0 : i32
    %c0_i32_0 = arith.constant 0 : i32
    return %arg0, %c0_i32 : i32, i32
  }
  func.func @transform_7(%arg0: i32) -> (i32, i32) {
    %c0_i32 = arith.constant 0 : i32
    %c0_i32_0 = arith.constant 0 : i32
    return %arg0, %c0_i32 : i32, i32
  }
  func.func @transform_8(%arg0: i32) -> (i32, i32) {
    %c0_i32 = arith.constant 0 : i32
    %c0_i32_0 = arith.constant 0 : i32
    %c0_i32_1 = arith.constant 0 : i32
    return %c0_i32, %c0_i32_0 : i32, i32
  }
  func.func @transform_9(%arg0: i32) -> (i32, i32) {
    %c0_i32 = arith.constant 0 : i32
    %c0_i32_0 = arith.constant 0 : i32
    return %arg0, %c0_i32 : i32, i32
  }
  func.func @transform_10(%arg0: i32) -> (i32, i32) {
    %c0_i32 = arith.constant 0 : i32
    %c0_i32_0 = arith.constant 0 : i32
    %c0_i32_1 = arith.constant 0 : i32
    return %c0_i32, %c0_i32_0 : i32, i32
  }
  func.func @transform_11(%arg0: i32) -> (i32, i32) {
    %c0_i32 = arith.constant 0 : i32
    %c0_i32_0 = arith.constant 0 : i32
    return %arg0, %c0_i32 : i32, i32
  }
}

</mosaic_0001>

<llo_original>
// kernel: gated_gcn_layer.1
$region0: #{gated_gcn_layer.1}
  #allocation0 [shape = 'u32[]', space=smem, size = 0x4, offset = 0x4, fixed_abs, tag = 'smem constant byte address 0x4 - core index']
  #allocation1 [shape = 'u32[144,128]{1,0:T(1,128)}', space=vmem, size = 0x12000, scoped, tag = 'internal scratch']
  #allocation2 [shape = 'f32[128,128]{1,0:T(8,128)}', space=vmem, size = 0x10000, scoped, tag = 'scratch operand']
  #allocation3 [shape = 'bf16[128,384]{1,0:T(8,128)(2,1)}', space=vmem, size = 0x18000, scoped, tag = 'scratch operand']
  #allocation4 [shape = 'f32[128,256]{1,0:T(8,128)}', space=vmem, size = 0x20000, scoped, tag = 'scratch operand']
  #allocation5 [shape = 'bf16[128,256]{1,0:T(8,128)(2,1)}', space=vmem, size = 0x10000, scoped, tag = 'scratch operand']
  %s0 = inlined_call_operand.hbm [shape: f32[128,128], index: 0, kind: input, shape index: {}, may-alias: {0,10}]
  %s1 = inlined_call_operand.hbm [shape: f32[512,128], index: 1, kind: input, shape index: {}, may-alias: {1,11}]
  %s2 = inlined_call_operand.vmem [shape: bf16[128,512], index: 2, kind: input, shape index: {}]
  %s3 = inlined_call_operand.vmem [shape: f32[1,512], index: 3, kind: input, shape index: {}]
  %s4 = inlined_call_operand.vmem [shape: bf16[128,128], index: 4, kind: input, shape index: {}]
  %s5 = inlined_call_operand.vmem [shape: f32[1,128], index: 5, kind: input, shape index: {}]
  %s6 = inlined_call_operand.vmem [shape: bf16[512,128], index: 6, kind: input, shape index: {}]
  %s7 = inlined_call_operand.vmem [shape: bf16[512,128], index: 7, kind: input, shape index: {}]
  %s8 = inlined_call_operand.vmem [shape: f32[128,1], index: 8, kind: input, shape index: {}]
  %s9 = inlined_call_operand.vmem [shape: f32[512,1], index: 9, kind: input, shape index: {}]
  %s10 = inlined_call_operand.hbm [shape: f32[128,128], index: 10, kind: output, shape index: {0}, may-alias: {0,10}]
  %s11 = inlined_call_operand.hbm [shape: f32[512,128], index: 11, kind: output, shape index: {1}, may-alias: {1,11}]
  %12 = xla_tuple %s10, %s11
  %s13 = sld [smem:[#allocation0]]
  $region97: #{gated_gcn_layer.1} parent=0
    _
  %s15 = ssub.s32 1, %s13
  %s16 = scalar_select 0, %s15, %s13
  $region1: #{gated_gcn_layer.1} parent=0
    #allocation6 [shape = 'u8[65536]{0}', space=vmem, size = 0x10000, scoped, tag = 'input window, operand 0, single buffered']
    #allocation7 [shape = 's32[2]{0}', space=sflag, size = 0x8, scoped, tag = 'scoped memory for gated_gcn_layer.1']
    #allocation8 [shape = 's32[2]{0}', space=sflag, size = 0x8, scoped, tag = 'scoped memory for gated_gcn_layer.1']
    #allocation9 [shape = 'u8[131072]{0}', space=vmem, size = 0x20000, scoped, tag = 'input window, operand 1']
    #allocation10 [shape = 's32[2]{0}', space=sflag, size = 0x8, scoped, tag = 'scoped memory for gated_gcn_layer.1']
    #allocation11 [shape = 'u8[65536]{0}', space=vmem, size = 0x10000, scoped, tag = 'output window, operand 0, single buffered']
    #allocation12 [shape = 'u8[131072]{0}', space=vmem, size = 0x20000, scoped, tag = 'output window, operand 1']
    #allocation13 [shape = 's32[2]{0}', space=sflag, size = 0x8, scoped, tag = 'scoped memory for gated_gcn_layer.1']
    %17 = vsyncpa [#allocation7], 0
    %18 = vsyncpa [#allocation10], 0
    %s19 = scalar_lea.sflag [#allocation10], 1
    %20 = vsyncpa %s19, 0
    %21 = vsyncpa [#allocation8], 0
    %22 = vsyncpa [#allocation13], 0
    %s23 = scalar_lea.sflag [#allocation13], 1
    %24 = vsyncpa %s23, 0
    loop: start=0, step=1, limit=6
    $region2: #{gated_gcn_layer.1} parent=1 // loop_pre_header
      _
    $region3: #{gated_gcn_layer.1} parent=1 // loop_header
      %s26 = sphi 0, %s30
      %p27 = scmp.ge.s32.totalorder %s26, 6
      %s34 = sphi 0, %s34
      %s36 = sphi 0, %s34
      %s37 = sphi 0, %s36
      %s51 = sphi 0, %s37
      %s57 = sphi 0, %s59
      %s60 = sphi 0, %s57
      %s61 = sphi 0, %s60
      %s77 = sphi 0, %s61
      %s81 = sphi 0, %s81
      %s83 = sphi 0, %s81
      %s84 = sphi 0, %s83
      %s98 = sphi 0, %s84
      %s102 = sphi 0, %s102
      %s104 = sphi 0, %s102
      %s105 = sphi 0, %s104
      %s119 = sphi 0, %s105
      %s123 = sphi 0, %s123
      %s125 = sphi 0, %s123
      %s126 = sphi 0, %s125
      %s140 = sphi 0, %s126
      %s144 = sphi 0, %s144
      %s146 = sphi 0, %s144
      %s147 = sphi 0, %s146
      %s161 = sphi 0, %s147
      %s167 = sphi 0, %s169
      %s170 = sphi 0, %s167
      %s171 = sphi 0, %s170
      %s187 = sphi 0, %s171
      %s193 = sphi 0, %s195
      %s196 = sphi 0, %s193
      %s197 = sphi 0, %s196
      %s213 = sphi 0, %s197
      %s217 = sphi 0, %s217
      %s219 = sphi 0, %s217
      %s220 = sphi 0, %s219
      %s234 = sphi 0, %s220
      %s240 = sphi 0, %s242
      %s243 = sphi 0, %s240
      %s244 = sphi 0, %s243
      %s260 = sphi 0, %s244
      %s264 = sphi 0, %s264
      %s266 = sphi 0, %s264
      %s267 = sphi 0, %s266
      %s281 = sphi 0, %s267
      %s287 = sphi 0, %s289
      %s290 = sphi 0, %s287
      %s291 = sphi 0, %s290
      %s307 = sphi 0, %s291
    $region4: #{gated_gcn_layer.1} parent=1 // loop_header_branch
      %29 = sbr.rel (%p27) target = $region8
    $region5: #{gated_gcn_layer.1} parent=1 // loop_body
      %s31 = ssub.s32 %s26, 1
      %s32 = ssub.s32 %s26, 2
      %s33 = sadd.s32 %s26, 1
      %s35 = sadd.s32 %s34, 1
      %p38 = scmp.eq.s32.totalorder %s26, 3
      %p39 = scmp.ne.s32.totalorder %s34, %s36
      %p40 = scmp.eq.s32.totalorder %s26, 0
      %p41 = por %p39, %p40
      %p42 = scmp.ne.s32.totalorder %s34, %s36
      %p43 = scmp.eq.s32.totalorder %s31, 3
      %p44 = por %p42, %p43
      %p45 = scmp.ne.s32.totalorder %s36, %s37
      %p46 = scmp.eq.s32.totalorder %s31, 0
      %p47 = por %p45, %p46
      %p48 = scmp.ne.s32.totalorder %s36, %s37
      %p49 = scmp.eq.s32.totalorder %s32, 3
      %p50 = por %p48, %p49
      %p52 = scmp.ne.s32.totalorder %s37, %s51
      %p53 = scmp.eq.s32.totalorder %s32, 0
      %p54 = por %p52, %p53
      %s55 = ssub.s32 %s26, %s33
      %p56 = scmp.eq.s32.totalorder %s55, 0
      %s58 = sadd.s32 %s57, 1
      %s59 = scalar_select %p56, %s57, %s58
      %p62 = pneg %p56
      %p63 = scmp.eq.s32.totalorder %s26, 3
      %p64 = por %p62, %p63
      %p65 = scmp.ne.s32.totalorder %s57, %s60
      %p66 = scmp.eq.s32.totalorder %s26, 0
      %p67 = por %p65, %p66
      %p68 = scmp.ne.s32.totalorder %s57, %s60
      %p69 = scmp.eq.s32.totalorder %s31, 3
      %p70 = por %p68, %p69
      %p71 = scmp.ne.s32.totalorder %s60, %s61
      %p72 = scmp.eq.s32.totalorder %s31, 0
      %p73 = por %p71, %p72
      %p74 = scmp.ne.s32.totalorder %s60, %s61
      %p75 = scmp.eq.s32.totalorder %s32, 3
      %p76 = por %p74, %p75
      %p78 = scmp.ne.s32.totalorder %s61, %s77
      %p79 = scmp.eq.s32.totalorder %s32, 0
      %p80 = por %p78, %p79
      %s82 = sadd.s32 %s81, 1
      %p85 = scmp.eq.s32.totalorder %s26, 3
      %p86 = scmp.ne.s32.totalorder %s81, %s83
      %p87 = scmp.eq.s32.totalorder %s26, 0
      %p88 = por %p86, %p87
      %p89 = scmp.ne.s32.totalorder %s81, %s83
      %p90 = scmp.eq.s32.totalorder %s31, 3
      %p91 = por %p89, %p90
      %p92 = scmp.ne.s32.totalorder %s83, %s84
      %p93 = scmp.eq.s32.totalorder %s31, 0
      %p94 = por %p92, %p93
      %p95 = scmp.ne.s32.totalorder %s83, %s84
      %p96 = scmp.eq.s32.totalorder %s32, 3
      %p97 = por %p95, %p96
      %p99 = scmp.ne.s32.totalorder %s84, %s98
      %p100 = scmp.eq.s32.totalorder %s32, 0
      %p101 = por %p99, %p100
      %s103 = sadd.s32 %s102, 1
      %p106 = scmp.eq.s32.totalorder %s26, 3
      %p107 = scmp.ne.s32.totalorder %s102, %s104
      %p108 = scmp.eq.s32.totalorder %s26, 0
      %p109 = por %p107, %p108
      %p110 = scmp.ne.s32.totalorder %s102, %s104
      %p111 = scmp.eq.s32.totalorder %s31, 3
      %p112 = por %p110, %p111
      %p113 = scmp.ne.s32.totalorder %s104, %s105
      %p114 = scmp.eq.s32.totalorder %s31, 0
      %p115 = por %p113, %p114
      %p116 = scmp.ne.s32.totalorder %s104, %s105
      %p117 = scmp.eq.s32.totalorder %s32, 3
      %p118 = por %p116, %p117
      %p120 = scmp.ne.s32.totalorder %s105, %s119
      %p121 = scmp.eq.s32.totalorder %s32, 0
      %p122 = por %p120, %p121
      %s124 = sadd.s32 %s123, 1
      %p127 = scmp.eq.s32.totalorder %s26, 3
      %p128 = scmp.ne.s32.totalorder %s123, %s125
      %p129 = scmp.eq.s32.totalorder %s26, 0
      %p130 = por %p128, %p129
      %p131 = scmp.ne.s32.totalorder %s123, %s125
      %p132 = scmp.eq.s32.totalorder %s31, 3
      %p133 = por %p131, %p132
      %p134 = scmp.ne.s32.totalorder %s125, %s126
      %p135 = scmp.eq.s32.totalorder %s31, 0
      %p136 = por %p134, %p135
      %p137 = scmp.ne.s32.totalorder %s125, %s126
      %p138 = scmp.eq.s32.totalorder %s32, 3
      %p139 = por %p137, %p138
      %p141 = scmp.ne.s32.totalorder %s126, %s140
      %p142 = scmp.eq.s32.totalorder %s32, 0
      %p143 = por %p141, %p142
      %s145 = sadd.s32 %s144, 1
      %p148 = scmp.eq.s32.totalorder %s26, 3
      %p149 = scmp.ne.s32.totalorder %s144, %s146
      %p150 = scmp.eq.s32.totalorder %s26, 0
      %p151 = por %p149, %p150
      %p152 = scmp.ne.s32.totalorder %s144, %s146
      %p153 = scmp.eq.s32.totalorder %s31, 3
      %p154 = por %p152, %p153
      %p155 = scmp.ne.s32.totalorder %s146, %s147
      %p156 = scmp.eq.s32.totalorder %s31, 0
      %p157 = por %p155, %p156
      %p158 = scmp.ne.s32.totalorder %s146, %s147
      %p159 = scmp.eq.s32.totalorder %s32, 3
      %p160 = por %p158, %p159
      %p162 = scmp.ne.s32.totalorder %s147, %s161
      %p163 = scmp.eq.s32.totalorder %s32, 0
      %p164 = por %p162, %p163
      %s165 = ssub.s32 %s26, %s33
      %p166 = scmp.eq.s32.totalorder %s165, 0
      %s168 = sadd.s32 %s167, 1
      %s169 = scalar_select %p166, %s167, %s168
      %p172 = pneg %p166
      %p173 = scmp.eq.s32.totalorder %s26, 3
      %p174 = por %p172, %p173
      %p175 = scmp.ne.s32.totalorder %s167, %s170
      %p176 = scmp.eq.s32.totalorder %s26, 0
      %p177 = por %p175, %p176
      %p178 = scmp.ne.s32.totalorder %s167, %s170
      %p179 = scmp.eq.s32.totalorder %s31, 3
      %p180 = por %p178, %p179
      %p181 = scmp.ne.s32.totalorder %s170, %s171
      %p182 = scmp.eq.s32.totalorder %s31, 0
      %p183 = por %p181, %p182
      %p184 = scmp.ne.s32.totalorder %s170, %s171
      %p185 = scmp.eq.s32.totalorder %s32, 3
      %p186 = por %p184, %p185
      %p188 = scmp.ne.s32.totalorder %s171, %s187
      %p189 = scmp.eq.s32.totalorder %s32, 0
      %p190 = por %p188, %p189
      %s191 = ssub.s32 %s26, %s33
      %p192 = scmp.eq.s32.totalorder %s191, 0
      %s194 = sadd.s32 %s193, 1
      %s195 = scalar_select %p192, %s193, %s194
      %p198 = pneg %p192
      %p199 = scmp.eq.s32.totalorder %s26, 3
      %p200 = por %p198, %p199
      %p201 = scmp.ne.s32.totalorder %s193, %s196
      %p202 = scmp.eq.s32.totalorder %s26, 0
      %p203 = por %p201, %p202
      %p204 = scmp.ne.s32.totalorder %s193, %s196
      %p205 = scmp.eq.s32.totalorder %s31, 3
      %p206 = por %p204, %p205
      %p207 = scmp.ne.s32.totalorder %s196, %s197
      %p208 = scmp.eq.s32.totalorder %s31, 0
      %p209 = por %p207, %p208
      %p210 = scmp.ne.s32.totalorder %s196, %s197
      %p211 = scmp.eq.s32.totalorder %s32, 3
      %p212 = por %p210, %p211
      %p214 = scmp.ne.s32.totalorder %s197, %s213
      %p215 = scmp.eq.s32.totalorder %s32, 0
      %p216 = por %p214, %p215
      %s218 = sadd.s32 %s217, 1
      %p221 = scmp.eq.s32.totalorder %s26, 3
      %p222 = scmp.ne.s32.totalorder %s217, %s219
      %p223 = scmp.eq.s32.totalorder %s26, 0
      %p224 = por %p222, %p223
      %p225 = scmp.ne.s32.totalorder %s217, %s219
      %p226 = scmp.eq.s32.totalorder %s31, 3
      %p227 = por %p225, %p226
      %p228 = scmp.ne.s32.totalorder %s219, %s220
      %p229 = scmp.eq.s32.totalorder %s31, 0
      %p230 = por %p228, %p229
      %p231 = scmp.ne.s32.totalorder %s219, %s220
      %p232 = scmp.eq.s32.totalorder %s32, 3
      %p233 = por %p231, %p232
      %p235 = scmp.ne.s32.totalorder %s220, %s234
      %p236 = scmp.eq.s32.totalorder %s32, 0
      %p237 = por %p235, %p236
      %s238 = ssub.s32 %s26, %s33
      %p239 = scmp.eq.s32.totalorder %s238, 0
      %s241 = sadd.s32 %s240, 1
      %s242 = scalar_select %p239, %s240, %s241
      %p245 = pneg %p239
      %p246 = scmp.eq.s32.totalorder %s26, 3
      %p247 = por %p245, %p246
      %p248 = scmp.ne.s32.totalorder %s240, %s243
      %p249 = scmp.eq.s32.totalorder %s26, 0
      %p250 = por %p248, %p249
      %p251 = scmp.ne.s32.totalorder %s240, %s243
      %p252 = scmp.eq.s32.totalorder %s31, 3
      %p253 = por %p251, %p252
      %p254 = scmp.ne.s32.totalorder %s243, %s244
      %p255 = scmp.eq.s32.totalorder %s31, 0
      %p256 = por %p254, %p255
      %p257 = scmp.ne.s32.totalorder %s243, %s244
      %p258 = scmp.eq.s32.totalorder %s32, 3
      %p259 = por %p257, %p258
      %p261 = scmp.ne.s32.totalorder %s244, %s260
      %p262 = scmp.eq.s32.totalorder %s32, 0
      %p263 = por %p261, %p262
      %s265 = sadd.s32 %s264, 1
      %p268 = scmp.eq.s32.totalorder %s26, 3
      %p269 = scmp.ne.s32.totalorder %s264, %s266
      %p270 = scmp.eq.s32.totalorder %s26, 0
      %p271 = por %p269, %p270
      %p272 = scmp.ne.s32.totalorder %s264, %s266
      %p273 = scmp.eq.s32.totalorder %s31, 3
      %p274 = por %p272, %p273
      %p275 = scmp.ne.s32.totalorder %s266, %s267
      %p276 = scmp.eq.s32.totalorder %s31, 0
      %p277 = por %p275, %p276
      %p278 = scmp.ne.s32.totalorder %s266, %s267
      %p279 = scmp.eq.s32.totalorder %s32, 3
      %p280 = por %p278, %p279
      %p282 = scmp.ne.s32.totalorder %s267, %s281
      %p283 = scmp.eq.s32.totalorder %s32, 0
      %p284 = por %p282, %p283
      %s285 = ssub.s32 %s26, %s33
      %p286 = scmp.eq.s32.totalorder %s285, 0
      %s288 = sadd.s32 %s287, 1
      %s289 = scalar_select %p286, %s287, %s288
      %p292 = pneg %p286
      %p293 = scmp.eq.s32.totalorder %s26, 3
      %p294 = por %p292, %p293
      %p295 = scmp.ne.s32.totalorder %s287, %s290
      %p296 = scmp.eq.s32.totalorder %s26, 0
      %p297 = por %p295, %p296
      %p298 = scmp.ne.s32.totalorder %s287, %s290
      %p299 = scmp.eq.s32.totalorder %s31, 3
      %p300 = por %p298, %p299
      %p301 = scmp.ne.s32.totalorder %s290, %s291
      %p302 = scmp.eq.s32.totalorder %s31, 0
      %p303 = por %p301, %p302
      %p304 = scmp.ne.s32.totalorder %s290, %s291
      %p305 = scmp.eq.s32.totalorder %s32, 3
      %p306 = por %p304, %p305
      %p308 = scmp.ne.s32.totalorder %s291, %s307
      %p309 = scmp.eq.s32.totalorder %s32, 0
      %p310 = por %p308, %p309
      %p311 = scmp.le.s32.totalorder 1, %s26
      %p312 = scmp.lt.s32.totalorder %s26, 5
      %p313 = pnand %p311, %p312
      %p314 = pneg %p313
      // Predicated region
      $region9: #{gated_gcn_layer.1} parent=5 // pred_check
        _
      $region10: #{gated_gcn_layer.1} parent=5 // pred_check_branch
        %316 = sbr.rel (%p313) target = $region12
      $region11: #{gated_gcn_layer.1} parent=5 // pred_region
        %s317 = ssub.s32 %s26, 1
        // Predicated region
        $region13: #{gated_gcn_layer.1} parent=11 // pred_check
          %p318 = pneg %p47
        $region14: #{gated_gcn_layer.1} parent=11 // pred_check_branch
          %320 = sbr.rel (%p318) target = $region16
        $region15: #{gated_gcn_layer.1} parent=11 // pred_region
          %s322 = ssub.s32 2048, 2048
          %323 = vsyncadd [#allocation7], %s322
          %s324 = sshll.u32 [#allocation6], 4
          %s325 = int_to_ptr.vmem [resolvable:$true] %s324
          %330 = dma.hbm_to_vmem [thread:$0]  %s0, 2048, %s325, [#allocation7], 128, 128, 8
        $region16: #{gated_gcn_layer.1} parent=11 // pred_fallthru
          _
        // Predicated region
        $region17: #{gated_gcn_layer.1} parent=11 // pred_check
          %p331 = pneg %p94
        $region18: #{gated_gcn_layer.1} parent=11 // pred_check_branch
          %333 = sbr.rel (%p331) target = $region20
        $region19: #{gated_gcn_layer.1} parent=11 // pred_region
          _
        $region20: #{gated_gcn_layer.1} parent=11 // pred_fallthru
          _
        // Predicated region
        $region21: #{gated_gcn_layer.1} parent=11 // pred_check
          %p334 = pneg %p115
        $region22: #{gated_gcn_layer.1} parent=11 // pred_check_branch
          %336 = sbr.rel (%p334) target = $region24
        $region23: #{gated_gcn_layer.1} parent=11 // pred_region
          _
        $region24: #{gated_gcn_layer.1} parent=11 // pred_fallthru
          _
        // Predicated region
        $region25: #{gated_gcn_layer.1} parent=11 // pred_check
          %p337 = pneg %p136
        $region26: #{gated_gcn_layer.1} parent=11 // pred_check_branch
          %339 = sbr.rel (%p337) target = $region28
        $region27: #{gated_gcn_layer.1} parent=11 // pred_region
          _
        $region28: #{gated_gcn_layer.1} parent=11 // pred_fallthru
          _
        // Predicated region
        $region29: #{gated_gcn_layer.1} parent=11 // pred_check
          %p340 = pneg %p157
        $region30: #{gated_gcn_layer.1} parent=11 // pred_check_branch
          %342 = sbr.rel (%p340) target = $region32
        $region31: #{gated_gcn_layer.1} parent=11 // pred_region
          _
        $region32: #{gated_gcn_layer.1} parent=11 // pred_fallthru
          _
        // Predicated region
        $region33: #{gated_gcn_layer.1} parent=11 // pred_check
          %p343 = pneg %p230
        $region34: #{gated_gcn_layer.1} parent=11 // pred_check_branch
          %345 = sbr.rel (%p343) target = $region36
        $region35: #{gated_gcn_layer.1} parent=11 // pred_region
          _
        $region36: #{gated_gcn_layer.1} parent=11 // pred_fallthru
          _
      $region12: #{gated_gcn_layer.1} parent=5 // pred_fallthru
        _
      %p346 = scmp.lt.s32.totalorder %s26, 4
      // Predicated region
      $region37: #{gated_gcn_layer.1} parent=5 // pred_check
        %p347 = pneg %p346
      $region38: #{gated_gcn_layer.1} parent=5 // pred_check_branch
        %349 = sbr.rel (%p347) target = $region40
      $region39: #{gated_gcn_layer.1} parent=5 // pred_region
        // Predicated region
        $region41: #{gated_gcn_layer.1} parent=39 // pred_check
          %p350 = pneg %p67
        $region42: #{gated_gcn_layer.1} parent=39 // pred_check_branch
          %352 = sbr.rel (%p350) target = $region44
        $region43: #{gated_gcn_layer.1} parent=39 // pred_region
          %s353 = sand.u32 %s57, 1
          %s354 = scalar_lea.sflag [#allocation10], %s353
          %s355 = sand.u32 %s57, 1
          %s356 = smul.addr %s355, 128
          %s357 = scalar_lea.vmem [#allocation9], %s356
          %s358 = smul.u32 16, %s26
          %s360 = ssub.s32 2048, 2048
          %361 = vsyncadd %s354, %s360
          %s362 = smul.addr %s358, 128
          %s363 = scalar_lea.hbm %s1, %s362
          %s364 = sshll.u32 %s357, 4
          %s365 = int_to_ptr.vmem [resolvable:$true] %s364
          %370 = dma.hbm_to_vmem [thread:$0]  %s363, 2048, %s365, %s354, 128, 128, 8
        $region44: #{gated_gcn_layer.1} parent=39 // pred_fallthru
          _
        // Predicated region
        $region45: #{gated_gcn_layer.1} parent=39 // pred_check
          %p371 = pneg %p177
        $region46: #{gated_gcn_layer.1} parent=39 // pred_check_branch
          %373 = sbr.rel (%p371) target = $region48
        $region47: #{gated_gcn_layer.1} parent=39 // pred_region
          %s374 = smul.u32 16, %s26
          %p375 = scmp.lt.s32.totalorder %s374, 63
          %s376 = scalar_select %p375, %s374, 63
          %s377 = smul.addr %s376, 4
          %s378 = scalar_lea.vmem %s6, %s377
          %s379 = smul.u32 16, %s26
        $region48: #{gated_gcn_layer.1} parent=39 // pred_fallthru
          _
        // Predicated region
        $region49: #{gated_gcn_layer.1} parent=39 // pred_check
          %p380 = pneg %p203
        $region50: #{gated_gcn_layer.1} parent=39 // pred_check_branch
          %382 = sbr.rel (%p380) target = $region52
        $region51: #{gated_gcn_layer.1} parent=39 // pred_region
          %s383 = smul.u32 16, %s26
          %p384 = scmp.lt.s32.totalorder %s383, 63
          %s385 = scalar_select %p384, %s383, 63
          %s386 = smul.addr %s385, 4
          %s387 = scalar_lea.vmem %s7, %s386
          %s388 = smul.u32 16, %s26
        $region52: #{gated_gcn_layer.1} parent=39 // pred_fallthru
          _
        // Predicated region
        $region53: #{gated_gcn_layer.1} parent=39 // pred_check
          %p389 = pneg %p250
        $region54: #{gated_gcn_layer.1} parent=39 // pred_check_branch
          %391 = sbr.rel (%p389) target = $region56
        $region55: #{gated_gcn_layer.1} parent=39 // pred_region
          %s392 = smul.u32 16, %s26
          %p393 = scmp.lt.s32.totalorder %s392, 63
          %s394 = scalar_select %p393, %s392, 63
          %s395 = smul.addr %s394, 8
          %s396 = scalar_lea.vmem %s9, %s395
          %s397 = smul.u32 16, %s26
        $region56: #{gated_gcn_layer.1} parent=39 // pred_fallthru
          _
      $region40: #{gated_gcn_layer.1} parent=5 // pred_fallthru
        _
      %p398 = scmp.le.s32.totalorder 1, %s26
      %p399 = scmp.lt.s32.totalorder %s26, 5
      %p400 = pnand %p398, %p399
      %p401 = pneg %p400
      // Predicated region
      $region57: #{gated_gcn_layer.1} parent=5 // pred_check
        _
      $region58: #{gated_gcn_layer.1} parent=5 // pred_check_branch
        %403 = sbr.rel (%p400) target = $region60
      $region59: #{gated_gcn_layer.1} parent=5 // pred_region
        %s404 = ssub.s32 %s26, 1
        // Predicated region
        $region61: #{gated_gcn_layer.1} parent=59 // pred_check
          %p405 = pneg %p47
        $region62: #{gated_gcn_layer.1} parent=59 // pred_check_branch
          %407 = sbr.rel (%p405) target = $region64
        $region63: #{gated_gcn_layer.1} parent=59 // pred_region
          %408 = dma.done [#allocation7], 2048
        $region64: #{gated_gcn_layer.1} parent=59 // pred_fallthru
          _
        %s409 = sand.u32 %s60, 1
        %s410 = scalar_lea.sflag [#allocation10], %s409
        %s411 = sand.u32 %s60, 1
        %s412 = smul.addr %s411, 128
        %s413 = scalar_lea.vmem [#allocation9], %s412
        // Predicated region
        $region65: #{gated_gcn_layer.1} parent=59 // pred_check
          %p414 = pneg %p73
        $region66: #{gated_gcn_layer.1} parent=59 // pred_check_branch
          %416 = sbr.rel (%p414) target = $region68
        $region67: #{gated_gcn_layer.1} parent=59 // pred_region
          %417 = dma.done %s410, 2048
        $region68: #{gated_gcn_layer.1} parent=59 // pred_fallthru
          _
        %p418 = pneg %p47
        %p419 = pneg %p44
        %s420 = sand.u32 %s60, 1
        %s421 = scalar_lea.sflag [#allocation10], %s420
        %s422 = sand.u32 %s60, 1
        %s423 = smul.addr %s422, 128
        %s424 = scalar_lea.vmem [#allocation9], %s423
        %p425 = pneg %p73
        %p426 = pneg %p70
        %p427 = pneg %p94
        %p428 = pneg %p91
        %p429 = pneg %p115
        %p430 = pneg %p112
        %p431 = pneg %p136
        %p432 = pneg %p133
        %p433 = pneg %p157
        %p434 = pneg %p154
        %s435 = smul.u32 16, %s31
        %p436 = scmp.lt.s32.totalorder %s435, 63
        %s437 = scalar_select %p436, %s435, 63
        %s438 = smul.addr %s437, 4
        %s439 = scalar_lea.vmem %s6, %s438
        %p440 = pneg %p183
        %p441 = pneg %p180
        %s442 = smul.u32 16, %s31
        %p443 = scmp.lt.s32.totalorder %s442, 63
        %s444 = scalar_select %p443, %s442, 63
        %s445 = smul.addr %s444, 4
        %s446 = scalar_lea.vmem %s7, %s445
        %p447 = pneg %p209
        %p448 = pneg %p206
        %p449 = pneg %p230
        %p450 = pneg %p227
        %s451 = smul.u32 16, %s31
        %p452 = scmp.lt.s32.totalorder %s451, 63
        %s453 = scalar_select %p452, %s451, 63
        %s454 = smul.addr %s453, 8
        %s455 = scalar_lea.vmem %s9, %s454
        %p456 = pneg %p256
        %p457 = pneg %p253
        %p458 = pneg %p277
        %p459 = pneg %p274
        %p460 = pneg %p303
        %p461 = pneg %p300
        %s462 = sand.u32 %s290, 1
        %s463 = scalar_lea.sflag [#allocation13], %s462
        %s464 = sand.u32 %s290, 1
        %s465 = smul.addr %s464, 128
        %s466 = scalar_lea.vmem [#allocation12], %s465
        %s467 = smul.u32 16, %s31
        %s468 = smul.u32 16, %s31
        %p469 = scmp.lt.s32.totalorder %s468, 63
        %s470 = scalar_select %p469, %s468, 63
        %s471 = smul.addr %s470, 4
        %s472 = scalar_lea.vmem %s6, %s471
        %s473 = smul.u32 16, %s31
        %s474 = smul.u32 16, %s31
        %p475 = scmp.lt.s32.totalorder %s474, 63
        %s476 = scalar_select %p475, %s474, 63
        %s477 = smul.addr %s476, 4
        %s478 = scalar_lea.vmem %s7, %s477
        %s479 = smul.u32 16, %s31
        %s480 = smul.u32 16, %s31
        %p481 = scmp.lt.s32.totalorder %s480, 63
        %s482 = scalar_select %p481, %s480, 63
        %s483 = smul.addr %s482, 8
        %s484 = scalar_lea.vmem %s9, %s483
        %s485 = smul.u32 16, %s31
        %s486 = smul.u32 16, %s31
        %p488 = scmp.eq.s32.totalorder %s31, 0
        // Predicated region
        $region69: #{gated_gcn_layer.1} parent=59 // pred_check
          %p489 = pneg %p488
        $region70: #{gated_gcn_layer.1} parent=59 // pred_check_branch
          %491 = sbr.rel (%p489) target = $region72
        $region71: #{gated_gcn_layer.1} parent=59 // pred_region
          %v492 = vld [vmem:[#allocation6] sm:$0xff]
          %v493 = vld [vmem:[#allocation6 + $0x8] sm:$0xff]
          %v494 = vld [vmem:[#allocation6 + $0x10] sm:$0xff]
          %v495 = vld [vmem:[#allocation6 + $0x18] sm:$0xff]
          %v496 = vld [vmem:[#allocation6 + $0x20] sm:$0xff]
          %v497 = vld [vmem:[#allocation6 + $0x28] sm:$0xff]
          %v498 = vld [vmem:[#allocation6 + $0x30] sm:$0xff]
          %v499 = vld [vmem:[#allocation6 + $0x38] sm:$0xff]
          %v500 = vld [vmem:[#allocation6 + $0x40] sm:$0xff]
          %v501 = vld [vmem:[#allocation6 + $0x48] sm:$0xff]
          %v502 = vld [vmem:[#allocation6 + $0x50] sm:$0xff]
          %v503 = vld [vmem:[#allocation6 + $0x58] sm:$0xff]
          %v504 = vld [vmem:[#allocation6 + $0x60] sm:$0xff]
          %v505 = vld [vmem:[#allocation6 + $0x68] sm:$0xff]
          %v506 = vld [vmem:[#allocation6 + $0x70] sm:$0xff]
          %v507 = vld [vmem:[#allocation6 + $0x78] sm:$0xff]
          %v508 = vpack.c.bf16 %v493, %v492
          %v509 = vpack.c.bf16 %v495, %v494
          %v510 = vpack.c.bf16 %v497, %v496
          %v511 = vpack.c.bf16 %v499, %v498
          %v512 = vpack.c.bf16 %v501, %v500
          %v513 = vpack.c.bf16 %v503, %v502
          %v514 = vpack.c.bf16 %v505, %v504
          %v515 = vpack.c.bf16 %v507, %v506
          %v516 = vld [vmem:[%s2] sm:$0xff]
          %v517 = vld [vmem:[%s2 + $0x8] sm:$0xff]
          %v518 = vld [vmem:[%s2 + $0x10] sm:$0xff]
          %v519 = vld [vmem:[%s2 + $0x18] sm:$0xff]
          %v520 = vld [vmem:[%s2 + $0x20] sm:$0xff]
          %v521 = vld [vmem:[%s2 + $0x28] sm:$0xff]
          %v522 = vld [vmem:[%s2 + $0x30] sm:$0xff]
          %v523 = vld [vmem:[%s2 + $0x38] sm:$0xff]
          %v524 = vld [vmem:[%s2 + $0x40] sm:$0xff]
          %v525 = vld [vmem:[%s2 + $0x48] sm:$0xff]
          %v526 = vld [vmem:[%s2 + $0x50] sm:$0xff]
          %v527 = vld [vmem:[%s2 + $0x58] sm:$0xff]
          %v528 = vld [vmem:[%s2 + $0x60] sm:$0xff]
          %v529 = vld [vmem:[%s2 + $0x68] sm:$0xff]
          %v530 = vld [vmem:[%s2 + $0x70] sm:$0xff]
          %v531 = vld [vmem:[%s2 + $0x78] sm:$0xff]
          %v532 = vld [vmem:[%s2 + $0x80] sm:$0xff]
          %v533 = vld [vmem:[%s2 + $0x88] sm:$0xff]
          %v534 = vld [vmem:[%s2 + $0x90] sm:$0xff]
          %v535 = vld [vmem:[%s2 + $0x98] sm:$0xff]
          %v536 = vld [vmem:[%s2 + $0xa0] sm:$0xff]
          %v537 = vld [vmem:[%s2 + $0xa8] sm:$0xff]
          %v538 = vld [vmem:[%s2 + $0xb0] sm:$0xff]
          %v539 = vld [vmem:[%s2 + $0xb8] sm:$0xff]
          %v540 = vld [vmem:[%s2 + $0xc0] sm:$0xff]
          %v541 = vld [vmem:[%s2 + $0xc8] sm:$0xff]
          %v542 = vld [vmem:[%s2 + $0xd0] sm:$0xff]
          %v543 = vld [vmem:[%s2 + $0xd8] sm:$0xff]
          %v544 = vld [vmem:[%s2 + $0xe0] sm:$0xff]
          %v545 = vld [vmem:[%s2 + $0xe8] sm:$0xff]
          %v546 = vld [vmem:[%s2 + $0xf0] sm:$0xff]
          %v547 = vld [vmem:[%s2 + $0xf8] sm:$0xff]
          %v548 = vld [vmem:[%s3] sm:$0xf]
          %v550 = vlaneseq
          %v551 = vshrl.u32 %v550, 7
          %v552 = vsub.s32 0, %v551
          %v553 = vrot.slane %v548, %v552
          %v554 = vlaneseq
          %v555 = vshrl.u32 %v554, 7
          %v556 = vsub.s32 1, %v555
          %v557 = vrot.slane %v548, %v556
          %v558 = vlaneseq
          %v559 = vshrl.u32 %v558, 7
          %v560 = vsub.s32 2, %v559
          %v561 = vrot.slane %v548, %v560
          %v562 = vlaneseq
          %v563 = vshrl.u32 %v562, 7
          %v564 = vsub.s32 3, %v563
          %v565 = vrot.slane %v548, %v564
          %v602 = vunpack.c.l.b16 %v516
          %v603 = vunpack.c.h.b16 %v516
          %v604 = vunpack.c.l.b16 %v517
          %v605 = vunpack.c.h.b16 %v517
          %v606 = vunpack.c.l.b16 %v518
          %v607 = vunpack.c.h.b16 %v518
          %v608 = vunpack.c.l.b16 %v519
          %v609 = vunpack.c.h.b16 %v519
          %v610 = vunpack.c.l.b16 %v520
          %v611 = vunpack.c.h.b16 %v520
          %v612 = vunpack.c.l.b16 %v521
          %v613 = vunpack.c.h.b16 %v521
          %v614 = vunpack.c.l.b16 %v522
          %v615 = vunpack.c.h.b16 %v522
          %v616 = vunpack.c.l.b16 %v523
          %v617 = vunpack.c.h.b16 %v523
          %v618 = vunpack.c.l.b16 %v524
          %v619 = vunpack.c.h.b16 %v524
          %v620 = vunpack.c.l.b16 %v525
          %v621 = vunpack.c.h.b16 %v525
          %v622 = vunpack.c.l.b16 %v526
          %v623 = vunpack.c.h.b16 %v526
          %v624 = vunpack.c.l.b16 %v527
          %v625 = vunpack.c.h.b16 %v527
          %v626 = vunpack.c.l.b16 %v528
          %v627 = vunpack.c.h.b16 %v528
          %v628 = vunpack.c.l.b16 %v529
          %v629 = vunpack.c.h.b16 %v529
          %v630 = vunpack.c.l.b16 %v530
          %v631 = vunpack.c.h.b16 %v530
          %v632 = vunpack.c.l.b16 %v531
          %v633 = vunpack.c.h.b16 %v531
          %v634 = vunpack.c.l.b16 %v532
          %v635 = vunpack.c.h.b16 %v532
          %v636 = vunpack.c.l.b16 %v533
          %v637 = vunpack.c.h.b16 %v533
          %v638 = vunpack.c.l.b16 %v534
          %v639 = vunpack.c.h.b16 %v534
          %v640 = vunpack.c.l.b16 %v535
          %v641 = vunpack.c.h.b16 %v535
          %v642 = vunpack.c.l.b16 %v536
          %v643 = vunpack.c.h.b16 %v536
          %v644 = vunpack.c.l.b16 %v537
          %v645 = vunpack.c.h.b16 %v537
          %v646 = vunpack.c.l.b16 %v538
          %v647 = vunpack.c.h.b16 %v538
          %v648 = vunpack.c.l.b16 %v539
          %v649 = vunpack.c.h.b16 %v539
          %v650 = vunpack.c.l.b16 %v540
          %v651 = vunpack.c.h.b16 %v540
          %v652 = vunpack.c.l.b16 %v541
          %v653 = vunpack.c.h.b16 %v541
          %v654 = vunpack.c.l.b16 %v542
          %v655 = vunpack.c.h.b16 %v542
          %v656 = vunpack.c.l.b16 %v543
          %v657 = vunpack.c.h.b16 %v543
          %v658 = vunpack.c.l.b16 %v544
          %v659 = vunpack.c.h.b16 %v544
          %v660 = vunpack.c.l.b16 %v545
          %v661 = vunpack.c.h.b16 %v545
          %v662 = vunpack.c.l.b16 %v546
          %v663 = vunpack.c.h.b16 %v546
          %v664 = vunpack.c.l.b16 %v547
          %v665 = vunpack.c.h.b16 %v547
          %v666 = vpack.c.b16 %v606, %v602
          %v667 = vpack.c.b16 %v607, %v603
          %v668 = vpack.c.b16 %v608, %v604
          %v669 = vpack.c.b16 %v609, %v605
          %v670 = vpack.c.b16 %v614, %v610
          %v671 = vpack.c.b16 %v615, %v611
          %v672 = vpack.c.b16 %v616, %v612
          %v673 = vpack.c.b16 %v617, %v613
          %v674 = vpack.c.b16 %v622, %v618
          %v675 = vpack.c.b16 %v623, %v619
          %v676 = vpack.c.b16 %v624, %v620
          %v677 = vpack.c.b16 %v625, %v621
          %v678 = vpack.c.b16 %v630, %v626
          %v679 = vpack.c.b16 %v631, %v627
          %v680 = vpack.c.b16 %v632, %v628
          %v681 = vpack.c.b16 %v633, %v629
          %v682 = vpack.c.b16 %v638, %v634
          %v683 = vpack.c.b16 %v639, %v635
          %v684 = vpack.c.b16 %v640, %v636
          %v685 = vpack.c.b16 %v641, %v637
          %v686 = vpack.c.b16 %v646, %v642
          %v687 = vpack.c.b16 %v647, %v643
          %v688 = vpack.c.b16 %v648, %v644
          %v689 = vpack.c.b16 %v649, %v645
          %v690 = vpack.c.b16 %v654, %v650
          %v691 = vpack.c.b16 %v655, %v651
          %v692 = vpack.c.b16 %v656, %v652
          %v693 = vpack.c.b16 %v657, %v653
          %v694 = vpack.c.b16 %v662, %v658
          %v695 = vpack.c.b16 %v663, %v659
          %v696 = vpack.c.b16 %v664, %v660
          %v697 = vpack.c.b16 %v665, %v661
          %730 = vmatprep.subr.bf16.mxu0 %v695
          %731 = vmatpush1.bf16.msra.mxu0 %v694
          %732 = vmatprep.subr.bf16.mxu0 %v691
          %733 = vmatpush1.bf16.msra.mxu0 %v690
          %734 = vmatprep.subr.bf16.mxu0 %v687
          %735 = vmatpush1.bf16.msra.mxu0 %v686
          %736 = vmatprep.subr.bf16.mxu0 %v683
          %737 = vmatpush1.bf16.msra.mxu0 %v682
          %738 = vmatprep.subr.bf16.mxu0 %v679
          %739 = vmatpush1.bf16.msra.mxu0 %v678
          %740 = vmatprep.subr.bf16.mxu0 %v675
          %741 = vmatpush1.bf16.msra.mxu0 %v674
          %742 = vmatprep.subr.bf16.mxu0 %v671
          %743 = vmatpush1.bf16.msra.mxu0 %v670
          %744 = vmatprep.subr.bf16.mxu0 %v667
          %745 = vmatpush1.bf16.msra.mxu0 %v666
          %746 = vmatprep.subr.bf16.mxu0 0
          %747 = vmatpush2.bf16.msra.mxu0 0
          %748 = vmatprep.subr.bf16.mxu0 0
          %749 = vmatpush2.bf16.msra.mxu0 0
          %750 = vmatprep.subr.bf16.mxu0 0
          %751 = vmatpush2.bf16.msra.mxu0 0
          %752 = vmatprep.subr.bf16.mxu0 0
          %753 = vmatpush2.bf16.msra.mxu0 0
          %754 = vmatprep.subr.bf16.mxu0 0
          %755 = vmatpush2.bf16.msra.mxu0 0
          %756 = vmatprep.subr.bf16.mxu0 0
          %757 = vmatpush2.bf16.msra.mxu0 0
          %758 = vmatprep.subr.bf16.mxu0 0
          %759 = vmatpush2.bf16.msra.mxu0 0
          %760 = vmatprep.subr.bf16.mxu0 0
          %761 = vmatpush2.bf16.msra.mxu0 0
          %762 = vmatprep.mubr.bf16.mxu0 0
          %763 = vmatmul.mubr.bf16.gmra.mxu0 %v508
          %v764 = vpop.f32.mrf.mxu0
          %v765 = vadd.f32 %v553, %v764
          %v766 = vpop.f32.mrf.mxu0
          %v767 = vadd.f32 %v557, %v766
          %v768 = vpop.f32.mrf.mxu0
          %v769 = vadd.f32 %v553, %v768
          %v770 = vpop.f32.mrf.mxu0
          %v771 = vadd.f32 %v557, %v770
          %772 = vmatprep.mubr.bf16.mxu0 0
          %773 = vmatmul.mubr.bf16.gmra.mxu0 %v509
          %v774 = vpop.f32.mrf.mxu0
          %v775 = vadd.f32 %v553, %v774
          %v776 = vpop.f32.mrf.mxu0
          %v777 = vadd.f32 %v557, %v776
          %v778 = vpop.f32.mrf.mxu0
          %v779 = vadd.f32 %v553, %v778
          %v780 = vpop.f32.mrf.mxu0
          %v781 = vadd.f32 %v557, %v780
          %782 = vmatprep.mubr.bf16.mxu0 0
          %783 = vmatmul.mubr.bf16.gmra.mxu0 %v510
          %v784 = vpop.f32.mrf.mxu0
          %v785 = vadd.f32 %v553, %v784
          %v786 = vpop.f32.mrf.mxu0
          %v787 = vadd.f32 %v557, %v786
          %v788 = vpop.f32.mrf.mxu0
          %v789 = vadd.f32 %v553, %v788
          %v790 = vpop.f32.mrf.mxu0
          %v791 = vadd.f32 %v557, %v790
          %792 = vmatprep.mubr.bf16.mxu0 0
          %793 = vmatmul.mubr.bf16.gmra.mxu0 %v511
          %v794 = vpop.f32.mrf.mxu0
          %v795 = vadd.f32 %v553, %v794
          %v796 = vpop.f32.mrf.mxu0
          %v797 = vadd.f32 %v557, %v796
          %v798 = vpop.f32.mrf.mxu0
          %v799 = vadd.f32 %v553, %v798
          %v800 = vpop.f32.mrf.mxu0
          %v801 = vadd.f32 %v557, %v800
          %802 = vmatprep.mubr.bf16.mxu0 0
          %803 = vmatmul.mubr.bf16.gmra.mxu0 %v512
          %v804 = vpop.f32.mrf.mxu0
          %v805 = vadd.f32 %v553, %v804
          %v806 = vpop.f32.mrf.mxu0
          %v807 = vadd.f32 %v557, %v806
          %v808 = vpop.f32.mrf.mxu0
          %v809 = vadd.f32 %v553, %v808
          %v810 = vpop.f32.mrf.mxu0
          %v811 = vadd.f32 %v557, %v810
          %812 = vmatprep.mubr.bf16.mxu0 0
          %813 = vmatmul.mubr.bf16.gmra.mxu0 %v513
          %v814 = vpop.f32.mrf.mxu0
          %v815 = vadd.f32 %v553, %v814
          %v816 = vpop.f32.mrf.mxu0
          %v817 = vadd.f32 %v557, %v816
          %v818 = vpop.f32.mrf.mxu0
          %v819 = vadd.f32 %v553, %v818
          %v820 = vpop.f32.mrf.mxu0
          %v821 = vadd.f32 %v557, %v820
          %822 = vmatprep.mubr.bf16.mxu0 0
          %823 = vmatmul.mubr.bf16.gmra.mxu0 %v514
          %v824 = vpop.f32.mrf.mxu0
          %v825 = vadd.f32 %v553, %v824
          %v826 = vpop.f32.mrf.mxu0
          %v827 = vadd.f32 %v557, %v826
          %v828 = vpop.f32.mrf.mxu0
          %v829 = vadd.f32 %v553, %v828
          %v830 = vpop.f32.mrf.mxu0
          %v831 = vadd.f32 %v557, %v830
          %832 = vmatprep.mubr.bf16.mxu0 0
          %833 = vmatmul.mubr.bf16.gmra.mxu0 %v515
          %v834 = vpop.f32.mrf.mxu0
          %v835 = vadd.f32 %v553, %v834
          %v836 = vpop.f32.mrf.mxu0
          %v837 = vadd.f32 %v557, %v836
          %v838 = vpop.f32.mrf.mxu0
          %v839 = vadd.f32 %v553, %v838
          %v840 = vpop.f32.mrf.mxu0
          %v841 = vadd.f32 %v557, %v840
          %842 = vdwg.mxu0
          %843 = vmatprep.subr.bf16.mxu0 %v697
          %844 = vmatpush1.bf16.msra.mxu0 %v696
          %845 = vmatprep.subr.bf16.mxu0 %v693
          %846 = vmatpush1.bf16.msra.mxu0 %v692
          %847 = vmatprep.subr.bf16.mxu0 %v689
          %848 = vmatpush1.bf16.msra.mxu0 %v688
          %849 = vmatprep.subr.bf16.mxu0 %v685
          %850 = vmatpush1.bf16.msra.mxu0 %v684
          %851 = vmatprep.subr.bf16.mxu0 %v681
          %852 = vmatpush1.bf16.msra.mxu0 %v680
          %853 = vmatprep.subr.bf16.mxu0 %v677
          %854 = vmatpush1.bf16.msra.mxu0 %v676
          %855 = vmatprep.subr.bf16.mxu0 %v673
          %856 = vmatpush1.bf16.msra.mxu0 %v672
          %857 = vmatprep.subr.bf16.mxu0 %v669
          %858 = vmatpush1.bf16.msra.mxu0 %v668
          %859 = vmatprep.subr.bf16.mxu0 0
          %860 = vmatpush2.bf16.msra.mxu0 0
          %861 = vmatprep.subr.bf16.mxu0 0
          %862 = vmatpush2.bf16.msra.mxu0 0
          %863 = vmatprep.subr.bf16.mxu0 0
          %864 = vmatpush2.bf16.msra.mxu0 0
          %865 = vmatprep.subr.bf16.mxu0 0
          %866 = vmatpush2.bf16.msra.mxu0 0
          %867 = vmatprep.subr.bf16.mxu0 0
          %868 = vmatpush2.bf16.msra.mxu0 0
          %869 = vmatprep.subr.bf16.mxu0 0
          %870 = vmatpush2.bf16.msra.mxu0 0
          %871 = vmatprep.subr.bf16.mxu0 0
          %872 = vmatpush2.bf16.msra.mxu0 0
          %873 = vmatprep.subr.bf16.mxu0 0
          %874 = vmatpush2.bf16.msra.mxu0 0
          %875 = vmatprep.mubr.bf16.mxu0 0
          %876 = vmatmul.mubr.bf16.gmra.mxu0 %v508
          %v877 = vpop.f32.mrf.mxu0
          %v878 = vadd.f32 %v561, %v877
          %v879 = vpop.f32.mrf.mxu0
          %v880 = vadd.f32 %v565, %v879
          %v881 = vpop.f32.mrf.mxu0
          %v882 = vadd.f32 %v561, %v881
          %v883 = vpop.f32.mrf.mxu0
          %v884 = vadd.f32 %v565, %v883
          %885 = vmatprep.mubr.bf16.mxu0 0
          %886 = vmatmul.mubr.bf16.gmra.mxu0 %v509
          %v887 = vpop.f32.mrf.mxu0
          %v888 = vadd.f32 %v561, %v887
          %v889 = vpop.f32.mrf.mxu0
          %v890 = vadd.f32 %v565, %v889
          %v891 = vpop.f32.mrf.mxu0
          %v892 = vadd.f32 %v561, %v891
          %v893 = vpop.f32.mrf.mxu0
          %v894 = vadd.f32 %v565, %v893
          %895 = vmatprep.mubr.bf16.mxu0 0
          %896 = vmatmul.mubr.bf16.gmra.mxu0 %v510
          %v897 = vpop.f32.mrf.mxu0
          %v898 = vadd.f32 %v561, %v897
          %v899 = vpop.f32.mrf.mxu0
          %v900 = vadd.f32 %v565, %v899
          %v901 = vpop.f32.mrf.mxu0
          %v902 = vadd.f32 %v561, %v901
          %v903 = vpop.f32.mrf.mxu0
          %v904 = vadd.f32 %v565, %v903
          %905 = vmatprep.mubr.bf16.mxu0 0
          %906 = vmatmul.mubr.bf16.gmra.mxu0 %v511
          %v907 = vpop.f32.mrf.mxu0
          %v908 = vadd.f32 %v561, %v907
          %v909 = vpop.f32.mrf.mxu0
          %v910 = vadd.f32 %v565, %v909
          %v911 = vpop.f32.mrf.mxu0
          %v912 = vadd.f32 %v561, %v911
          %v913 = vpop.f32.mrf.mxu0
          %v914 = vadd.f32 %v565, %v913
          %915 = vmatprep.mubr.bf16.mxu0 0
          %916 = vmatmul.mubr.bf16.gmra.mxu0 %v512
          %v917 = vpop.f32.mrf.mxu0
          %v918 = vadd.f32 %v561, %v917
          %v919 = vpop.f32.mrf.mxu0
          %v920 = vadd.f32 %v565, %v919
          %v921 = vpop.f32.mrf.mxu0
          %v922 = vadd.f32 %v561, %v921
          %v923 = vpop.f32.mrf.mxu0
          %v924 = vadd.f32 %v565, %v923
          %925 = vmatprep.mubr.bf16.mxu0 0
          %926 = vmatmul.mubr.bf16.gmra.mxu0 %v513
          %v927 = vpop.f32.mrf.mxu0
          %v928 = vadd.f32 %v561, %v927
          %v929 = vpop.f32.mrf.mxu0
          %v930 = vadd.f32 %v565, %v929
          %v931 = vpop.f32.mrf.mxu0
          %v932 = vadd.f32 %v561, %v931
          %v933 = vpop.f32.mrf.mxu0
          %v934 = vadd.f32 %v565, %v933
          %935 = vmatprep.mubr.bf16.mxu0 0
          %936 = vmatmul.mubr.bf16.gmra.mxu0 %v514
          %v937 = vpop.f32.mrf.mxu0
          %v938 = vadd.f32 %v561, %v937
          %v939 = vpop.f32.mrf.mxu0
          %v940 = vadd.f32 %v565, %v939
          %v941 = vpop.f32.mrf.mxu0
          %v942 = vadd.f32 %v561, %v941
          %v943 = vpop.f32.mrf.mxu0
          %v944 = vadd.f32 %v565, %v943
          %945 = vmatprep.mubr.bf16.mxu0 0
          %946 = vmatmul.mubr.bf16.gmra.mxu0 %v515
          %v947 = vpop.f32.mrf.mxu0
          %v948 = vadd.f32 %v561, %v947
          %v949 = vpop.f32.mrf.mxu0
          %v950 = vadd.f32 %v565, %v949
          %v951 = vpop.f32.mrf.mxu0
          %v952 = vadd.f32 %v561, %v951
          %v953 = vpop.f32.mrf.mxu0
          %v954 = vadd.f32 %v565, %v953
          %955 = vdwg.mxu0
          %956 = vst [vmem:[#allocation2] sm:$0xff] %v765
          %957 = vst [vmem:[#allocation2 + $0x8] sm:$0xff] %v769
          %958 = vst [vmem:[#allocation2 + $0x10] sm:$0xff] %v775
          %959 = vst [vmem:[#allocation2 + $0x18] sm:$0xff] %v779
          %960 = vst [vmem:[#allocation2 + $0x20] sm:$0xff] %v785
          %961 = vst [vmem:[#allocation2 + $0x28] sm:$0xff] %v789
          %962 = vst [vmem:[#allocation2 + $0x30] sm:$0xff] %v795
          %963 = vst [vmem:[#allocation2 + $0x38] sm:$0xff] %v799
          %964 = vst [vmem:[#allocation2 + $0x40] sm:$0xff] %v805
          %965 = vst [vmem:[#allocation2 + $0x48] sm:$0xff] %v809
          %966 = vst [vmem:[#allocation2 + $0x50] sm:$0xff] %v815
          %967 = vst [vmem:[#allocation2 + $0x58] sm:$0xff] %v819
          %968 = vst [vmem:[#allocation2 + $0x60] sm:$0xff] %v825
          %969 = vst [vmem:[#allocation2 + $0x68] sm:$0xff] %v829
          %970 = vst [vmem:[#allocation2 + $0x70] sm:$0xff] %v835
          %971 = vst [vmem:[#allocation2 + $0x78] sm:$0xff] %v839
          %v972 = vpack.c.bf16 %v771, %v767
          %v973 = vpack.c.bf16 %v882, %v878
          %v974 = vpack.c.bf16 %v884, %v880
          %v975 = vpack.c.bf16 %v781, %v777
          %v976 = vpack.c.bf16 %v892, %v888
          %v977 = vpack.c.bf16 %v894, %v890
          %v978 = vpack.c.bf16 %v791, %v787
          %v979 = vpack.c.bf16 %v902, %v898
          %v980 = vpack.c.bf16 %v904, %v900
          %v981 = vpack.c.bf16 %v801, %v797
          %v982 = vpack.c.bf16 %v912, %v908
          %v983 = vpack.c.bf16 %v914, %v910
          %v984 = vpack.c.bf16 %v811, %v807
          %v985 = vpack.c.bf16 %v922, %v918
          %v986 = vpack.c.bf16 %v924, %v920
          %v987 = vpack.c.bf16 %v821, %v817
          %v988 = vpack.c.bf16 %v932, %v928
          %v989 = vpack.c.bf16 %v934, %v930
          %v990 = vpack.c.bf16 %v831, %v827
          %v991 = vpack.c.bf16 %v942, %v938
          %v992 = vpack.c.bf16 %v944, %v940
          %v993 = vpack.c.bf16 %v841, %v837
          %v994 = vpack.c.bf16 %v952, %v948
          %v995 = vpack.c.bf16 %v954, %v950
          %v1020 = vunpack.c.l.b16 %v972
          %v1021 = vunpack.c.l.b16 %v973
          %v1022 = vunpack.c.l.b16 %v974
          %v1023 = vunpack.c.h.b16 %v972
          %v1024 = vunpack.c.h.b16 %v973
          %v1025 = vunpack.c.h.b16 %v974
          %v1026 = vunpack.c.l.b16 %v975
          %v1027 = vunpack.c.l.b16 %v976
          %v1028 = vunpack.c.l.b16 %v977
          %v1029 = vunpack.c.h.b16 %v975
          %v1030 = vunpack.c.h.b16 %v976
          %v1031 = vunpack.c.h.b16 %v977
          %v1032 = vunpack.c.l.b16 %v978
          %v1033 = vunpack.c.l.b16 %v979
          %v1034 = vunpack.c.l.b16 %v980
          %v1035 = vunpack.c.h.b16 %v978
          %v1036 = vunpack.c.h.b16 %v979
          %v1037 = vunpack.c.h.b16 %v980
          %v1038 = vunpack.c.l.b16 %v981
          %v1039 = vunpack.c.l.b16 %v982
          %v1040 = vunpack.c.l.b16 %v983
          %v1041 = vunpack.c.h.b16 %v981
          %v1042 = vunpack.c.h.b16 %v982
          %v1043 = vunpack.c.h.b16 %v983
          %v1044 = vunpack.c.l.b16 %v984
          %v1045 = vunpack.c.l.b16 %v985
          %v1046 = vunpack.c.l.b16 %v986
          %v1047 = vunpack.c.h.b16 %v984
          %v1048 = vunpack.c.h.b16 %v985
          %v1049 = vunpack.c.h.b16 %v986
          %v1050 = vunpack.c.l.b16 %v987
          %v1051 = vunpack.c.l.b16 %v988
          %v1052 = vunpack.c.l.b16 %v989
          %v1053 = vunpack.c.h.b16 %v987
          %v1054 = vunpack.c.h.b16 %v988
          %v1055 = vunpack.c.h.b16 %v989
          %v1056 = vunpack.c.l.b16 %v990
          %v1057 = vunpack.c.l.b16 %v991
          %v1058 = vunpack.c.l.b16 %v992
          %v1059 = vunpack.c.h.b16 %v990
          %v1060 = vunpack.c.h.b16 %v991
          %v1061 = vunpack.c.h.b16 %v992
          %v1062 = vunpack.c.l.b16 %v993
          %v1063 = vunpack.c.l.b16 %v994
          %v1064 = vunpack.c.l.b16 %v995
          %v1065 = vunpack.c.h.b16 %v993
          %v1066 = vunpack.c.h.b16 %v994
          %v1067 = vunpack.c.h.b16 %v995
          %v1068 = vpack.c.b16 %v1021, %v1020
          %v1069 = vpack.c.b16 %v1022, %v1022
          %v1070 = vpack.c.b16 %v1024, %v1023
          %v1071 = vpack.c.b16 %v1025, %v1025
          %v1072 = vpack.c.b16 %v1027, %v1026
          %v1073 = vpack.c.b16 %v1028, %v1028
          %v1074 = vpack.c.b16 %v1030, %v1029
          %v1075 = vpack.c.b16 %v1031, %v1031
          %v1076 = vpack.c.b16 %v1033, %v1032
          %v1077 = vpack.c.b16 %v1034, %v1034
          %v1078 = vpack.c.b16 %v1036, %v1035
          %v1079 = vpack.c.b16 %v1037, %v1037
          %v1080 = vpack.c.b16 %v1039, %v1038
          %v1081 = vpack.c.b16 %v1040, %v1040
          %v1082 = vpack.c.b16 %v1042, %v1041
          %v1083 = vpack.c.b16 %v1043, %v1043
          %v1084 = vpack.c.b16 %v1045, %v1044
          %v1085 = vpack.c.b16 %v1046, %v1046
          %v1086 = vpack.c.b16 %v1048, %v1047
          %v1087 = vpack.c.b16 %v1049, %v1049
          %v1088 = vpack.c.b16 %v1051, %v1050
          %v1089 = vpack.c.b16 %v1052, %v1052
          %v1090 = vpack.c.b16 %v1054, %v1053
          %v1091 = vpack.c.b16 %v1055, %v1055
          %v1092 = vpack.c.b16 %v1057, %v1056
          %v1093 = vpack.c.b16 %v1058, %v1058
          %v1094 = vpack.c.b16 %v1060, %v1059
          %v1095 = vpack.c.b16 %v1061, %v1061
          %v1096 = vpack.c.b16 %v1063, %v1062
          %v1097 = vpack.c.b16 %v1064, %v1064
          %v1098 = vpack.c.b16 %v1066, %v1065
          %v1099 = vpack.c.b16 %v1067, %v1067
          %1132 = vst [vmem:[#allocation3] sm:$0xff] %v1068
          %1133 = vst [vmem:[#allocation3 + $0x8] sm:$0xf] %v1069
          %1134 = vst [vmem:[#allocation3 + $0xc] sm:$0xff] %v1070
          %1135 = vst [vmem:[#allocation3 + $0x14] sm:$0xf] %v1071
          %1136 = vst [vmem:[#allocation3 + $0x18] sm:$0xff] %v1072
          %1137 = vst [vmem:[#allocation3 + $0x20] sm:$0xf] %v1073
          %1138 = vst [vmem:[#allocation3 + $0x24] sm:$0xff] %v1074
          %1139 = vst [vmem:[#allocation3 + $0x2c] sm:$0xf] %v1075
          %1140 = vst [vmem:[#allocation3 + $0x30] sm:$0xff] %v1076
          %1141 = vst [vmem:[#allocation3 + $0x38] sm:$0xf] %v1077
          %1142 = vst [vmem:[#allocation3 + $0x3c] sm:$0xff] %v1078
          %1143 = vst [vmem:[#allocation3 + $0x44] sm:$0xf] %v1079
          %1144 = vst [vmem:[#allocation3 + $0x48] sm:$0xff] %v1080
          %1145 = vst [vmem:[#allocation3 + $0x50] sm:$0xf] %v1081
          %1146 = vst [vmem:[#allocation3 + $0x54] sm:$0xff] %v1082
          %1147 = vst [vmem:[#allocation3 + $0x5c] sm:$0xf] %v1083
          %1148 = vst [vmem:[#allocation3 + $0x60] sm:$0xff] %v1084
          %1149 = vst [vmem:[#allocation3 + $0x68] sm:$0xf] %v1085
          %1150 = vst [vmem:[#allocation3 + $0x6c] sm:$0xff] %v1086
          %1151 = vst [vmem:[#allocation3 + $0x74] sm:$0xf] %v1087
          %1152 = vst [vmem:[#allocation3 + $0x78] sm:$0xff] %v1088
          %1153 = vst [vmem:[#allocation3 + $0x80] sm:$0xf] %v1089
          %1154 = vst [vmem:[#allocation3 + $0x84] sm:$0xff] %v1090
          %1155 = vst [vmem:[#allocation3 + $0x8c] sm:$0xf] %v1091
          %1156 = vst [vmem:[#allocation3 + $0x90] sm:$0xff] %v1092
          %1157 = vst [vmem:[#allocation3 + $0x98] sm:$0xf] %v1093
          %1158 = vst [vmem:[#allocation3 + $0x9c] sm:$0xff] %v1094
          %1159 = vst [vmem:[#allocation3 + $0xa4] sm:$0xf] %v1095
          %1160 = vst [vmem:[#allocation3 + $0xa8] sm:$0xff] %v1096
          %1161 = vst [vmem:[#allocation3 + $0xb0] sm:$0xf] %v1097
          %1162 = vst [vmem:[#allocation3 + $0xb4] sm:$0xff] %v1098
          %1163 = vst [vmem:[#allocation3 + $0xbc] sm:$0xf] %v1099
          %1164 = vst [vmem:[#allocation4] sm:$0xff] 0.0
          %1165 = vst [vmem:[#allocation4 + $0x8] sm:$0xff] 0.0
          %1166 = vst [vmem:[#allocation4 + $0x10] sm:$0xff] 0.0
          %1167 = vst [vmem:[#allocation4 + $0x18] sm:$0xff] 0.0
          %1168 = vst [vmem:[#allocation4 + $0x20] sm:$0xff] 0.0
          %1169 = vst [vmem:[#allocation4 + $0x28] sm:$0xff] 0.0
          %1170 = vst [vmem:[#allocation4 + $0x30] sm:$0xff] 0.0
          %1171 = vst [vmem:[#allocation4 + $0x38] sm:$0xff] 0.0
          %1172 = vst [vmem:[#allocation4 + $0x40] sm:$0xff] 0.0
          %1173 = vst [vmem:[#allocation4 + $0x48] sm:$0xff] 0.0
          %1174 = vst [vmem:[#allocation4 + $0x50] sm:$0xff] 0.0
          %1175 = vst [vmem:[#allocation4 + $0x58] sm:$0xff] 0.0
          %1176 = vst [vmem:[#allocation4 + $0x60] sm:$0xff] 0.0
          %1177 = vst [vmem:[#allocation4 + $0x68] sm:$0xff] 0.0
          %1178 = vst [vmem:[#allocation4 + $0x70] sm:$0xff] 0.0
          %1179 = vst [vmem:[#allocation4 + $0x78] sm:$0xff] 0.0
          %1180 = vst [vmem:[#allocation4 + $0x80] sm:$0xff] 0.0
          %1181 = vst [vmem:[#allocation4 + $0x88] sm:$0xff] 0.0
          %1182 = vst [vmem:[#allocation4 + $0x90] sm:$0xff] 0.0
          %1183 = vst [vmem:[#allocation4 + $0x98] sm:$0xff] 0.0
          %1184 = vst [vmem:[#allocation4 + $0xa0] sm:$0xff] 0.0
          %1185 = vst [vmem:[#allocation4 + $0xa8] sm:$0xff] 0.0
          %1186 = vst [vmem:[#allocation4 + $0xb0] sm:$0xff] 0.0
          %1187 = vst [vmem:[#allocation4 + $0xb8] sm:$0xff] 0.0
          %1188 = vst [vmem:[#allocation4 + $0xc0] sm:$0xff] 0.0
          %1189 = vst [vmem:[#allocation4 + $0xc8] sm:$0xff] 0.0
          %1190 = vst [vmem:[#allocation4 + $0xd0] sm:$0xff] 0.0
          %1191 = vst [vmem:[#allocation4 + $0xd8] sm:$0xff] 0.0
          %1192 = vst [vmem:[#allocation4 + $0xe0] sm:$0xff] 0.0
          %1193 = vst [vmem:[#allocation4 + $0xe8] sm:$0xff] 0.0
          %1194 = vst [vmem:[#allocation4 + $0xf0] sm:$0xff] 0.0
          %1195 = vst [vmem:[#allocation4 + $0xf8] sm:$0xff] 0.0
        $region72: #{gated_gcn_layer.1} parent=59 // pred_fallthru
          _
        %v1196 = vld [vmem:[#allocation3] sm:$0xff]
        %v1197 = vld [vmem:[#allocation3 + $0xc] sm:$0xff]
        %v1198 = vld [vmem:[#allocation3 + $0x18] sm:$0xff]
        %v1199 = vld [vmem:[#allocation3 + $0x24] sm:$0xff]
        %v1200 = vld [vmem:[#allocation3 + $0x30] sm:$0xff]
        %v1201 = vld [vmem:[#allocation3 + $0x3c] sm:$0xff]
        %v1202 = vld [vmem:[#allocation3 + $0x48] sm:$0xff]
        %v1203 = vld [vmem:[#allocation3 + $0x54] sm:$0xff]
        %v1204 = vld [vmem:[#allocation3 + $0x60] sm:$0xff]
        %v1205 = vld [vmem:[#allocation3 + $0x6c] sm:$0xff]
        %v1206 = vld [vmem:[#allocation3 + $0x78] sm:$0xff]
        %v1207 = vld [vmem:[#allocation3 + $0x84] sm:$0xff]
        %v1208 = vld [vmem:[#allocation3 + $0x90] sm:$0xff]
        %v1209 = vld [vmem:[#allocation3 + $0x9c] sm:$0xff]
        %v1210 = vld [vmem:[#allocation3 + $0xa8] sm:$0xff]
        %v1211 = vld [vmem:[#allocation3 + $0xb4] sm:$0xff]
        %v1212 = vld [vmem:[#allocation3 + $0x8] sm:$0xf]
        %v1213 = vld [vmem:[#allocation3 + $0x14] sm:$0xf]
        %v1214 = vld [vmem:[#allocation3 + $0x20] sm:$0xf]
        %v1215 = vld [vmem:[#allocation3 + $0x2c] sm:$0xf]
        %v1216 = vld [vmem:[#allocation3 + $0x38] sm:$0xf]
        %v1217 = vld [vmem:[#allocation3 + $0x44] sm:$0xf]
        %v1218 = vld [vmem:[#allocation3 + $0x50] sm:$0xf]
        %v1219 = vld [vmem:[#allocation3 + $0x5c] sm:$0xf]
        %v1220 = vld [vmem:[#allocation3 + $0x68] sm:$0xf]
        %v1221 = vld [vmem:[#allocation3 + $0x74] sm:$0xf]
        %v1222 = vld [vmem:[#allocation3 + $0x80] sm:$0xf]
        %v1223 = vld [vmem:[#allocation3 + $0x8c] sm:$0xf]
        %v1224 = vld [vmem:[#allocation3 + $0x98] sm:$0xf]
        %v1225 = vld [vmem:[#allocation3 + $0xa4] sm:$0xf]
        %v1226 = vld [vmem:[#allocation3 + $0xb0] sm:$0xf]
        %v1227 = vld [vmem:[#allocation3 + $0xbc] sm:$0xf]
        %v1228 = vld [vmem:[%s472] sm:$0xf]
        %v1229 = vld [vmem:[%s472 + $0x4] sm:$0xf]
        %v1230 = vld [vmem:[%s472 + $0x8] sm:$0xf]
        %v1231 = vld [vmem:[%s472 + $0xc] sm:$0xf]
        %v1232 = vld [vmem:[%s472 + $0x10] sm:$0xf]
        %v1233 = vld [vmem:[%s472 + $0x14] sm:$0xf]
        %v1234 = vld [vmem:[%s472 + $0x18] sm:$0xf]
        %v1235 = vld [vmem:[%s472 + $0x1c] sm:$0xf]
        %v1236 = vld [vmem:[%s472 + $0x20] sm:$0xf]
        %v1237 = vld [vmem:[%s472 + $0x24] sm:$0xf]
        %v1238 = vld [vmem:[%s472 + $0x28] sm:$0xf]
        %v1239 = vld [vmem:[%s472 + $0x2c] sm:$0xf]
        %v1240 = vld [vmem:[%s472 + $0x30] sm:$0xf]
        %v1241 = vld [vmem:[%s472 + $0x34] sm:$0xf]
        %v1242 = vld [vmem:[%s472 + $0x38] sm:$0xf]
        %v1243 = vld [vmem:[%s472 + $0x3c] sm:$0xf]
        %v1244 = vld [vmem:[%s478] sm:$0xf]
        %v1245 = vld [vmem:[%s478 + $0x4] sm:$0xf]
        %v1246 = vld [vmem:[%s478 + $0x8] sm:$0xf]
        %v1247 = vld [vmem:[%s478 + $0xc] sm:$0xf]
        %v1248 = vld [vmem:[%s478 + $0x10] sm:$0xf]
        %v1249 = vld [vmem:[%s478 + $0x14] sm:$0xf]
        %v1250 = vld [vmem:[%s478 + $0x18] sm:$0xf]
        %v1251 = vld [vmem:[%s478 + $0x1c] sm:$0xf]
        %v1252 = vld [vmem:[%s478 + $0x20] sm:$0xf]
        %v1253 = vld [vmem:[%s478 + $0x24] sm:$0xf]
        %v1254 = vld [vmem:[%s478 + $0x28] sm:$0xf]
        %v1255 = vld [vmem:[%s478 + $0x2c] sm:$0xf]
        %v1256 = vld [vmem:[%s478 + $0x30] sm:$0xf]
        %v1257 = vld [vmem:[%s478 + $0x34] sm:$0xf]
        %v1258 = vld [vmem:[%s478 + $0x38] sm:$0xf]
        %v1259 = vld [vmem:[%s478 + $0x3c] sm:$0xf]
        %v1260 = vld [vmem:[%s413] sm:$0xff]
        %v1261 = vld [vmem:[%s413 + $0x8] sm:$0xff]
        %v1262 = vld [vmem:[%s413 + $0x10] sm:$0xff]
        %v1263 = vld [vmem:[%s413 + $0x18] sm:$0xff]
        %v1264 = vld [vmem:[%s413 + $0x20] sm:$0xff]
        %v1265 = vld [vmem:[%s413 + $0x28] sm:$0xff]
        %v1266 = vld [vmem:[%s413 + $0x30] sm:$0xff]
        %v1267 = vld [vmem:[%s413 + $0x38] sm:$0xff]
        %v1268 = vld [vmem:[%s413 + $0x40] sm:$0xff]
        %v1269 = vld [vmem:[%s413 + $0x48] sm:$0xff]
        %v1270 = vld [vmem:[%s413 + $0x50] sm:$0xff]
        %v1271 = vld [vmem:[%s413 + $0x58] sm:$0xff]
        %v1272 = vld [vmem:[%s413 + $0x60] sm:$0xff]
        %v1273 = vld [vmem:[%s413 + $0x68] sm:$0xff]
        %v1274 = vld [vmem:[%s413 + $0x70] sm:$0xff]
        %v1275 = vld [vmem:[%s413 + $0x78] sm:$0xff]
        %v1276 = vpack.c.bf16 %v1261, %v1260
        %v1277 = vpack.c.bf16 %v1263, %v1262
        %v1278 = vpack.c.bf16 %v1265, %v1264
        %v1279 = vpack.c.bf16 %v1267, %v1266
        %v1280 = vpack.c.bf16 %v1269, %v1268
        %v1281 = vpack.c.bf16 %v1271, %v1270
        %v1282 = vpack.c.bf16 %v1273, %v1272
        %v1283 = vpack.c.bf16 %v1275, %v1274
        %v1284 = vld [vmem:[%s4] sm:$0xf]
        %v1285 = vld [vmem:[%s4 + $0x4] sm:$0xf]
        %v1286 = vld [vmem:[%s4 + $0x8] sm:$0xf]
        %v1287 = vld [vmem:[%s4 + $0xc] sm:$0xf]
        %v1288 = vld [vmem:[%s4 + $0x10] sm:$0xf]
        %v1289 = vld [vmem:[%s4 + $0x14] sm:$0xf]
        %v1290 = vld [vmem:[%s4 + $0x18] sm:$0xf]
        %v1291 = vld [vmem:[%s4 + $0x1c] sm:$0xf]
        %v1292 = vld [vmem:[%s4 + $0x20] sm:$0xf]
        %v1293 = vld [vmem:[%s4 + $0x24] sm:$0xf]
        %v1294 = vld [vmem:[%s4 + $0x28] sm:$0xf]
        %v1295 = vld [vmem:[%s4 + $0x2c] sm:$0xf]
        %v1296 = vld [vmem:[%s4 + $0x30] sm:$0xf]
        %v1297 = vld [vmem:[%s4 + $0x34] sm:$0xf]
        %v1298 = vld [vmem:[%s4 + $0x38] sm:$0xf]
        %v1299 = vld [vmem:[%s4 + $0x3c] sm:$0xf]
        %v1300 = vld [vmem:[%s5] sm:$0x1]
        %v1302 = vlaneseq
        %v1303 = vshrl.u32 %v1302, 7
        %v1304 = vsub.s32 0, %v1303
        %v1305 = vrot.slane %v1300, %v1304
        %v1323 = vunpack.c.l.b16 %v1284
        %v1324 = vunpack.c.l.b16 %v1285
        %v1325 = vunpack.c.l.b16 %v1286
        %v1326 = vunpack.c.l.b16 %v1287
        %v1327 = vunpack.c.l.b16 %v1288
        %v1328 = vunpack.c.l.b16 %v1289
        %v1329 = vunpack.c.l.b16 %v1290
        %v1330 = vunpack.c.l.b16 %v1291
        %v1331 = vunpack.c.l.b16 %v1292
        %v1332 = vunpack.c.l.b16 %v1293
        %v1333 = vunpack.c.l.b16 %v1294
        %v1334 = vunpack.c.l.b16 %v1295
        %v1335 = vunpack.c.l.b16 %v1296
        %v1336 = vunpack.c.l.b16 %v1297
        %v1337 = vunpack.c.l.b16 %v1298
        %v1338 = vunpack.c.l.b16 %v1299
        %v1339 = vpack.c.b16 %v1324, %v1323
        %v1340 = vpack.c.b16 %v1326, %v1325
        %v1341 = vpack.c.b16 %v1328, %v1327
        %v1342 = vpack.c.b16 %v1330, %v1329
        %v1343 = vpack.c.b16 %v1332, %v1331
        %v1344 = vpack.c.b16 %v1334, %v1333
        %v1345 = vpack.c.b16 %v1336, %v1335
        %v1346 = vpack.c.b16 %v1338, %v1337
        %1355 = vmatprep.subr.bf16.mxu0 0
        %1356 = vmatpush1.bf16.msra.mxu0 %v1346
        %1357 = vmatprep.subr.bf16.mxu0 0
        %1358 = vmatpush1.bf16.msra.mxu0 %v1345
        %1359 = vmatprep.subr.bf16.mxu0 0
        %1360 = vmatpush1.bf16.msra.mxu0 %v1344
        %1361 = vmatprep.subr.bf16.mxu0 0
        %1362 = vmatpush1.bf16.msra.mxu0 %v1343
        %1363 = vmatprep.subr.bf16.mxu0 0
        %1364 = vmatpush1.bf16.msra.mxu0 %v1342
        %1365 = vmatprep.subr.bf16.mxu0 0
        %1366 = vmatpush1.bf16.msra.mxu0 %v1341
        %1367 = vmatprep.subr.bf16.mxu0 0
        %1368 = vmatpush1.bf16.msra.mxu0 %v1340
        %1369 = vmatprep.subr.bf16.mxu0 0
        %1370 = vmatpush1.bf16.msra.mxu0 %v1339
        %1371 = vmatprep.subr.bf16.mxu0 0
        %1372 = vmatpush2.bf16.msra.mxu0 0
        %1373 = vmatprep.subr.bf16.mxu0 0
        %1374 = vmatpush2.bf16.msra.mxu0 0
        %1375 = vmatprep.subr.bf16.mxu0 0
        %1376 = vmatpush2.bf16.msra.mxu0 0
        %1377 = vmatprep.subr.bf16.mxu0 0
        %1378 = vmatpush2.bf16.msra.mxu0 0
        %1379 = vmatprep.subr.bf16.mxu0 0
        %1380 = vmatpush2.bf16.msra.mxu0 0
        %1381 = vmatprep.subr.bf16.mxu0 0
        %1382 = vmatpush2.bf16.msra.mxu0 0
        %1383 = vmatprep.subr.bf16.mxu0 0
        %1384 = vmatpush2.bf16.msra.mxu0 0
        %1385 = vmatprep.subr.bf16.mxu0 0
        %1386 = vmatpush2.bf16.msra.mxu0 0
        %1387 = vmatprep.mubr.bf16.mxu0 0
        %1388 = vmatmul.mubr.bf16.gmra.mxu0 %v1276
        %v1389 = vpop.f32.mrf.mxu0
        %v1390 = vadd.f32 %v1305, %v1389
        %v1391 = vpop.f32.mrf.mxu0
        %v1392 = vpop.f32.mrf.mxu0
        %v1393 = vadd.f32 %v1305, %v1392
        %v1394 = vpop.f32.mrf.mxu0
        %1395 = vmatprep.mubr.bf16.mxu0 0
        %1396 = vmatmul.mubr.bf16.gmra.mxu0 %v1277
        %v1397 = vpop.f32.mrf.mxu0
        %v1398 = vadd.f32 %v1305, %v1397
        %v1399 = vpop.f32.mrf.mxu0
        %v1400 = vpop.f32.mrf.mxu0
        %v1401 = vadd.f32 %v1305, %v1400
        %v1402 = vpop.f32.mrf.mxu0
        %1403 = vmatprep.mubr.bf16.mxu0 0
        %1404 = vmatmul.mubr.bf16.gmra.mxu0 %v1278
        %v1405 = vpop.f32.mrf.mxu0
        %v1406 = vadd.f32 %v1305, %v1405
        %v1407 = vpop.f32.mrf.mxu0
        %v1408 = vpop.f32.mrf.mxu0
        %v1409 = vadd.f32 %v1305, %v1408
        %v1410 = vpop.f32.mrf.mxu0
        %1411 = vmatprep.mubr.bf16.mxu0 0
        %1412 = vmatmul.mubr.bf16.gmra.mxu0 %v1279
        %v1413 = vpop.f32.mrf.mxu0
        %v1414 = vadd.f32 %v1305, %v1413
        %v1415 = vpop.f32.mrf.mxu0
        %v1416 = vpop.f32.mrf.mxu0
        %v1417 = vadd.f32 %v1305, %v1416
        %v1418 = vpop.f32.mrf.mxu0
        %1419 = vmatprep.mubr.bf16.mxu0 0
        %1420 = vmatmul.mubr.bf16.gmra.mxu0 %v1280
        %v1421 = vpop.f32.mrf.mxu0
        %v1422 = vadd.f32 %v1305, %v1421
        %v1423 = vpop.f32.mrf.mxu0
        %v1424 = vpop.f32.mrf.mxu0
        %v1425 = vadd.f32 %v1305, %v1424
        %v1426 = vpop.f32.mrf.mxu0
        %1427 = vmatprep.mubr.bf16.mxu0 0
        %1428 = vmatmul.mubr.bf16.gmra.mxu0 %v1281
        %v1429 = vpop.f32.mrf.mxu0
        %v1430 = vadd.f32 %v1305, %v1429
        %v1431 = vpop.f32.mrf.mxu0
        %v1432 = vpop.f32.mrf.mxu0
        %v1433 = vadd.f32 %v1305, %v1432
        %v1434 = vpop.f32.mrf.mxu0
        %1435 = vmatprep.mubr.bf16.mxu0 0
        %1436 = vmatmul.mubr.bf16.gmra.mxu0 %v1282
        %v1437 = vpop.f32.mrf.mxu0
        %v1438 = vadd.f32 %v1305, %v1437
        %v1439 = vpop.f32.mrf.mxu0
        %v1440 = vpop.f32.mrf.mxu0
        %v1441 = vadd.f32 %v1305, %v1440
        %v1442 = vpop.f32.mrf.mxu0
        %1443 = vmatprep.mubr.bf16.mxu0 0
        %1444 = vmatmul.mubr.bf16.gmra.mxu0 %v1283
        %v1445 = vpop.f32.mrf.mxu0
        %v1446 = vadd.f32 %v1305, %v1445
        %v1447 = vpop.f32.mrf.mxu0
        %v1448 = vpop.f32.mrf.mxu0
        %v1449 = vadd.f32 %v1305, %v1448
        %v1450 = vpop.f32.mrf.mxu0
        %1451 = vdwg.mxu0
        %v1468 = vunpack.c.l.b16 %v1228
        %v1469 = vunpack.c.l.b16 %v1229
        %v1470 = vunpack.c.l.b16 %v1230
        %v1471 = vunpack.c.l.b16 %v1231
        %v1472 = vunpack.c.l.b16 %v1232
        %v1473 = vunpack.c.l.b16 %v1233
        %v1474 = vunpack.c.l.b16 %v1234
        %v1475 = vunpack.c.l.b16 %v1235
        %v1476 = vunpack.c.l.b16 %v1236
        %v1477 = vunpack.c.l.b16 %v1237
        %v1478 = vunpack.c.l.b16 %v1238
        %v1479 = vunpack.c.l.b16 %v1239
        %v1480 = vunpack.c.l.b16 %v1240
        %v1481 = vunpack.c.l.b16 %v1241
        %v1482 = vunpack.c.l.b16 %v1242
        %v1483 = vunpack.c.l.b16 %v1243
        %v1484 = vpack.c.b16 %v1469, %v1468
        %v1485 = vpack.c.b16 %v1471, %v1470
        %v1486 = vpack.c.b16 %v1473, %v1472
        %v1487 = vpack.c.b16 %v1475, %v1474
        %v1488 = vpack.c.b16 %v1477, %v1476
        %v1489 = vpack.c.b16 %v1479, %v1478
        %v1490 = vpack.c.b16 %v1481, %v1480
        %v1491 = vpack.c.b16 %v1483, %v1482
        %v1516 = vunpack.c.l.b16 %v1196
        %v1517 = vunpack.c.h.b16 %v1196
        %v1518 = vunpack.c.l.b16 %v1197
        %v1519 = vunpack.c.h.b16 %v1197
        %v1520 = vunpack.c.l.b16 %v1198
        %v1521 = vunpack.c.h.b16 %v1198
        %v1522 = vunpack.c.l.b16 %v1199
        %v1523 = vunpack.c.h.b16 %v1199
        %v1524 = vunpack.c.l.b16 %v1200
        %v1525 = vunpack.c.h.b16 %v1200
        %v1526 = vunpack.c.l.b16 %v1201
        %v1527 = vunpack.c.h.b16 %v1201
        %v1528 = vunpack.c.l.b16 %v1202
        %v1529 = vunpack.c.h.b16 %v1202
        %v1530 = vunpack.c.l.b16 %v1203
        %v1531 = vunpack.c.h.b16 %v1203
        %v1532 = vunpack.c.l.b16 %v1204
        %v1533 = vunpack.c.h.b16 %v1204
        %v1534 = vunpack.c.l.b16 %v1205
        %v1535 = vunpack.c.h.b16 %v1205
        %v1536 = vunpack.c.l.b16 %v1206
        %v1537 = vunpack.c.h.b16 %v1206
        %v1538 = vunpack.c.l.b16 %v1207
        %v1539 = vunpack.c.h.b16 %v1207
        %v1540 = vunpack.c.l.b16 %v1208
        %v1541 = vunpack.c.h.b16 %v1208
        %v1542 = vunpack.c.l.b16 %v1209
        %v1543 = vunpack.c.h.b16 %v1209
        %v1544 = vunpack.c.l.b16 %v1210
        %v1545 = vunpack.c.h.b16 %v1210
        %v1546 = vunpack.c.l.b16 %v1211
        %v1547 = vunpack.c.h.b16 %v1211
        %v1548 = vpack.c.b16 %v1518, %v1516
        %v1549 = vpack.c.b16 %v1519, %v1517
        %v1550 = vpack.c.b16 %v1522, %v1520
        %v1551 = vpack.c.b16 %v1523, %v1521
        %v1552 = vpack.c.b16 %v1526, %v1524
        %v1553 = vpack.c.b16 %v1527, %v1525
        %v1554 = vpack.c.b16 %v1530, %v1528
        %v1555 = vpack.c.b16 %v1531, %v1529
        %v1556 = vpack.c.b16 %v1534, %v1532
        %v1557 = vpack.c.b16 %v1535, %v1533
        %v1558 = vpack.c.b16 %v1538, %v1536
        %v1559 = vpack.c.b16 %v1539, %v1537
        %v1560 = vpack.c.b16 %v1542, %v1540
        %v1561 = vpack.c.b16 %v1543, %v1541
        %v1562 = vpack.c.b16 %v1546, %v1544
        %v1563 = vpack.c.b16 %v1547, %v1545
        %1580 = vmatprep.subr.bf16.mxu0 %v1563
        %1581 = vmatpush1.bf16.msra.mxu0 %v1562
        %1582 = vmatprep.subr.bf16.mxu0 %v1561
        %1583 = vmatpush1.bf16.msra.mxu0 %v1560
        %1584 = vmatprep.subr.bf16.mxu0 %v1559
        %1585 = vmatpush1.bf16.msra.mxu0 %v1558
        %1586 = vmatprep.subr.bf16.mxu0 %v1557
        %1587 = vmatpush1.bf16.msra.mxu0 %v1556
        %1588 = vmatprep.subr.bf16.mxu0 %v1555
        %1589 = vmatpush1.bf16.msra.mxu0 %v1554
        %1590 = vmatprep.subr.bf16.mxu0 %v1553
        %1591 = vmatpush1.bf16.msra.mxu0 %v1552
        %1592 = vmatprep.subr.bf16.mxu0 %v1551
        %1593 = vmatpush1.bf16.msra.mxu0 %v1550
        %1594 = vmatprep.subr.bf16.mxu0 %v1549
        %1595 = vmatpush1.bf16.msra.mxu0 %v1548
        %1596 = vmatprep.subr.bf16.mxu0 0
        %1597 = vmatpush2.bf16.msra.mxu0 0
        %1598 = vmatprep.subr.bf16.mxu0 0
        %1599 = vmatpush2.bf16.msra.mxu0 0
        %1600 = vmatprep.subr.bf16.mxu0 0
        %1601 = vmatpush2.bf16.msra.mxu0 0
        %1602 = vmatprep.subr.bf16.mxu0 0
        %1603 = vmatpush2.bf16.msra.mxu0 0
        %1604 = vmatprep.subr.bf16.mxu0 0
        %1605 = vmatpush2.bf16.msra.mxu0 0
        %1606 = vmatprep.subr.bf16.mxu0 0
        %1607 = vmatpush2.bf16.msra.mxu0 0
        %1608 = vmatprep.subr.bf16.mxu0 0
        %1609 = vmatpush2.bf16.msra.mxu0 0
        %1610 = vmatprep.subr.bf16.mxu0 0
        %1611 = vmatpush2.bf16.msra.mxu0 0
        %1612 = vmatprep.mubr.bf16.mxu0 0
        %1613 = vmatmul.mubr.bf16.gmra.mxu0 %v1484
        %v1614 = vpop.f32.mrf.mxu0
        %v1615 = vadd.f32 0.0, %v1614
        %v1616 = vpop.f32.mrf.mxu0
        %v1617 = vadd.f32 0.0, %v1616
        %v1618 = vpop.f32.mrf.mxu0
        %v1619 = vadd.f32 0.0, %v1618
        %v1620 = vpop.f32.mrf.mxu0
        %v1621 = vadd.f32 0.0, %v1620
        %1622 = vmatprep.mubr.bf16.mxu0 0
        %1623 = vmatmul.mubr.bf16.gmra.mxu0 %v1485
        %v1624 = vpop.f32.mrf.mxu0
        %v1625 = vadd.f32 0.0, %v1624
        %v1626 = vpop.f32.mrf.mxu0
        %v1627 = vadd.f32 0.0, %v1626
        %v1628 = vpop.f32.mrf.mxu0
        %v1629 = vadd.f32 0.0, %v1628
        %v1630 = vpop.f32.mrf.mxu0
        %v1631 = vadd.f32 0.0, %v1630
        %1632 = vmatprep.mubr.bf16.mxu0 0
        %1633 = vmatmul.mubr.bf16.gmra.mxu0 %v1486
        %v1634 = vpop.f32.mrf.mxu0
        %v1635 = vadd.f32 0.0, %v1634
        %v1636 = vpop.f32.mrf.mxu0
        %v1637 = vadd.f32 0.0, %v1636
        %v1638 = vpop.f32.mrf.mxu0
        %v1639 = vadd.f32 0.0, %v1638
        %v1640 = vpop.f32.mrf.mxu0
        %v1641 = vadd.f32 0.0, %v1640
        %1642 = vmatprep.mubr.bf16.mxu0 0
        %1643 = vmatmul.mubr.bf16.gmra.mxu0 %v1487
        %v1644 = vpop.f32.mrf.mxu0
        %v1645 = vadd.f32 0.0, %v1644
        %v1646 = vpop.f32.mrf.mxu0
        %v1647 = vadd.f32 0.0, %v1646
        %v1648 = vpop.f32.mrf.mxu0
        %v1649 = vadd.f32 0.0, %v1648
        %v1650 = vpop.f32.mrf.mxu0
        %v1651 = vadd.f32 0.0, %v1650
        %1652 = vmatprep.mubr.bf16.mxu0 0
        %1653 = vmatmul.mubr.bf16.gmra.mxu0 %v1488
        %v1654 = vpop.f32.mrf.mxu0
        %v1655 = vadd.f32 0.0, %v1654
        %v1656 = vpop.f32.mrf.mxu0
        %v1657 = vadd.f32 0.0, %v1656
        %v1658 = vpop.f32.mrf.mxu0
        %v1659 = vadd.f32 0.0, %v1658
        %v1660 = vpop.f32.mrf.mxu0
        %v1661 = vadd.f32 0.0, %v1660
        %1662 = vmatprep.mubr.bf16.mxu0 0
        %1663 = vmatmul.mubr.bf16.gmra.mxu0 %v1489
        %v1664 = vpop.f32.mrf.mxu0
        %v1665 = vadd.f32 0.0, %v1664
        %v1666 = vpop.f32.mrf.mxu0
        %v1667 = vadd.f32 0.0, %v1666
        %v1668 = vpop.f32.mrf.mxu0
        %v1669 = vadd.f32 0.0, %v1668
        %v1670 = vpop.f32.mrf.mxu0
        %v1671 = vadd.f32 0.0, %v1670
        %1672 = vmatprep.mubr.bf16.mxu0 0
        %1673 = vmatmul.mubr.bf16.gmra.mxu0 %v1490
        %v1674 = vpop.f32.mrf.mxu0
        %v1675 = vadd.f32 0.0, %v1674
        %v1676 = vpop.f32.mrf.mxu0
        %v1677 = vadd.f32 0.0, %v1676
        %v1678 = vpop.f32.mrf.mxu0
        %v1679 = vadd.f32 0.0, %v1678
        %v1680 = vpop.f32.mrf.mxu0
        %v1681 = vadd.f32 0.0, %v1680
        %1682 = vmatprep.mubr.bf16.mxu0 0
        %1683 = vmatmul.mubr.bf16.gmra.mxu0 %v1491
        %v1684 = vpop.f32.mrf.mxu0
        %v1685 = vadd.f32 0.0, %v1684
        %v1686 = vpop.f32.mrf.mxu0
        %v1687 = vadd.f32 0.0, %v1686
        %v1688 = vpop.f32.mrf.mxu0
        %v1689 = vadd.f32 0.0, %v1688
        %v1690 = vpop.f32.mrf.mxu0
        %v1691 = vadd.f32 0.0, %v1690
        %1692 = vdwg.mxu0
        %v1709 = vunpack.c.l.b16 %v1244
        %v1710 = vunpack.c.l.b16 %v1245
        %v1711 = vunpack.c.l.b16 %v1246
        %v1712 = vunpack.c.l.b16 %v1247
        %v1713 = vunpack.c.l.b16 %v1248
        %v1714 = vunpack.c.l.b16 %v1249
        %v1715 = vunpack.c.l.b16 %v1250
        %v1716 = vunpack.c.l.b16 %v1251
        %v1717 = vunpack.c.l.b16 %v1252
        %v1718 = vunpack.c.l.b16 %v1253
        %v1719 = vunpack.c.l.b16 %v1254
        %v1720 = vunpack.c.l.b16 %v1255
        %v1721 = vunpack.c.l.b16 %v1256
        %v1722 = vunpack.c.l.b16 %v1257
        %v1723 = vunpack.c.l.b16 %v1258
        %v1724 = vunpack.c.l.b16 %v1259
        %v1725 = vpack.c.b16 %v1710, %v1709
        %v1726 = vpack.c.b16 %v1712, %v1711
        %v1727 = vpack.c.b16 %v1714, %v1713
        %v1728 = vpack.c.b16 %v1716, %v1715
        %v1729 = vpack.c.b16 %v1718, %v1717
        %v1730 = vpack.c.b16 %v1720, %v1719
        %v1731 = vpack.c.b16 %v1722, %v1721
        %v1732 = vpack.c.b16 %v1724, %v1723
        %v1757 = vunpack.c.l.b16 %v1212
        %v1758 = vunpack.c.l.b16 %v1213
        %v1759 = vunpack.c.l.b16 %v1214
        %v1760 = vunpack.c.l.b16 %v1215
        %v1761 = vunpack.c.l.b16 %v1216
        %v1762 = vunpack.c.l.b16 %v1217
        %v1763 = vunpack.c.l.b16 %v1218
        %v1764 = vunpack.c.l.b16 %v1219
        %v1765 = vunpack.c.l.b16 %v1220
        %v1766 = vunpack.c.l.b16 %v1221
        %v1767 = vunpack.c.l.b16 %v1222
        %v1768 = vunpack.c.l.b16 %v1223
        %v1769 = vunpack.c.l.b16 %v1224
        %v1770 = vunpack.c.l.b16 %v1225
        %v1771 = vunpack.c.l.b16 %v1226
        %v1772 = vunpack.c.l.b16 %v1227
        %v1773 = vpack.c.b16 %v1758, %v1757
        %v1774 = vpack.c.b16 %v1760, %v1759
        %v1775 = vpack.c.b16 %v1762, %v1761
        %v1776 = vpack.c.b16 %v1764, %v1763
        %v1777 = vpack.c.b16 %v1766, %v1765
        %v1778 = vpack.c.b16 %v1768, %v1767
        %v1779 = vpack.c.b16 %v1770, %v1769
        %v1780 = vpack.c.b16 %v1772, %v1771
        %1789 = vmatprep.subr.bf16.mxu0 0
        %1790 = vmatpush1.bf16.msra.mxu0 %v1780
        %1791 = vmatprep.subr.bf16.mxu0 0
        %1792 = vmatpush1.bf16.msra.mxu0 %v1779
        %1793 = vmatprep.subr.bf16.mxu0 0
        %1794 = vmatpush1.bf16.msra.mxu0 %v1778
        %1795 = vmatprep.subr.bf16.mxu0 0
        %1796 = vmatpush1.bf16.msra.mxu0 %v1777
        %1797 = vmatprep.subr.bf16.mxu0 0
        %1798 = vmatpush1.bf16.msra.mxu0 %v1776
        %1799 = vmatprep.subr.bf16.mxu0 0
        %1800 = vmatpush1.bf16.msra.mxu0 %v1775
        %1801 = vmatprep.subr.bf16.mxu0 0
        %1802 = vmatpush1.bf16.msra.mxu0 %v1774
        %1803 = vmatprep.subr.bf16.mxu0 0
        %1804 = vmatpush1.bf16.msra.mxu0 %v1773
        %1805 = vmatprep.subr.bf16.mxu0 0
        %1806 = vmatpush2.bf16.msra.mxu0 0
        %1807 = vmatprep.subr.bf16.mxu0 0
        %1808 = vmatpush2.bf16.msra.mxu0 0
        %1809 = vmatprep.subr.bf16.mxu0 0
        %1810 = vmatpush2.bf16.msra.mxu0 0
        %1811 = vmatprep.subr.bf16.mxu0 0
        %1812 = vmatpush2.bf16.msra.mxu0 0
        %1813 = vmatprep.subr.bf16.mxu0 0
        %1814 = vmatpush2.bf16.msra.mxu0 0
        %1815 = vmatprep.subr.bf16.mxu0 0
        %1816 = vmatpush2.bf16.msra.mxu0 0
        %1817 = vmatprep.subr.bf16.mxu0 0
        %1818 = vmatpush2.bf16.msra.mxu0 0
        %1819 = vmatprep.subr.bf16.mxu0 0
        %1820 = vmatpush2.bf16.msra.mxu0 0
        %1821 = vmatprep.mubr.bf16.mxu0 0
        %1822 = vmatmul.mubr.bf16.gmra.mxu0 %v1725
        %v1823 = vpop.f32.mrf.mxu0
        %v1824 = vadd.f32 0.0, %v1823
        %v1825 = vpop.f32.mrf.mxu0
        %v1826 = vpop.f32.mrf.mxu0
        %v1827 = vadd.f32 0.0, %v1826
        %v1828 = vpop.f32.mrf.mxu0
        %1829 = vmatprep.mubr.bf16.mxu0 0
        %1830 = vmatmul.mubr.bf16.gmra.mxu0 %v1726
        %v1831 = vpop.f32.mrf.mxu0
        %v1832 = vadd.f32 0.0, %v1831
        %v1833 = vpop.f32.mrf.mxu0
        %v1834 = vpop.f32.mrf.mxu0
        %v1835 = vadd.f32 0.0, %v1834
        %v1836 = vpop.f32.mrf.mxu0
        %1837 = vmatprep.mubr.bf16.mxu0 0
        %1838 = vmatmul.mubr.bf16.gmra.mxu0 %v1727
        %v1839 = vpop.f32.mrf.mxu0
        %v1840 = vadd.f32 0.0, %v1839
        %v1841 = vpop.f32.mrf.mxu0
        %v1842 = vpop.f32.mrf.mxu0
        %v1843 = vadd.f32 0.0, %v1842
        %v1844 = vpop.f32.mrf.mxu0
        %1845 = vmatprep.mubr.bf16.mxu0 0
        %1846 = vmatmul.mubr.bf16.gmra.mxu0 %v1728
        %v1847 = vpop.f32.mrf.mxu0
        %v1848 = vadd.f32 0.0, %v1847
        %v1849 = vpop.f32.mrf.mxu0
        %v1850 = vpop.f32.mrf.mxu0
        %v1851 = vadd.f32 0.0, %v1850
        %v1852 = vpop.f32.mrf.mxu0
        %1853 = vmatprep.mubr.bf16.mxu0 0
        %1854 = vmatmul.mubr.bf16.gmra.mxu0 %v1729
        %v1855 = vpop.f32.mrf.mxu0
        %v1856 = vadd.f32 0.0, %v1855
        %v1857 = vpop.f32.mrf.mxu0
        %v1858 = vpop.f32.mrf.mxu0
        %v1859 = vadd.f32 0.0, %v1858
        %v1860 = vpop.f32.mrf.mxu0
        %1861 = vmatprep.mubr.bf16.mxu0 0
        %1862 = vmatmul.mubr.bf16.gmra.mxu0 %v1730
        %v1863 = vpop.f32.mrf.mxu0
        %v1864 = vadd.f32 0.0, %v1863
        %v1865 = vpop.f32.mrf.mxu0
        %v1866 = vpop.f32.mrf.mxu0
        %v1867 = vadd.f32 0.0, %v1866
        %v1868 = vpop.f32.mrf.mxu0
        %1869 = vmatprep.mubr.bf16.mxu0 0
        %1870 = vmatmul.mubr.bf16.gmra.mxu0 %v1731
        %v1871 = vpop.f32.mrf.mxu0
        %v1872 = vadd.f32 0.0, %v1871
        %v1873 = vpop.f32.mrf.mxu0
        %v1874 = vpop.f32.mrf.mxu0
        %v1875 = vadd.f32 0.0, %v1874
        %v1876 = vpop.f32.mrf.mxu0
        %1877 = vmatprep.mubr.bf16.mxu0 0
        %1878 = vmatmul.mubr.bf16.gmra.mxu0 %v1732
        %v1879 = vpop.f32.mrf.mxu0
        %v1880 = vadd.f32 0.0, %v1879
        %v1881 = vpop.f32.mrf.mxu0
        %v1882 = vpop.f32.mrf.mxu0
        %v1883 = vadd.f32 0.0, %v1882
        %v1884 = vpop.f32.mrf.mxu0
        %1885 = vdwg.mxu0
        %v1886 = vadd.f32 %v1390, %v1615
        %v1887 = vadd.f32 %v1393, %v1619
        %v1888 = vadd.f32 %v1398, %v1625
        %v1889 = vadd.f32 %v1401, %v1629
        %v1890 = vadd.f32 %v1406, %v1635
        %v1891 = vadd.f32 %v1409, %v1639
        %v1892 = vadd.f32 %v1414, %v1645
        %v1893 = vadd.f32 %v1417, %v1649
        %v1894 = vadd.f32 %v1422, %v1655
        %v1895 = vadd.f32 %v1425, %v1659
        %v1896 = vadd.f32 %v1430, %v1665
        %v1897 = vadd.f32 %v1433, %v1669
        %v1898 = vadd.f32 %v1438, %v1675
        %v1899 = vadd.f32 %v1441, %v1679
        %v1900 = vadd.f32 %v1446, %v1685
        %v1901 = vadd.f32 %v1449, %v1689
        %v1902 = vadd.f32 %v1886, %v1824
        %v1903 = vadd.f32 %v1887, %v1827
        %v1904 = vadd.f32 %v1888, %v1832
        %v1905 = vadd.f32 %v1889, %v1835
        %v1906 = vadd.f32 %v1890, %v1840
        %v1907 = vadd.f32 %v1891, %v1843
        %v1908 = vadd.f32 %v1892, %v1848
        %v1909 = vadd.f32 %v1893, %v1851
        %v1910 = vadd.f32 %v1894, %v1856
        %v1911 = vadd.f32 %v1895, %v1859
        %v1912 = vadd.f32 %v1896, %v1864
        %v1913 = vadd.f32 %v1897, %v1867
        %v1914 = vadd.f32 %v1898, %v1872
        %v1915 = vadd.f32 %v1899, %v1875
        %v1916 = vadd.f32 %v1900, %v1880
        %v1917 = vadd.f32 %v1901, %v1883
        %v1918 = vxor.u32 %v1902, 2147483648
        %v1919 = vxor.u32 %v1903, 2147483648
        %v1920 = vxor.u32 %v1904, 2147483648
        %v1921 = vxor.u32 %v1905, 2147483648
        %v1922 = vxor.u32 %v1906, 2147483648
        %v1923 = vxor.u32 %v1907, 2147483648
        %v1924 = vxor.u32 %v1908, 2147483648
        %v1925 = vxor.u32 %v1909, 2147483648
        %v1926 = vxor.u32 %v1910, 2147483648
        %v1927 = vxor.u32 %v1911, 2147483648
        %v1928 = vxor.u32 %v1912, 2147483648
        %v1929 = vxor.u32 %v1913, 2147483648
        %v1930 = vxor.u32 %v1914, 2147483648
        %v1931 = vxor.u32 %v1915, 2147483648
        %v1932 = vxor.u32 %v1916, 2147483648
        %v1933 = vxor.u32 %v1917, 2147483648
        %v1934 = vmul.f32 %v1918, 1.442695
        %v1935 = vpow.pop %v1934
        %v1936 = vmul.f32 %v1919, 1.442695
        %v1937 = vpow.pop %v1936
        %v1938 = vmul.f32 %v1920, 1.442695
        %v1939 = vpow.pop %v1938
        %v1940 = vmul.f32 %v1921, 1.442695
        %v1941 = vpow.pop %v1940
        %v1942 = vmul.f32 %v1922, 1.442695
        %v1943 = vpow.pop %v1942
        %v1944 = vmul.f32 %v1923, 1.442695
        %v1945 = vpow.pop %v1944
        %v1946 = vmul.f32 %v1924, 1.442695
        %v1947 = vpow.pop %v1946
        %v1948 = vmul.f32 %v1925, 1.442695
        %v1949 = vpow.pop %v1948
        %v1950 = vmul.f32 %v1926, 1.442695
        %v1951 = vpow.pop %v1950
        %v1952 = vmul.f32 %v1927, 1.442695
        %v1953 = vpow.pop %v1952
        %v1954 = vmul.f32 %v1928, 1.442695
        %v1955 = vpow.pop %v1954
        %v1956 = vmul.f32 %v1929, 1.442695
        %v1957 = vpow.pop %v1956
        %v1958 = vmul.f32 %v1930, 1.442695
        %v1959 = vpow.pop %v1958
        %v1960 = vmul.f32 %v1931, 1.442695
        %v1961 = vpow.pop %v1960
        %v1962 = vmul.f32 %v1932, 1.442695
        %v1963 = vpow.pop %v1962
        %v1964 = vmul.f32 %v1933, 1.442695
        %v1965 = vpow.pop %v1964
        %v1966 = vadd.f32 %v1935, 1.0
        %v1967 = vadd.f32 %v1937, 1.0
        %v1968 = vadd.f32 %v1939, 1.0
        %v1969 = vadd.f32 %v1941, 1.0
        %v1970 = vadd.f32 %v1943, 1.0
        %v1971 = vadd.f32 %v1945, 1.0
        %v1972 = vadd.f32 %v1947, 1.0
        %v1973 = vadd.f32 %v1949, 1.0
        %v1974 = vadd.f32 %v1951, 1.0
        %v1975 = vadd.f32 %v1953, 1.0
        %v1976 = vadd.f32 %v1955, 1.0
        %v1977 = vadd.f32 %v1957, 1.0
        %v1978 = vadd.f32 %v1959, 1.0
        %v1979 = vadd.f32 %v1961, 1.0
        %v1980 = vadd.f32 %v1963, 1.0
        %v1981 = vadd.f32 %v1965, 1.0
        %v1982 = vrcp.pop %v1966
        %v1983 = vmul.f32 1.0, %v1982
        %v1984 = vrcp.pop %v1967
        %v1985 = vmul.f32 1.0, %v1984
        %v1986 = vrcp.pop %v1968
        %v1987 = vmul.f32 1.0, %v1986
        %v1988 = vrcp.pop %v1969
        %v1989 = vmul.f32 1.0, %v1988
        %v1990 = vrcp.pop %v1970
        %v1991 = vmul.f32 1.0, %v1990
        %v1992 = vrcp.pop %v1971
        %v1993 = vmul.f32 1.0, %v1992
        %v1994 = vrcp.pop %v1972
        %v1995 = vmul.f32 1.0, %v1994
        %v1996 = vrcp.pop %v1973
        %v1997 = vmul.f32 1.0, %v1996
        %v1998 = vrcp.pop %v1974
        %v1999 = vmul.f32 1.0, %v1998
        %v2000 = vrcp.pop %v1975
        %v2001 = vmul.f32 1.0, %v2000
        %v2002 = vrcp.pop %v1976
        %v2003 = vmul.f32 1.0, %v2002
        %v2004 = vrcp.pop %v1977
        %v2005 = vmul.f32 1.0, %v2004
        %v2006 = vrcp.pop %v1978
        %v2007 = vmul.f32 1.0, %v2006
        %v2008 = vrcp.pop %v1979
        %v2009 = vmul.f32 1.0, %v2008
        %v2010 = vrcp.pop %v1980
        %v2011 = vmul.f32 1.0, %v2010
        %v2012 = vrcp.pop %v1981
        %v2013 = vmul.f32 1.0, %v2012
        %v2014 = vmul.f32 %v1983, %v1617
        %v2015 = vmul.f32 %v1985, %v1621
        %v2016 = vmul.f32 %v1987, %v1627
        %v2017 = vmul.f32 %v1989, %v1631
        %v2018 = vmul.f32 %v1991, %v1637
        %v2019 = vmul.f32 %v1993, %v1641
        %v2020 = vmul.f32 %v1995, %v1647
        %v2021 = vmul.f32 %v1997, %v1651
        %v2022 = vmul.f32 %v1999, %v1657
        %v2023 = vmul.f32 %v2001, %v1661
        %v2024 = vmul.f32 %v2003, %v1667
        %v2025 = vmul.f32 %v2005, %v1671
        %v2026 = vmul.f32 %v2007, %v1677
        %v2027 = vmul.f32 %v2009, %v1681
        %v2028 = vmul.f32 %v2011, %v1687
        %v2029 = vmul.f32 %v2013, %v1691
        %v2030 = vpack.c.bf16 %v2015, %v2014
        %v2031 = vpack.c.bf16 %v2017, %v2016
        %v2032 = vpack.c.bf16 %v2019, %v2018
        %v2033 = vpack.c.bf16 %v2021, %v2020
        %v2034 = vpack.c.bf16 %v2023, %v2022
        %v2035 = vpack.c.bf16 %v2025, %v2024
        %v2036 = vpack.c.bf16 %v2027, %v2026
        %v2037 = vpack.c.bf16 %v2029, %v2028
        %v2046 = vunpack.c.l.b16 %v2030
        %v2047 = vunpack.c.h.b16 %v2030
        %v2048 = vunpack.c.l.b16 %v2031
        %v2049 = vunpack.c.h.b16 %v2031
        %v2050 = vunpack.c.l.b16 %v2032
        %v2051 = vunpack.c.h.b16 %v2032
        %v2052 = vunpack.c.l.b16 %v2033
        %v2053 = vunpack.c.h.b16 %v2033
        %v2054 = vunpack.c.l.b16 %v2034
        %v2055 = vunpack.c.h.b16 %v2034
        %v2056 = vunpack.c.l.b16 %v2035
        %v2057 = vunpack.c.h.b16 %v2035
        %v2058 = vunpack.c.l.b16 %v2036
        %v2059 = vunpack.c.h.b16 %v2036
        %v2060 = vunpack.c.l.b16 %v2037
        %v2061 = vunpack.c.h.b16 %v2037
        %v2062 = vpack.c.b16 %v2046, %v2046
        %v2063 = vpack.c.b16 %v2047, %v2047
        %v2064 = vpack.c.b16 %v2048, %v2048
        %v2065 = vpack.c.b16 %v2049, %v2049
        %v2066 = vpack.c.b16 %v2050, %v2050
        %v2067 = vpack.c.b16 %v2051, %v2051
        %v2068 = vpack.c.b16 %v2052, %v2052
        %v2069 = vpack.c.b16 %v2053, %v2053
        %v2070 = vpack.c.b16 %v2054, %v2054
        %v2071 = vpack.c.b16 %v2055, %v2055
        %v2072 = vpack.c.b16 %v2056, %v2056
        %v2073 = vpack.c.b16 %v2057, %v2057
        %v2074 = vpack.c.b16 %v2058, %v2058
        %v2075 = vpack.c.b16 %v2059, %v2059
        %v2076 = vpack.c.b16 %v2060, %v2060
        %v2077 = vpack.c.b16 %v2061, %v2061
        %2094 = vst [vmem:[#allocation5] sm:$0xf] %v2062
        %2095 = vst [vmem:[#allocation5 + $0x8] sm:$0xf] %v2063
        %2096 = vst [vmem:[#allocation5 + $0x10] sm:$0xf] %v2064
        %2097 = vst [vmem:[#allocation5 + $0x18] sm:$0xf] %v2065
        %2098 = vst [vmem:[#allocation5 + $0x20] sm:$0xf] %v2066
        %2099 = vst [vmem:[#allocation5 + $0x28] sm:$0xf] %v2067
        %2100 = vst [vmem:[#allocation5 + $0x30] sm:$0xf] %v2068
        %2101 = vst [vmem:[#allocation5 + $0x38] sm:$0xf] %v2069
        %2102 = vst [vmem:[#allocation5 + $0x40] sm:$0xf] %v2070
        %2103 = vst [vmem:[#allocation5 + $0x48] sm:$0xf] %v2071
        %2104 = vst [vmem:[#allocation5 + $0x50] sm:$0xf] %v2072
        %2105 = vst [vmem:[#allocation5 + $0x58] sm:$0xf] %v2073
        %2106 = vst [vmem:[#allocation5 + $0x60] sm:$0xf] %v2074
        %2107 = vst [vmem:[#allocation5 + $0x68] sm:$0xf] %v2075
        %2108 = vst [vmem:[#allocation5 + $0x70] sm:$0xf] %v2076
        %2109 = vst [vmem:[#allocation5 + $0x78] sm:$0xf] %v2077
        %v2110 = vpack.c.bf16 %v1985, %v1983
        %v2111 = vpack.c.bf16 %v1989, %v1987
        %v2112 = vpack.c.bf16 %v1993, %v1991
        %v2113 = vpack.c.bf16 %v1997, %v1995
        %v2114 = vpack.c.bf16 %v2001, %v1999
        %v2115 = vpack.c.bf16 %v2005, %v2003
        %v2116 = vpack.c.bf16 %v2009, %v2007
        %v2117 = vpack.c.bf16 %v2013, %v2011
        %v2126 = vunpack.c.l.b16 %v2110
        %v2127 = vunpack.c.h.b16 %v2110
        %v2128 = vunpack.c.l.b16 %v2111
        %v2129 = vunpack.c.h.b16 %v2111
        %v2130 = vunpack.c.l.b16 %v2112
        %v2131 = vunpack.c.h.b16 %v2112
        %v2132 = vunpack.c.l.b16 %v2113
        %v2133 = vunpack.c.h.b16 %v2113
        %v2134 = vunpack.c.l.b16 %v2114
        %v2135 = vunpack.c.h.b16 %v2114
        %v2136 = vunpack.c.l.b16 %v2115
        %v2137 = vunpack.c.h.b16 %v2115
        %v2138 = vunpack.c.l.b16 %v2116
        %v2139 = vunpack.c.h.b16 %v2116
        %v2140 = vunpack.c.l.b16 %v2117
        %v2141 = vunpack.c.h.b16 %v2117
        %v2142 = vpack.c.b16 %v2126, %v2126
        %v2143 = vpack.c.b16 %v2127, %v2127
        %v2144 = vpack.c.b16 %v2128, %v2128
        %v2145 = vpack.c.b16 %v2129, %v2129
        %v2146 = vpack.c.b16 %v2130, %v2130
        %v2147 = vpack.c.b16 %v2131, %v2131
        %v2148 = vpack.c.b16 %v2132, %v2132
        %v2149 = vpack.c.b16 %v2133, %v2133
        %v2150 = vpack.c.b16 %v2134, %v2134
        %v2151 = vpack.c.b16 %v2135, %v2135
        %v2152 = vpack.c.b16 %v2136, %v2136
        %v2153 = vpack.c.b16 %v2137, %v2137
        %v2154 = vpack.c.b16 %v2138, %v2138
        %v2155 = vpack.c.b16 %v2139, %v2139
        %v2156 = vpack.c.b16 %v2140, %v2140
        %v2157 = vpack.c.b16 %v2141, %v2141
        %2174 = vst [vmem:[#allocation5 + $0x4] sm:$0xf] %v2142
        %2175 = vst [vmem:[#allocation5 + $0xc] sm:$0xf] %v2143
        %2176 = vst [vmem:[#allocation5 + $0x14] sm:$0xf] %v2144
        %2177 = vst [vmem:[#allocation5 + $0x1c] sm:$0xf] %v2145
        %2178 = vst [vmem:[#allocation5 + $0x24] sm:$0xf] %v2146
        %2179 = vst [vmem:[#allocation5 + $0x2c] sm:$0xf] %v2147
        %2180 = vst [vmem:[#allocation5 + $0x34] sm:$0xf] %v2148
        %2181 = vst [vmem:[#allocation5 + $0x3c] sm:$0xf] %v2149
        %2182 = vst [vmem:[#allocation5 + $0x44] sm:$0xf] %v2150
        %2183 = vst [vmem:[#allocation5 + $0x4c] sm:$0xf] %v2151
        %2184 = vst [vmem:[#allocation5 + $0x54] sm:$0xf] %v2152
        %2185 = vst [vmem:[#allocation5 + $0x5c] sm:$0xf] %v2153
        %2186 = vst [vmem:[#allocation5 + $0x64] sm:$0xf] %v2154
        %2187 = vst [vmem:[#allocation5 + $0x6c] sm:$0xf] %v2155
        %2188 = vst [vmem:[#allocation5 + $0x74] sm:$0xf] %v2156
        %2189 = vst [vmem:[#allocation5 + $0x7c] sm:$0xf] %v2157
        %v2190 = vld [vmem:[#allocation4] sm:$0xff]
        %v2191 = vld [vmem:[#allocation4 + $0x8] sm:$0xff]
        %v2192 = vld [vmem:[#allocation4 + $0x10] sm:$0xff]
        %v2193 = vld [vmem:[#allocation4 + $0x18] sm:$0xff]
        %v2194 = vld [vmem:[#allocation4 + $0x20] sm:$0xff]
        %v2195 = vld [vmem:[#allocation4 + $0x28] sm:$0xff]
        %v2196 = vld [vmem:[#allocation4 + $0x30] sm:$0xff]
        %v2197 = vld [vmem:[#allocation4 + $0x38] sm:$0xff]
        %v2198 = vld [vmem:[#allocation4 + $0x40] sm:$0xff]
        %v2199 = vld [vmem:[#allocation4 + $0x48] sm:$0xff]
        %v2200 = vld [vmem:[#allocation4 + $0x50] sm:$0xff]
        %v2201 = vld [vmem:[#allocation4 + $0x58] sm:$0xff]
        %v2202 = vld [vmem:[#allocation4 + $0x60] sm:$0xff]
        %v2203 = vld [vmem:[#allocation4 + $0x68] sm:$0xff]
        %v2204 = vld [vmem:[#allocation4 + $0x70] sm:$0xff]
        %v2205 = vld [vmem:[#allocation4 + $0x78] sm:$0xff]
        %v2206 = vld [vmem:[#allocation4 + $0x80] sm:$0xff]
        %v2207 = vld [vmem:[#allocation4 + $0x88] sm:$0xff]
        %v2208 = vld [vmem:[#allocation4 + $0x90] sm:$0xff]
        %v2209 = vld [vmem:[#allocation4 + $0x98] sm:$0xff]
        %v2210 = vld [vmem:[#allocation4 + $0xa0] sm:$0xff]
        %v2211 = vld [vmem:[#allocation4 + $0xa8] sm:$0xff]
        %v2212 = vld [vmem:[#allocation4 + $0xb0] sm:$0xff]
        %v2213 = vld [vmem:[#allocation4 + $0xb8] sm:$0xff]
        %v2214 = vld [vmem:[#allocation4 + $0xc0] sm:$0xff]
        %v2215 = vld [vmem:[#allocation4 + $0xc8] sm:$0xff]
        %v2216 = vld [vmem:[#allocation4 + $0xd0] sm:$0xff]
        %v2217 = vld [vmem:[#allocation4 + $0xd8] sm:$0xff]
        %v2218 = vld [vmem:[#allocation4 + $0xe0] sm:$0xff]
        %v2219 = vld [vmem:[#allocation4 + $0xe8] sm:$0xff]
        %v2220 = vld [vmem:[#allocation4 + $0xf0] sm:$0xff]
        %v2221 = vld [vmem:[#allocation4 + $0xf8] sm:$0xff]
        %v2222 = vld [vmem:[#allocation5] sm:$0xff]
        %v2223 = vld [vmem:[#allocation5 + $0x8] sm:$0xff]
        %v2224 = vld [vmem:[#allocation5 + $0x10] sm:$0xff]
        %v2225 = vld [vmem:[#allocation5 + $0x18] sm:$0xff]
        %v2226 = vld [vmem:[#allocation5 + $0x20] sm:$0xff]
        %v2227 = vld [vmem:[#allocation5 + $0x28] sm:$0xff]
        %v2228 = vld [vmem:[#allocation5 + $0x30] sm:$0xff]
        %v2229 = vld [vmem:[#allocation5 + $0x38] sm:$0xff]
        %v2230 = vld [vmem:[#allocation5 + $0x40] sm:$0xff]
        %v2231 = vld [vmem:[#allocation5 + $0x48] sm:$0xff]
        %v2232 = vld [vmem:[#allocation5 + $0x50] sm:$0xff]
        %v2233 = vld [vmem:[#allocation5 + $0x58] sm:$0xff]
        %v2234 = vld [vmem:[#allocation5 + $0x60] sm:$0xff]
        %v2235 = vld [vmem:[#allocation5 + $0x68] sm:$0xff]
        %v2236 = vld [vmem:[#allocation5 + $0x70] sm:$0xff]
        %v2237 = vld [vmem:[#allocation5 + $0x78] sm:$0xff]
        %2238 = vxpose.xlu0.c.b16.start [1/8] %v1725, 128
        %2239 = vxpose.xlu0.c.b16.cont [2/8] %v1726, 128
        %2240 = vxpose.xlu0.c.b16.cont [3/8] %v1727, 128
        %2241 = vxpose.xlu0.c.b16.cont [4/8] %v1728, 128
        %2242 = vxpose.xlu0.c.b16.cont [5/8] %v1729, 128
        %2243 = vxpose.xlu0.c.b16.cont [6/8] %v1730, 128
        %2244 = vxpose.xlu0.c.b16.cont [7/8] %v1731, 128
        %2245 = vxpose.xlu0.c.b16.end [8/8] %v1732, 128
        %v2246 = vpop.trf.xlu0
        %v2247 = vpop.trf.xlu0
        %v2248 = vpop.trf.xlu0
        %v2249 = vpop.trf.xlu0
        %v2250 = vpop.trf.xlu0
        %v2251 = vpop.trf.xlu0
        %v2252 = vpop.trf.xlu0
        %v2253 = vpop.trf.xlu0
        %v2270 = vunpack.c.l.b16 %v2222
        %v2271 = vunpack.c.h.b16 %v2222
        %v2272 = vunpack.c.l.b16 %v2223
        %v2273 = vunpack.c.h.b16 %v2223
        %v2274 = vunpack.c.l.b16 %v2224
        %v2275 = vunpack.c.h.b16 %v2224
        %v2276 = vunpack.c.l.b16 %v2225
        %v2277 = vunpack.c.h.b16 %v2225
        %v2278 = vunpack.c.l.b16 %v2226
        %v2279 = vunpack.c.h.b16 %v2226
        %v2280 = vunpack.c.l.b16 %v2227
        %v2281 = vunpack.c.h.b16 %v2227
        %v2282 = vunpack.c.l.b16 %v2228
        %v2283 = vunpack.c.h.b16 %v2228
        %v2284 = vunpack.c.l.b16 %v2229
        %v2285 = vunpack.c.h.b16 %v2229
        %v2286 = vunpack.c.l.b16 %v2230
        %v2287 = vunpack.c.h.b16 %v2230
        %v2288 = vunpack.c.l.b16 %v2231
        %v2289 = vunpack.c.h.b16 %v2231
        %v2290 = vunpack.c.l.b16 %v2232
        %v2291 = vunpack.c.h.b16 %v2232
        %v2292 = vunpack.c.l.b16 %v2233
        %v2293 = vunpack.c.h.b16 %v2233
        %v2294 = vunpack.c.l.b16 %v2234
        %v2295 = vunpack.c.h.b16 %v2234
        %v2296 = vunpack.c.l.b16 %v2235
        %v2297 = vunpack.c.h.b16 %v2235
        %v2298 = vunpack.c.l.b16 %v2236
        %v2299 = vunpack.c.h.b16 %v2236
        %v2300 = vunpack.c.l.b16 %v2237
        %v2301 = vunpack.c.h.b16 %v2237
        %v2302 = vpack.c.b16 %v2272, %v2270
        %v2303 = vpack.c.b16 %v2273, %v2271
        %v2304 = vpack.c.b16 %v2276, %v2274
        %v2305 = vpack.c.b16 %v2277, %v2275
        %v2306 = vpack.c.b16 %v2280, %v2278
        %v2307 = vpack.c.b16 %v2281, %v2279
        %v2308 = vpack.c.b16 %v2284, %v2282
        %v2309 = vpack.c.b16 %v2285, %v2283
        %v2310 = vpack.c.b16 %v2288, %v2286
        %v2311 = vpack.c.b16 %v2289, %v2287
        %v2312 = vpack.c.b16 %v2292, %v2290
        %v2313 = vpack.c.b16 %v2293, %v2291
        %v2314 = vpack.c.b16 %v2296, %v2294
        %v2315 = vpack.c.b16 %v2297, %v2295
        %v2316 = vpack.c.b16 %v2300, %v2298
        %v2317 = vpack.c.b16 %v2301, %v2299
        %2334 = vmatprep.subr.bf16.mxu0 %v2317
        %2335 = vmatpush1.bf16.msra.mxu0 %v2316
        %2336 = vmatprep.subr.bf16.mxu0 %v2315
        %2337 = vmatpush1.bf16.msra.mxu0 %v2314
        %2338 = vmatprep.subr.bf16.mxu0 %v2313
        %2339 = vmatpush1.bf16.msra.mxu0 %v2312
        %2340 = vmatprep.subr.bf16.mxu0 %v2311
        %2341 = vmatpush1.bf16.msra.mxu0 %v2310
        %2342 = vmatprep.subr.bf16.mxu0 %v2309
        %2343 = vmatpush1.bf16.msra.mxu0 %v2308
        %2344 = vmatprep.subr.bf16.mxu0 %v2307
        %2345 = vmatpush1.bf16.msra.mxu0 %v2306
        %2346 = vmatprep.subr.bf16.mxu0 %v2305
        %2347 = vmatpush1.bf16.msra.mxu0 %v2304
        %2348 = vmatprep.subr.bf16.mxu0 %v2303
        %2349 = vmatpush1.bf16.msra.mxu0 %v2302
        %2350 = vmatprep.subr.bf16.mxu0 0
        %2351 = vmatpush2.bf16.msra.mxu0 0
        %2352 = vmatprep.subr.bf16.mxu0 0
        %2353 = vmatpush2.bf16.msra.mxu0 0
        %2354 = vmatprep.subr.bf16.mxu0 0
        %2355 = vmatpush2.bf16.msra.mxu0 0
        %2356 = vmatprep.subr.bf16.mxu0 0
        %2357 = vmatpush2.bf16.msra.mxu0 0
        %2358 = vmatprep.subr.bf16.mxu0 0
        %2359 = vmatpush2.bf16.msra.mxu0 0
        %2360 = vmatprep.subr.bf16.mxu0 0
        %2361 = vmatpush2.bf16.msra.mxu0 0
        %2362 = vmatprep.subr.bf16.mxu0 0
        %2363 = vmatpush2.bf16.msra.mxu0 0
        %2364 = vmatprep.subr.bf16.mxu0 0
        %2365 = vmatpush2.bf16.msra.mxu0 0
        %2366 = vmatprep.mubr.bf16.mxu0 0
        %2367 = vmatmul.mubr.bf16.gmra.mxu0 %v2246
        %v2368 = vpop.f32.mrf.mxu0
        %v2369 = vadd.f32 0.0, %v2368
        %v2370 = vpop.f32.mrf.mxu0
        %v2371 = vadd.f32 0.0, %v2370
        %v2372 = vpop.f32.mrf.mxu0
        %v2373 = vadd.f32 0.0, %v2372
        %v2374 = vpop.f32.mrf.mxu0
        %v2375 = vadd.f32 0.0, %v2374
        %2376 = vmatprep.mubr.bf16.mxu0 0
        %2377 = vmatmul.mubr.bf16.gmra.mxu0 %v2247
        %v2378 = vpop.f32.mrf.mxu0
        %v2379 = vadd.f32 0.0, %v2378
        %v2380 = vpop.f32.mrf.mxu0
        %v2381 = vadd.f32 0.0, %v2380
        %v2382 = vpop.f32.mrf.mxu0
        %v2383 = vadd.f32 0.0, %v2382
        %v2384 = vpop.f32.mrf.mxu0
        %v2385 = vadd.f32 0.0, %v2384
        %2386 = vmatprep.mubr.bf16.mxu0 0
        %2387 = vmatmul.mubr.bf16.gmra.mxu0 %v2248
        %v2388 = vpop.f32.mrf.mxu0
        %v2389 = vadd.f32 0.0, %v2388
        %v2390 = vpop.f32.mrf.mxu0
        %v2391 = vadd.f32 0.0, %v2390
        %v2392 = vpop.f32.mrf.mxu0
        %v2393 = vadd.f32 0.0, %v2392
        %v2394 = vpop.f32.mrf.mxu0
        %v2395 = vadd.f32 0.0, %v2394
        %2396 = vmatprep.mubr.bf16.mxu0 0
        %2397 = vmatmul.mubr.bf16.gmra.mxu0 %v2249
        %v2398 = vpop.f32.mrf.mxu0
        %v2399 = vadd.f32 0.0, %v2398
        %v2400 = vpop.f32.mrf.mxu0
        %v2401 = vadd.f32 0.0, %v2400
        %v2402 = vpop.f32.mrf.mxu0
        %v2403 = vadd.f32 0.0, %v2402
        %v2404 = vpop.f32.mrf.mxu0
        %v2405 = vadd.f32 0.0, %v2404
        %2406 = vmatprep.mubr.bf16.mxu0 0
        %2407 = vmatmul.mubr.bf16.gmra.mxu0 %v2250
        %v2408 = vpop.f32.mrf.mxu0
        %v2409 = vadd.f32 0.0, %v2408
        %v2410 = vpop.f32.mrf.mxu0
        %v2411 = vadd.f32 0.0, %v2410
        %v2412 = vpop.f32.mrf.mxu0
        %v2413 = vadd.f32 0.0, %v2412
        %v2414 = vpop.f32.mrf.mxu0
        %v2415 = vadd.f32 0.0, %v2414
        %2416 = vmatprep.mubr.bf16.mxu0 0
        %2417 = vmatmul.mubr.bf16.gmra.mxu0 %v2251
        %v2418 = vpop.f32.mrf.mxu0
        %v2419 = vadd.f32 0.0, %v2418
        %v2420 = vpop.f32.mrf.mxu0
        %v2421 = vadd.f32 0.0, %v2420
        %v2422 = vpop.f32.mrf.mxu0
        %v2423 = vadd.f32 0.0, %v2422
        %v2424 = vpop.f32.mrf.mxu0
        %v2425 = vadd.f32 0.0, %v2424
        %2426 = vmatprep.mubr.bf16.mxu0 0
        %2427 = vmatmul.mubr.bf16.gmra.mxu0 %v2252
        %v2428 = vpop.f32.mrf.mxu0
        %v2429 = vadd.f32 0.0, %v2428
        %v2430 = vpop.f32.mrf.mxu0
        %v2431 = vadd.f32 0.0, %v2430
        %v2432 = vpop.f32.mrf.mxu0
        %v2433 = vadd.f32 0.0, %v2432
        %v2434 = vpop.f32.mrf.mxu0
        %v2435 = vadd.f32 0.0, %v2434
        %2436 = vmatprep.mubr.bf16.mxu0 0
        %2437 = vmatmul.mubr.bf16.gmra.mxu0 %v2253
        %v2438 = vpop.f32.mrf.mxu0
        %v2439 = vadd.f32 0.0, %v2438
        %v2440 = vpop.f32.mrf.mxu0
        %v2441 = vadd.f32 0.0, %v2440
        %v2442 = vpop.f32.mrf.mxu0
        %v2443 = vadd.f32 0.0, %v2442
        %v2444 = vpop.f32.mrf.mxu0
        %v2445 = vadd.f32 0.0, %v2444
        %2446 = vdwg.mxu0
        %v2447 = vadd.f32 %v2190, %v2369
        %v2448 = vadd.f32 %v2191, %v2371
        %v2449 = vadd.f32 %v2192, %v2373
        %v2450 = vadd.f32 %v2193, %v2375
        %v2451 = vadd.f32 %v2194, %v2379
        %v2452 = vadd.f32 %v2195, %v2381
        %v2453 = vadd.f32 %v2196, %v2383
        %v2454 = vadd.f32 %v2197, %v2385
        %v2455 = vadd.f32 %v2198, %v2389
        %v2456 = vadd.f32 %v2199, %v2391
        %v2457 = vadd.f32 %v2200, %v2393
        %v2458 = vadd.f32 %v2201, %v2395
        %v2459 = vadd.f32 %v2202, %v2399
        %v2460 = vadd.f32 %v2203, %v2401
        %v2461 = vadd.f32 %v2204, %v2403
        %v2462 = vadd.f32 %v2205, %v2405
        %v2463 = vadd.f32 %v2206, %v2409
        %v2464 = vadd.f32 %v2207, %v2411
        %v2465 = vadd.f32 %v2208, %v2413
        %v2466 = vadd.f32 %v2209, %v2415
        %v2467 = vadd.f32 %v2210, %v2419
        %v2468 = vadd.f32 %v2211, %v2421
        %v2469 = vadd.f32 %v2212, %v2423
        %v2470 = vadd.f32 %v2213, %v2425
        %v2471 = vadd.f32 %v2214, %v2429
        %v2472 = vadd.f32 %v2215, %v2431
        %v2473 = vadd.f32 %v2216, %v2433
        %v2474 = vadd.f32 %v2217, %v2435
        %v2475 = vadd.f32 %v2218, %v2439
        %v2476 = vadd.f32 %v2219, %v2441
        %v2477 = vadd.f32 %v2220, %v2443
        %v2478 = vadd.f32 %v2221, %v2445
        %2479 = vst [vmem:[#allocation4] sm:$0xff] %v2447
        %2480 = vst [vmem:[#allocation4 + $0x8] sm:$0xff] %v2448
        %2481 = vst [vmem:[#allocation4 + $0x10] sm:$0xff] %v2449
        %2482 = vst [vmem:[#allocation4 + $0x18] sm:$0xff] %v2450
        %2483 = vst [vmem:[#allocation4 + $0x20] sm:$0xff] %v2451
        %2484 = vst [vmem:[#allocation4 + $0x28] sm:$0xff] %v2452
        %2485 = vst [vmem:[#allocation4 + $0x30] sm:$0xff] %v2453
        %2486 = vst [vmem:[#allocation4 + $0x38] sm:$0xff] %v2454
        %2487 = vst [vmem:[#allocation4 + $0x40] sm:$0xff] %v2455
        %2488 = vst [vmem:[#allocation4 + $0x48] sm:$0xff] %v2456
        %2489 = vst [vmem:[#allocation4 + $0x50] sm:$0xff] %v2457
        %2490 = vst [vmem:[#allocation4 + $0x58] sm:$0xff] %v2458
        %2491 = vst [vmem:[#allocation4 + $0x60] sm:$0xff] %v2459
        %2492 = vst [vmem:[#allocation4 + $0x68] sm:$0xff] %v2460
        %2493 = vst [vmem:[#allocation4 + $0x70] sm:$0xff] %v2461
        %2494 = vst [vmem:[#allocation4 + $0x78] sm:$0xff] %v2462
        %2495 = vst [vmem:[#allocation4 + $0x80] sm:$0xff] %v2463
        %2496 = vst [vmem:[#allocation4 + $0x88] sm:$0xff] %v2464
        %2497 = vst [vmem:[#allocation4 + $0x90] sm:$0xff] %v2465
        %2498 = vst [vmem:[#allocation4 + $0x98] sm:$0xff] %v2466
        %2499 = vst [vmem:[#allocation4 + $0xa0] sm:$0xff] %v2467
        %2500 = vst [vmem:[#allocation4 + $0xa8] sm:$0xff] %v2468
        %2501 = vst [vmem:[#allocation4 + $0xb0] sm:$0xff] %v2469
        %2502 = vst [vmem:[#allocation4 + $0xb8] sm:$0xff] %v2470
        %2503 = vst [vmem:[#allocation4 + $0xc0] sm:$0xff] %v2471
        %2504 = vst [vmem:[#allocation4 + $0xc8] sm:$0xff] %v2472
        %2505 = vst [vmem:[#allocation4 + $0xd0] sm:$0xff] %v2473
        %2506 = vst [vmem:[#allocation4 + $0xd8] sm:$0xff] %v2474
        %2507 = vst [vmem:[#allocation4 + $0xe0] sm:$0xff] %v2475
        %2508 = vst [vmem:[#allocation4 + $0xe8] sm:$0xff] %v2476
        %2509 = vst [vmem:[#allocation4 + $0xf0] sm:$0xff] %v2477
        %2510 = vst [vmem:[#allocation4 + $0xf8] sm:$0xff] %v2478
        %v2511 = vld [vmem:[%s413] sm:$0xff]
        %v2512 = vld [vmem:[%s413 + $0x8] sm:$0xff]
        %v2513 = vld [vmem:[%s413 + $0x10] sm:$0xff]
        %v2514 = vld [vmem:[%s413 + $0x18] sm:$0xff]
        %v2515 = vld [vmem:[%s413 + $0x20] sm:$0xff]
        %v2516 = vld [vmem:[%s413 + $0x28] sm:$0xff]
        %v2517 = vld [vmem:[%s413 + $0x30] sm:$0xff]
        %v2518 = vld [vmem:[%s413 + $0x38] sm:$0xff]
        %v2519 = vld [vmem:[%s413 + $0x40] sm:$0xff]
        %v2520 = vld [vmem:[%s413 + $0x48] sm:$0xff]
        %v2521 = vld [vmem:[%s413 + $0x50] sm:$0xff]
        %v2522 = vld [vmem:[%s413 + $0x58] sm:$0xff]
        %v2523 = vld [vmem:[%s413 + $0x60] sm:$0xff]
        %v2524 = vld [vmem:[%s413 + $0x68] sm:$0xff]
        %v2525 = vld [vmem:[%s413 + $0x70] sm:$0xff]
        %v2526 = vld [vmem:[%s413 + $0x78] sm:$0xff]
        %v2527 = vld [vmem:[%s484] sm:$0xff]
        %v2528 = vld [vmem:[%s484 + $0x8] sm:$0xff]
        %v2529 = vld [vmem:[%s484 + $0x10] sm:$0xff]
        %v2530 = vld [vmem:[%s484 + $0x18] sm:$0xff]
        %v2531 = vld [vmem:[%s484 + $0x20] sm:$0xff]
        %v2532 = vld [vmem:[%s484 + $0x28] sm:$0xff]
        %v2533 = vld [vmem:[%s484 + $0x30] sm:$0xff]
        %v2534 = vld [vmem:[%s484 + $0x38] sm:$0xff]
        %v2535 = vld [vmem:[%s484 + $0x40] sm:$0xff]
        %v2536 = vld [vmem:[%s484 + $0x48] sm:$0xff]
        %v2537 = vld [vmem:[%s484 + $0x50] sm:$0xff]
        %v2538 = vld [vmem:[%s484 + $0x58] sm:$0xff]
        %v2539 = vld [vmem:[%s484 + $0x60] sm:$0xff]
        %v2540 = vld [vmem:[%s484 + $0x68] sm:$0xff]
        %v2541 = vld [vmem:[%s484 + $0x70] sm:$0xff]
        %v2542 = vld [vmem:[%s484 + $0x78] sm:$0xff]
        %2544 = vset.pattern.permute.xlu0 0
        %2545 = vperm.xlu0 %2544, %v2527
        %v2546 = vpop.permute.xlu0 %2545
        %2549 = vset.pattern.permute.xlu0 0
        %2550 = vperm.xlu0 %2549, %v2528
        %v2551 = vpop.permute.xlu0 %2550
        %2554 = vset.pattern.permute.xlu0 0
        %2555 = vperm.xlu0 %2554, %v2529
        %v2556 = vpop.permute.xlu0 %2555
        %2559 = vset.pattern.permute.xlu0 0
        %2560 = vperm.xlu0 %2559, %v2530
        %v2561 = vpop.permute.xlu0 %2560
        %2564 = vset.pattern.permute.xlu0 0
        %2565 = vperm.xlu0 %2564, %v2531
        %v2566 = vpop.permute.xlu0 %2565
        %2569 = vset.pattern.permute.xlu0 0
        %2570 = vperm.xlu0 %2569, %v2532
        %v2571 = vpop.permute.xlu0 %2570
        %2574 = vset.pattern.permute.xlu0 0
        %2575 = vperm.xlu0 %2574, %v2533
        %v2576 = vpop.permute.xlu0 %2575
        %2579 = vset.pattern.permute.xlu0 0
        %2580 = vperm.xlu0 %2579, %v2534
        %v2581 = vpop.permute.xlu0 %2580
        %2584 = vset.pattern.permute.xlu0 0
        %2585 = vperm.xlu0 %2584, %v2535
        %v2586 = vpop.permute.xlu0 %2585
        %2589 = vset.pattern.permute.xlu0 0
        %2590 = vperm.xlu0 %2589, %v2536
        %v2591 = vpop.permute.xlu0 %2590
        %2594 = vset.pattern.permute.xlu0 0
        %2595 = vperm.xlu0 %2594, %v2537
        %v2596 = vpop.permute.xlu0 %2595
        %2599 = vset.pattern.permute.xlu0 0
        %2600 = vperm.xlu0 %2599, %v2538
        %v2601 = vpop.permute.xlu0 %2600
        %2604 = vset.pattern.permute.xlu0 0
        %2605 = vperm.xlu0 %2604, %v2539
        %v2606 = vpop.permute.xlu0 %2605
        %2609 = vset.pattern.permute.xlu0 0
        %2610 = vperm.xlu0 %2609, %v2540
        %v2611 = vpop.permute.xlu0 %2610
        %2614 = vset.pattern.permute.xlu0 0
        %2615 = vperm.xlu0 %2614, %v2541
        %v2616 = vpop.permute.xlu0 %2615
        %2619 = vset.pattern.permute.xlu0 0
        %2620 = vperm.xlu0 %2619, %v2542
        %v2621 = vpop.permute.xlu0 %2620
        %v2623 = vmul.f32 %v1902, %v2546
        %v2624 = vmul.f32 %v1903, %v2551
        %v2625 = vmul.f32 %v1904, %v2556
        %v2626 = vmul.f32 %v1905, %v2561
        %v2627 = vmul.f32 %v1906, %v2566
        %v2628 = vmul.f32 %v1907, %v2571
        %v2629 = vmul.f32 %v1908, %v2576
        %v2630 = vmul.f32 %v1909, %v2581
        %v2631 = vmul.f32 %v1910, %v2586
        %v2632 = vmul.f32 %v1911, %v2591
        %v2633 = vmul.f32 %v1912, %v2596
        %v2634 = vmul.f32 %v1913, %v2601
        %v2635 = vmul.f32 %v1914, %v2606
        %v2636 = vmul.f32 %v1915, %v2611
        %v2637 = vmul.f32 %v1916, %v2616
        %v2638 = vmul.f32 %v1917, %v2621
        %v2639 = vmax.f32 %v2623, 0.0
        %v2640 = vmax.f32 %v2624, 0.0
        %v2641 = vmax.f32 %v2625, 0.0
        %v2642 = vmax.f32 %v2626, 0.0
        %v2643 = vmax.f32 %v2627, 0.0
        %v2644 = vmax.f32 %v2628, 0.0
        %v2645 = vmax.f32 %v2629, 0.0
        %v2646 = vmax.f32 %v2630, 0.0
        %v2647 = vmax.f32 %v2631, 0.0
        %v2648 = vmax.f32 %v2632, 0.0
        %v2649 = vmax.f32 %v2633, 0.0
        %v2650 = vmax.f32 %v2634, 0.0
        %v2651 = vmax.f32 %v2635, 0.0
        %v2652 = vmax.f32 %v2636, 0.0
        %v2653 = vmax.f32 %v2637, 0.0
        %v2654 = vmax.f32 %v2638, 0.0
        %v2655 = vadd.f32 %v2511, %v2639
        %v2656 = vadd.f32 %v2512, %v2640
        %v2657 = vadd.f32 %v2513, %v2641
        %v2658 = vadd.f32 %v2514, %v2642
        %v2659 = vadd.f32 %v2515, %v2643
        %v2660 = vadd.f32 %v2516, %v2644
        %v2661 = vadd.f32 %v2517, %v2645
        %v2662 = vadd.f32 %v2518, %v2646
        %v2663 = vadd.f32 %v2519, %v2647
        %v2664 = vadd.f32 %v2520, %v2648
        %v2665 = vadd.f32 %v2521, %v2649
        %v2666 = vadd.f32 %v2522, %v2650
        %v2667 = vadd.f32 %v2523, %v2651
        %v2668 = vadd.f32 %v2524, %v2652
        %v2669 = vadd.f32 %v2525, %v2653
        %v2670 = vadd.f32 %v2526, %v2654
        %2671 = vst [vmem:[%s466] sm:$0xff] %v2655
        %2672 = vst [vmem:[%s466 + $0x8] sm:$0xff] %v2656
        %2673 = vst [vmem:[%s466 + $0x10] sm:$0xff] %v2657
        %2674 = vst [vmem:[%s466 + $0x18] sm:$0xff] %v2658
        %2675 = vst [vmem:[%s466 + $0x20] sm:$0xff] %v2659
        %2676 = vst [vmem:[%s466 + $0x28] sm:$0xff] %v2660
        %2677 = vst [vmem:[%s466 + $0x30] sm:$0xff] %v2661
        %2678 = vst [vmem:[%s466 + $0x38] sm:$0xff] %v2662
        %2679 = vst [vmem:[%s466 + $0x40] sm:$0xff] %v2663
        %2680 = vst [vmem:[%s466 + $0x48] sm:$0xff] %v2664
        %2681 = vst [vmem:[%s466 + $0x50] sm:$0xff] %v2665
        %2682 = vst [vmem:[%s466 + $0x58] sm:$0xff] %v2666
        %2683 = vst [vmem:[%s466 + $0x60] sm:$0xff] %v2667
        %2684 = vst [vmem:[%s466 + $0x68] sm:$0xff] %v2668
        %2685 = vst [vmem:[%s466 + $0x70] sm:$0xff] %v2669
        %2686 = vst [vmem:[%s466 + $0x78] sm:$0xff] %v2670
        %p2687 = scmp.eq.s32.totalorder %s31, 3
        // Predicated region
        $region73: #{gated_gcn_layer.1} parent=59 // pred_check
          %p2688 = pneg %p2687
        $region74: #{gated_gcn_layer.1} parent=59 // pred_check_branch
          %2690 = sbr.rel (%p2688) target = $region76
        $region75: #{gated_gcn_layer.1} parent=59 // pred_region
          %v2691 = vld [vmem:[#allocation4] sm:$0xff]
          %v2692 = vld [vmem:[#allocation4 + $0x10] sm:$0xff]
          %v2693 = vld [vmem:[#allocation4 + $0x20] sm:$0xff]
          %v2694 = vld [vmem:[#allocation4 + $0x30] sm:$0xff]
          %v2695 = vld [vmem:[#allocation4 + $0x40] sm:$0xff]
          %v2696 = vld [vmem:[#allocation4 + $0x50] sm:$0xff]
          %v2697 = vld [vmem:[#allocation4 + $0x60] sm:$0xff]
          %v2698 = vld [vmem:[#allocation4 + $0x70] sm:$0xff]
          %v2699 = vld [vmem:[#allocation4 + $0x80] sm:$0xff]
          %v2700 = vld [vmem:[#allocation4 + $0x90] sm:$0xff]
          %v2701 = vld [vmem:[#allocation4 + $0xa0] sm:$0xff]
          %v2702 = vld [vmem:[#allocation4 + $0xb0] sm:$0xff]
          %v2703 = vld [vmem:[#allocation4 + $0xc0] sm:$0xff]
          %v2704 = vld [vmem:[#allocation4 + $0xd0] sm:$0xff]
          %v2705 = vld [vmem:[#allocation4 + $0xe0] sm:$0xff]
          %v2706 = vld [vmem:[#allocation4 + $0xf0] sm:$0xff]
          %v2707 = vld [vmem:[#allocation4 + $0x8] sm:$0xff]
          %v2708 = vld [vmem:[#allocation4 + $0x18] sm:$0xff]
          %v2709 = vld [vmem:[#allocation4 + $0x28] sm:$0xff]
          %v2710 = vld [vmem:[#allocation4 + $0x38] sm:$0xff]
          %v2711 = vld [vmem:[#allocation4 + $0x48] sm:$0xff]
          %v2712 = vld [vmem:[#allocation4 + $0x58] sm:$0xff]
          %v2713 = vld [vmem:[#allocation4 + $0x68] sm:$0xff]
          %v2714 = vld [vmem:[#allocation4 + $0x78] sm:$0xff]
          %v2715 = vld [vmem:[#allocation4 + $0x88] sm:$0xff]
          %v2716 = vld [vmem:[#allocation4 + $0x98] sm:$0xff]
          %v2717 = vld [vmem:[#allocation4 + $0xa8] sm:$0xff]
          %v2718 = vld [vmem:[#allocation4 + $0xb8] sm:$0xff]
          %v2719 = vld [vmem:[#allocation4 + $0xc8] sm:$0xff]
          %v2720 = vld [vmem:[#allocation4 + $0xd8] sm:$0xff]
          %v2721 = vld [vmem:[#allocation4 + $0xe8] sm:$0xff]
          %v2722 = vld [vmem:[#allocation4 + $0xf8] sm:$0xff]
          %v2723 = vld [vmem:[#allocation2] sm:$0xff]
          %v2724 = vld [vmem:[#allocation2 + $0x8] sm:$0xff]
          %v2725 = vld [vmem:[#allocation2 + $0x10] sm:$0xff]
          %v2726 = vld [vmem:[#allocation2 + $0x18] sm:$0xff]
          %v2727 = vld [vmem:[#allocation2 + $0x20] sm:$0xff]
          %v2728 = vld [vmem:[#allocation2 + $0x28] sm:$0xff]
          %v2729 = vld [vmem:[#allocation2 + $0x30] sm:$0xff]
          %v2730 = vld [vmem:[#allocation2 + $0x38] sm:$0xff]
          %v2731 = vld [vmem:[#allocation2 + $0x40] sm:$0xff]
          %v2732 = vld [vmem:[#allocation2 + $0x48] sm:$0xff]
          %v2733 = vld [vmem:[#allocation2 + $0x50] sm:$0xff]
          %v2734 = vld [vmem:[#allocation2 + $0x58] sm:$0xff]
          %v2735 = vld [vmem:[#allocation2 + $0x60] sm:$0xff]
          %v2736 = vld [vmem:[#allocation2 + $0x68] sm:$0xff]
          %v2737 = vld [vmem:[#allocation2 + $0x70] sm:$0xff]
          %v2738 = vld [vmem:[#allocation2 + $0x78] sm:$0xff]
          %v2739 = vadd.f32 %v2707, 1e-06
          %v2740 = vadd.f32 %v2708, 1e-06
          %v2741 = vadd.f32 %v2709, 1e-06
          %v2742 = vadd.f32 %v2710, 1e-06
          %v2743 = vadd.f32 %v2711, 1e-06
          %v2744 = vadd.f32 %v2712, 1e-06
          %v2745 = vadd.f32 %v2713, 1e-06
          %v2746 = vadd.f32 %v2714, 1e-06
          %v2747 = vadd.f32 %v2715, 1e-06
          %v2748 = vadd.f32 %v2716, 1e-06
          %v2749 = vadd.f32 %v2717, 1e-06
          %v2750 = vadd.f32 %v2718, 1e-06
          %v2751 = vadd.f32 %v2719, 1e-06
          %v2752 = vadd.f32 %v2720, 1e-06
          %v2753 = vadd.f32 %v2721, 1e-06
          %v2754 = vadd.f32 %v2722, 1e-06
          %v2755 = vrcp.pop %v2739
          %v2756 = vrcp.pop %v2740
          %v2757 = vrcp.pop %v2741
          %v2758 = vrcp.pop %v2742
          %v2759 = vrcp.pop %v2743
          %v2760 = vrcp.pop %v2744
          %v2761 = vrcp.pop %v2745
          %v2762 = vrcp.pop %v2746
          %v2763 = vrcp.pop %v2747
          %v2764 = vrcp.pop %v2748
          %v2765 = vrcp.pop %v2749
          %v2766 = vrcp.pop %v2750
          %v2767 = vrcp.pop %v2751
          %v2768 = vrcp.pop %v2752
          %v2769 = vrcp.pop %v2753
          %v2770 = vrcp.pop %v2754
          %v2771 = vmul.f32 %v2691, %v2755
          %v2772 = vmul.f32 %v2692, %v2756
          %v2773 = vmul.f32 %v2693, %v2757
          %v2774 = vmul.f32 %v2694, %v2758
          %v2775 = vmul.f32 %v2695, %v2759
          %v2776 = vmul.f32 %v2696, %v2760
          %v2777 = vmul.f32 %v2697, %v2761
          %v2778 = vmul.f32 %v2698, %v2762
          %v2779 = vmul.f32 %v2699, %v2763
          %v2780 = vmul.f32 %v2700, %v2764
          %v2781 = vmul.f32 %v2701, %v2765
          %v2782 = vmul.f32 %v2702, %v2766
          %v2783 = vmul.f32 %v2703, %v2767
          %v2784 = vmul.f32 %v2704, %v2768
          %v2785 = vmul.f32 %v2705, %v2769
          %v2786 = vmul.f32 %v2706, %v2770
          %v2787 = vadd.f32 %v2723, %v2771
          %v2788 = vadd.f32 %v2724, %v2772
          %v2789 = vadd.f32 %v2725, %v2773
          %v2790 = vadd.f32 %v2726, %v2774
          %v2791 = vadd.f32 %v2727, %v2775
          %v2792 = vadd.f32 %v2728, %v2776
          %v2793 = vadd.f32 %v2729, %v2777
          %v2794 = vadd.f32 %v2730, %v2778
          %v2795 = vadd.f32 %v2731, %v2779
          %v2796 = vadd.f32 %v2732, %v2780
          %v2797 = vadd.f32 %v2733, %v2781
          %v2798 = vadd.f32 %v2734, %v2782
          %v2799 = vadd.f32 %v2735, %v2783
          %v2800 = vadd.f32 %v2736, %v2784
          %v2801 = vadd.f32 %v2737, %v2785
          %v2802 = vadd.f32 %v2738, %v2786
          %v2803 = vld [vmem:[%s8] sm:$0xff]
          %v2804 = vld [vmem:[%s8 + $0x8] sm:$0xff]
          %v2805 = vld [vmem:[%s8 + $0x10] sm:$0xff]
          %v2806 = vld [vmem:[%s8 + $0x18] sm:$0xff]
          %v2807 = vld [vmem:[%s8 + $0x20] sm:$0xff]
          %v2808 = vld [vmem:[%s8 + $0x28] sm:$0xff]
          %v2809 = vld [vmem:[%s8 + $0x30] sm:$0xff]
          %v2810 = vld [vmem:[%s8 + $0x38] sm:$0xff]
          %v2811 = vld [vmem:[%s8 + $0x40] sm:$0xff]
          %v2812 = vld [vmem:[%s8 + $0x48] sm:$0xff]
          %v2813 = vld [vmem:[%s8 + $0x50] sm:$0xff]
          %v2814 = vld [vmem:[%s8 + $0x58] sm:$0xff]
          %v2815 = vld [vmem:[%s8 + $0x60] sm:$0xff]
          %v2816 = vld [vmem:[%s8 + $0x68] sm:$0xff]
          %v2817 = vld [vmem:[%s8 + $0x70] sm:$0xff]
          %v2818 = vld [vmem:[%s8 + $0x78] sm:$0xff]
          %2820 = vset.pattern.permute.xlu0 0
          %2821 = vperm.xlu0 %2820, %v2803
          %v2822 = vpop.permute.xlu0 %2821
          %2825 = vset.pattern.permute.xlu0 0
          %2826 = vperm.xlu0 %2825, %v2804
          %v2827 = vpop.permute.xlu0 %2826
          %2830 = vset.pattern.permute.xlu0 0
          %2831 = vperm.xlu0 %2830, %v2805
          %v2832 = vpop.permute.xlu0 %2831
          %2835 = vset.pattern.permute.xlu0 0
          %2836 = vperm.xlu0 %2835, %v2806
          %v2837 = vpop.permute.xlu0 %2836
          %2840 = vset.pattern.permute.xlu0 0
          %2841 = vperm.xlu0 %2840, %v2807
          %v2842 = vpop.permute.xlu0 %2841
          %2845 = vset.pattern.permute.xlu0 0
          %2846 = vperm.xlu0 %2845, %v2808
          %v2847 = vpop.permute.xlu0 %2846
          %2850 = vset.pattern.permute.xlu0 0
          %2851 = vperm.xlu0 %2850, %v2809
          %v2852 = vpop.permute.xlu0 %2851
          %2855 = vset.pattern.permute.xlu0 0
          %2856 = vperm.xlu0 %2855, %v2810
          %v2857 = vpop.permute.xlu0 %2856
          %2860 = vset.pattern.permute.xlu0 0
          %2861 = vperm.xlu0 %2860, %v2811
          %v2862 = vpop.permute.xlu0 %2861
          %2865 = vset.pattern.permute.xlu0 0
          %2866 = vperm.xlu0 %2865, %v2812
          %v2867 = vpop.permute.xlu0 %2866
          %2870 = vset.pattern.permute.xlu0 0
          %2871 = vperm.xlu0 %2870, %v2813
          %v2872 = vpop.permute.xlu0 %2871
          %2875 = vset.pattern.permute.xlu0 0
          %2876 = vperm.xlu0 %2875, %v2814
          %v2877 = vpop.permute.xlu0 %2876
          %2880 = vset.pattern.permute.xlu0 0
          %2881 = vperm.xlu0 %2880, %v2815
          %v2882 = vpop.permute.xlu0 %2881
          %2885 = vset.pattern.permute.xlu0 0
          %2886 = vperm.xlu0 %2885, %v2816
          %v2887 = vpop.permute.xlu0 %2886
          %2890 = vset.pattern.permute.xlu0 0
          %2891 = vperm.xlu0 %2890, %v2817
          %v2892 = vpop.permute.xlu0 %2891
          %2895 = vset.pattern.permute.xlu0 0
          %2896 = vperm.xlu0 %2895, %v2818
          %v2897 = vpop.permute.xlu0 %2896
          %v2899 = vmul.f32 %v2787, %v2822
          %v2900 = vmul.f32 %v2788, %v2827
          %v2901 = vmul.f32 %v2789, %v2832
          %v2902 = vmul.f32 %v2790, %v2837
          %v2903 = vmul.f32 %v2791, %v2842
          %v2904 = vmul.f32 %v2792, %v2847
          %v2905 = vmul.f32 %v2793, %v2852
          %v2906 = vmul.f32 %v2794, %v2857
          %v2907 = vmul.f32 %v2795, %v2862
          %v2908 = vmul.f32 %v2796, %v2867
          %v2909 = vmul.f32 %v2797, %v2872
          %v2910 = vmul.f32 %v2798, %v2877
          %v2911 = vmul.f32 %v2799, %v2882
          %v2912 = vmul.f32 %v2800, %v2887
          %v2913 = vmul.f32 %v2801, %v2892
          %v2914 = vmul.f32 %v2802, %v2897
          %v2915 = vmax.f32 %v2899, 0.0
          %v2916 = vmax.f32 %v2900, 0.0
          %v2917 = vmax.f32 %v2901, 0.0
          %v2918 = vmax.f32 %v2902, 0.0
          %v2919 = vmax.f32 %v2903, 0.0
          %v2920 = vmax.f32 %v2904, 0.0
          %v2921 = vmax.f32 %v2905, 0.0
          %v2922 = vmax.f32 %v2906, 0.0
          %v2923 = vmax.f32 %v2907, 0.0
          %v2924 = vmax.f32 %v2908, 0.0
          %v2925 = vmax.f32 %v2909, 0.0
          %v2926 = vmax.f32 %v2910, 0.0
          %v2927 = vmax.f32 %v2911, 0.0
          %v2928 = vmax.f32 %v2912, 0.0
          %v2929 = vmax.f32 %v2913, 0.0
          %v2930 = vmax.f32 %v2914, 0.0
          %v2931 = vld [vmem:[#allocation6] sm:$0xff]
          %v2932 = vld [vmem:[#allocation6 + $0x8] sm:$0xff]
          %v2933 = vld [vmem:[#allocation6 + $0x10] sm:$0xff]
          %v2934 = vld [vmem:[#allocation6 + $0x18] sm:$0xff]
          %v2935 = vld [vmem:[#allocation6 + $0x20] sm:$0xff]
          %v2936 = vld [vmem:[#allocation6 + $0x28] sm:$0xff]
          %v2937 = vld [vmem:[#allocation6 + $0x30] sm:$0xff]
          %v2938 = vld [vmem:[#allocation6 + $0x38] sm:$0xff]
          %v2939 = vld [vmem:[#allocation6 + $0x40] sm:$0xff]
          %v2940 = vld [vmem:[#allocation6 + $0x48] sm:$0xff]
          %v2941 = vld [vmem:[#allocation6 + $0x50] sm:$0xff]
          %v2942 = vld [vmem:[#allocation6 + $0x58] sm:$0xff]
          %v2943 = vld [vmem:[#allocation6 + $0x60] sm:$0xff]
          %v2944 = vld [vmem:[#allocation6 + $0x68] sm:$0xff]
          %v2945 = vld [vmem:[#allocation6 + $0x70] sm:$0xff]
          %v2946 = vld [vmem:[#allocation6 + $0x78] sm:$0xff]
          %v2947 = vadd.f32 %v2931, %v2915
          %v2948 = vadd.f32 %v2932, %v2916
          %v2949 = vadd.f32 %v2933, %v2917
          %v2950 = vadd.f32 %v2934, %v2918
          %v2951 = vadd.f32 %v2935, %v2919
          %v2952 = vadd.f32 %v2936, %v2920
          %v2953 = vadd.f32 %v2937, %v2921
          %v2954 = vadd.f32 %v2938, %v2922
          %v2955 = vadd.f32 %v2939, %v2923
          %v2956 = vadd.f32 %v2940, %v2924
          %v2957 = vadd.f32 %v2941, %v2925
          %v2958 = vadd.f32 %v2942, %v2926
          %v2959 = vadd.f32 %v2943, %v2927
          %v2960 = vadd.f32 %v2944, %v2928
          %v2961 = vadd.f32 %v2945, %v2929
          %v2962 = vadd.f32 %v2946, %v2930
          %2963 = vst [vmem:[#allocation11] sm:$0xff] %v2947
          %2964 = vst [vmem:[#allocation11 + $0x8] sm:$0xff] %v2948
          %2965 = vst [vmem:[#allocation11 + $0x10] sm:$0xff] %v2949
          %2966 = vst [vmem:[#allocation11 + $0x18] sm:$0xff] %v2950
          %2967 = vst [vmem:[#allocation11 + $0x20] sm:$0xff] %v2951
          %2968 = vst [vmem:[#allocation11 + $0x28] sm:$0xff] %v2952
          %2969 = vst [vmem:[#allocation11 + $0x30] sm:$0xff] %v2953
          %2970 = vst [vmem:[#allocation11 + $0x38] sm:$0xff] %v2954
          %2971 = vst [vmem:[#allocation11 + $0x40] sm:$0xff] %v2955
          %2972 = vst [vmem:[#allocation11 + $0x48] sm:$0xff] %v2956
          %2973 = vst [vmem:[#allocation11 + $0x50] sm:$0xff] %v2957
          %2974 = vst [vmem:[#allocation11 + $0x58] sm:$0xff] %v2958
          %2975 = vst [vmem:[#allocation11 + $0x60] sm:$0xff] %v2959
          %2976 = vst [vmem:[#allocation11 + $0x68] sm:$0xff] %v2960
          %2977 = vst [vmem:[#allocation11 + $0x70] sm:$0xff] %v2961
          %2978 = vst [vmem:[#allocation11 + $0x78] sm:$0xff] %v2962
        $region76: #{gated_gcn_layer.1} parent=59 // pred_fallthru
          _
        %s2979 = sand.u32 %s290, 1
        %s2980 = scalar_lea.sflag [#allocation13], %s2979
        %s2981 = sand.u32 %s290, 1
        %s2982 = smul.addr %s2981, 128
        %s2983 = scalar_lea.vmem [#allocation12], %s2982
        // Predicated region
        $region77: #{gated_gcn_layer.1} parent=59 // pred_check
          %p2984 = pneg %p274
        $region78: #{gated_gcn_layer.1} parent=59 // pred_check_branch
          %2986 = sbr.rel (%p2984) target = $region80
        $region79: #{gated_gcn_layer.1} parent=59 // pred_region
          %s2988 = ssub.s32 2048, 2048
          %2989 = vsyncadd [#allocation8], %s2988
          %s2990 = sshll.u32 [#allocation11], 4
          %s2991 = int_to_ptr.vmem [resolvable:$true] %s2990
          %2996 = dma.vmem_to_hbm [thread:$0]  %s2991, 2048, %s10, [#allocation8], 128, 128, 8
        $region80: #{gated_gcn_layer.1} parent=59 // pred_fallthru
          _
        // Predicated region
        $region81: #{gated_gcn_layer.1} parent=59 // pred_check
          %p2997 = pneg %p300
        $region82: #{gated_gcn_layer.1} parent=59 // pred_check_branch
          %2999 = sbr.rel (%p2997) target = $region84
        $region83: #{gated_gcn_layer.1} parent=59 // pred_region
          %s3000 = smul.u32 16, %s31
          %s3002 = ssub.s32 2048, 2048
          %3003 = vsyncadd %s2980, %s3002
          %s3004 = smul.addr %s3000, 128
          %s3005 = scalar_lea.hbm %s11, %s3004
          %s3006 = sshll.u32 %s2983, 4
          %s3007 = int_to_ptr.vmem [resolvable:$true] %s3006
          %3012 = dma.vmem_to_hbm [thread:$0]  %s3007, 2048, %s3005, %s2980, 128, 128, 8
        $region84: #{gated_gcn_layer.1} parent=59 // pred_fallthru
          _
        // Predicated region
        $region85: #{gated_gcn_layer.1} parent=59 // pred_check
          %p3013 = pneg %p274
        $region86: #{gated_gcn_layer.1} parent=59 // pred_check_branch
          %3015 = sbr.rel (%p3013) target = $region88
        $region87: #{gated_gcn_layer.1} parent=59 // pred_region
          %3016 = dma.done [#allocation8], 2048
        $region88: #{gated_gcn_layer.1} parent=59 // pred_fallthru
          _
      $region60: #{gated_gcn_layer.1} parent=5 // pred_fallthru
        _
      %p3017 = scmp.le.s32.totalorder 2, %s26
      // Predicated region
      $region89: #{gated_gcn_layer.1} parent=5 // pred_check
        %p3018 = pneg %p3017
      $region90: #{gated_gcn_layer.1} parent=5 // pred_check_branch
        %3020 = sbr.rel (%p3018) target = $region92
      $region91: #{gated_gcn_layer.1} parent=5 // pred_region
        %s3021 = ssub.s32 %s26, 2
        // Predicated region
        $region93: #{gated_gcn_layer.1} parent=91 // pred_check
          %p3022 = pneg %p306
        $region94: #{gated_gcn_layer.1} parent=91 // pred_check_branch
          %3024 = sbr.rel (%p3022) target = $region96
        $region95: #{gated_gcn_layer.1} parent=91 // pred_region
          %s3025 = sand.u32 %s291, 1
          %s3026 = scalar_lea.sflag [#allocation13], %s3025
          %s3027 = sand.u32 %s291, 1
          %s3028 = smul.addr %s3027, 128
          %s3029 = scalar_lea.vmem [#allocation12], %s3028
          %3030 = dma.done %s3026, 2048
        $region96: #{gated_gcn_layer.1} parent=91 // pred_fallthru
          _
      $region92: #{gated_gcn_layer.1} parent=5 // pred_fallthru
        _
    $region6: #{gated_gcn_layer.1} parent=1 // loop_footer
      %s30 = sadd.s32 1, %s26
    $region7: #{gated_gcn_layer.1} parent=1 // loop_footer_branch
      %25 = sbr.rel target = $region3
    $region8: #{gated_gcn_layer.1} parent=1 // loop_exit
      _
    %3031 = vsyncpa [#allocation7], 1
    %s3032 = scalar_lea.sflag [#allocation7], 1
    %3033 = vsyncpa %s3032, 1
    %3034 = vsyncpa [#allocation10], 1
    %s3035 = scalar_lea.sflag [#allocation10], 1
    %3036 = vsyncpa %s3035, 1
    %3037 = vsyncpa [#allocation8], 1
    %s3038 = scalar_lea.sflag [#allocation8], 1
    %3039 = vsyncpa %s3038, 1
    %3040 = vsyncpa [#allocation13], 1
    %s3041 = scalar_lea.sflag [#allocation13], 1
    %3042 = vsyncpa %s3041, 1

</llo_original>
